<compile_context>
chip_gen: v7x
topology: tpu7x:2x2x1
jax: 0.10.0
libtpu: 0.0.40
codegen_flags: <defaults>
</compile_context>

<pallas_src>
import functools
import math

import jax
import jax.numpy as jnp
from jax.experimental import pallas as pl
from jax.experimental.pallas import tpu as pltpu

# ---------------- small synthetic GPT-2 config ----------------
VOCAB = 256          # vocab_size
N_CTX = 16           # n_ctx / max_position_embeddings
EMBED = 128          # n_embd
HEADS = 4            # num_attention_heads
HEAD_DIM = EMBED // HEADS
INNER = 4 * EMBED    # n_inner (default 4 * n_embd)
LAYERS = 2           # num_hidden_layers
EPS = 1e-5           # layer_norm_epsilon


# ---------------- in-kernel helpers ----------------
def _layernorm(x, w, b, eps):
    # PyTorch nn.LayerNorm: biased variance, eps inside the sqrt. f32 math.
    mu = jnp.mean(x, axis=-1, keepdims=True)
    xc = x - mu
    var = jnp.mean(xc * xc, axis=-1, keepdims=True)
    return xc * jax.lax.rsqrt(var + eps) * w + b


def _gelu_exact(x):
    # torch.nn.functional.gelu default: 0.5 * x * (1 + erf(x / sqrt(2)))
    return 0.5 * x * (1.0 + jax.lax.erf(x * 0.7071067811865476))


# ---------------- fused all-layers transformer kernel ----------------
def stack_kernel(x0_ref,
                 ln1w_ref, ln1b_ref,
                 cattn_w_ref, cattn_b_ref,
                 cproj_w_ref, cproj_b_ref,
                 ln2w_ref, ln2b_ref,
                 fc_w_ref, fc_b_ref,
                 mproj_w_ref, mproj_b_ref,
                 out_ref, key_ref, val_ref,
                 x_scratch,
                 *, batch, seq, num_heads, head_dim, eps):
    layer = pl.program_id(0)
    E = num_heads * head_dim

    # Layer 0: load the embedded input into the persistent activation carry.
    @pl.when(layer == 0)
    def _():
        x_scratch[...] = x0_ref[...]

    x = x_scratch[...]                                   # (B*S, E) f32

    # ---- ln_1 + fused QKV matmul over the flattened (B*S, E) slab ----
    h = _layernorm(x, ln1w_ref[...], ln1b_ref[...], eps)
    qkv = jnp.dot(h.astype(jnp.bfloat16), cattn_w_ref[...],
                  preferred_element_type=jnp.float32) + cattn_b_ref[...]  # (B*S, 3E)
    k_full = qkv[:, E:2 * E]
    v_full = qkv[:, 2 * E:3 * E]
    key_ref[...] = k_full                                # per-layer kv-cache (f32)
    val_ref[...] = v_full

    scale = 1.0 / math.sqrt(head_dim)
    row = jax.lax.broadcasted_iota(jnp.int32, (seq, seq), 0)
    col = jax.lax.broadcasted_iota(jnp.int32, (seq, seq), 1)
    causal = col <= row
    # NOTE: GPT-2's attn.bias (tril ones) added to unmasked logits is a uniform
    # per-row shift and cancels under softmax -> intentionally omitted.

    cproj_w = cproj_w_ref[...]                           # (E, E) bf16

    attn_rows = []
    for b in range(batch):                               # static unroll, B small
        r0 = b * seq
        ctx_proj = jnp.zeros((seq, E), jnp.float32)      # lane-dense accumulator
        for hd in range(num_heads):                      # static unroll over heads
            c0 = hd * head_dim
            qh = qkv[r0:r0 + seq, c0:c0 + head_dim].astype(jnp.bfloat16)
            kh = k_full[r0:r0 + seq, c0:c0 + head_dim].astype(jnp.bfloat16)
            vh = v_full[r0:r0 + seq, c0:c0 + head_dim].astype(jnp.bfloat16)
            s = jax.lax.dot_general(
                qh, kh, (((1,), (1,)), ((), ())),
                preferred_element_type=jnp.float32) * scale          # (S, S) f32
            s = jnp.where(causal, s, -1e9)                           # masked_fill
            s = s - jnp.max(s, axis=-1, keepdims=True)
            e = jnp.exp(s)
            p = e * pl.reciprocal(jnp.sum(e, axis=-1, keepdims=True), approx=True)
            ctx_h = jnp.dot(p.astype(jnp.bfloat16), vh,
                            preferred_element_type=jnp.float32)      # (S, Dh)
            # Fold this head's slice of c_proj in here: sum over heads of
            # ctx_h @ W_cproj[h*Dh:(h+1)*Dh, :] == full c_proj of the concat.
            ctx_proj = ctx_proj + jnp.dot(
                ctx_h.astype(jnp.bfloat16), cproj_w[c0:c0 + head_dim, :],
                preferred_element_type=jnp.float32)                  # (S, E)
        attn_rows.append(ctx_proj)
    attn_out = jnp.concatenate(attn_rows, axis=0) + cproj_b_ref[...]  # (B*S, E)
    # resid_dropout is identity in inference.
    x2 = x + attn_out                                                 # residual 1

    # ---- ln_2 + MLP over the flattened slab ----
    h2 = _layernorm(x2, ln2w_ref[...], ln2b_ref[...], eps)
    fc = jnp.dot(h2.astype(jnp.bfloat16), fc_w_ref[...],
                 preferred_element_type=jnp.float32) + fc_b_ref[...]
    g = _gelu_exact(fc)                                               # f32 exact erf
    mlp_out = jnp.dot(g.astype(jnp.bfloat16), mproj_w_ref[...],
                      preferred_element_type=jnp.float32) + mproj_b_ref[...]
    # mlp dropout is identity in inference.
    x_new = x2 + mlp_out                                              # residual 2

    x_scratch[...] = x_new          # carry to next layer (persistent scratch)
    out_ref[...] = x_new            # resident output block; final value wins


def run_blocks(x0, st, *, batch, seq):
    M, E = x0.shape
    L = st['c_attn_w'].shape[0]

    def wspec(*tail):
        nd = len(tail)
        return pl.BlockSpec((None,) + tail, lambda l, _n=nd: (l,) + (0,) * _n)

    kernel = functools.partial(stack_kernel, batch=batch, seq=seq,
                               num_heads=HEADS, head_dim=HEAD_DIM, eps=EPS)
    out, k_all, v_all = pl.pallas_call(
        kernel,
        grid=(L,),
        out_shape=(jax.ShapeDtypeStruct((M, E), jnp.float32),
                   jax.ShapeDtypeStruct((L, M, E), jnp.float32),
                   jax.ShapeDtypeStruct((L, M, E), jnp.float32)),
        in_specs=[
            pl.BlockSpec((M, E), lambda l: (0, 0)),        # embedded input
            wspec(1, E), wspec(1, E),                      # ln_1 w, b
            wspec(E, 3 * E), wspec(1, 3 * E),              # c_attn (bf16 w)
            wspec(E, E), wspec(1, E),                      # attn c_proj
            wspec(1, E), wspec(1, E),                      # ln_2 w, b
            wspec(E, INNER), wspec(1, INNER),              # mlp c_fc
            wspec(INNER, E), wspec(1, E),                  # mlp c_proj
        ],
        out_specs=(pl.BlockSpec((M, E), lambda l: (0, 0)),
                   pl.BlockSpec((None, M, E), lambda l: (l, 0, 0)),
                   pl.BlockSpec((None, M, E), lambda l: (l, 0, 0))),
        scratch_shapes=[pltpu.VMEM((M, E), jnp.float32)],  # activation carry
        compiler_params=pltpu.CompilerParams(
            # Layer axis carries state -> must be sequential ("arbitrary").
            dimension_semantics=("arbitrary",),
            vmem_limit_bytes=32 * 1024 * 1024),
    )(x0,
      st['ln1_w'], st['ln1_b'],
      st['c_attn_w'], st['c_attn_b'],
      st['c_proj_w'], st['c_proj_b'],
      st['ln2_w'], st['ln2_b'],
      st['fc_w'], st['fc_b'],
      st['mproj_w'], st['mproj_b'])
    return out, k_all, v_all


# ---------------- final ln_f + tied lm_head + argmax kernel ----------------
def head_kernel(x_ref, lnw_ref, lnb_ref, wte_t_ref, idx_ref, *, eps):
    h = _layernorm(x_ref[...], lnw_ref[...], lnb_ref[...], eps)       # (B, E) f32
    # tied lm_head against pre-transposed (E, V) wte -> lane-dense RHS.
    logits = jnp.dot(h.astype(jnp.bfloat16), wte_t_ref[...],
                     preferred_element_type=jnp.float32)              # (B, V)
    # softmax skipped: argmax(logits) == argmax(softmax(logits)).
    vocab = logits.shape[1]
    m = jnp.max(logits, axis=-1, keepdims=True)
    col = jax.lax.broadcasted_iota(jnp.int32, logits.shape, 1).astype(jnp.float32)
    idx = jnp.min(jnp.where(logits >= m, col, float(vocab)),
                  axis=-1, keepdims=True)                             # first max
    idx_ref[...] = idx.astype(jnp.int32)


def run_head(last_hidden, ln_f_w, ln_f_b, wte_t):
    B, E = last_hidden.shape
    V = wte_t.shape[1]
    kernel = functools.partial(head_kernel, eps=EPS)
    idx = pl.pallas_call(
        kernel,
        grid=(1,),
        out_shape=jax.ShapeDtypeStruct((B, 1), jnp.int32),
        in_specs=[pl.BlockSpec((B, E), lambda i: (0, 0)),
                  pl.BlockSpec((1, E), lambda i: (0, 0)),
                  pl.BlockSpec((1, E), lambda i: (0, 0)),
                  pl.BlockSpec((E, V), lambda i: (0, 0))],
        out_specs=pl.BlockSpec((B, 1), lambda i: (0, 0)),
    )(last_hidden, ln_f_w, ln_f_b, wte_t)
    return idx[:, 0]


# ---------------- plain-JAX glue ----------------
def last_position(attention_mask):
    rev = jnp.flip(attention_mask, axis=1)
    pos = jnp.argmax(rev, axis=1)
    S = attention_mask.shape[1]
    return S - pos - 1


def prefill_forward(params, input_ids, attention_mask):
    B, S = input_ids.shape
    pos_ids = jnp.arange(S)
    states = (jnp.take(params['wte'], input_ids, axis=0) +
              jnp.take(params['wpe'], pos_ids, axis=0)[None, :, :])   # (B, S, E)
    x0 = states.reshape(B * S, EMBED)

    out, k_all, v_all = run_blocks(x0, params['stacked'], batch=B, seq=S)
    states_out = out.reshape(B, S, EMBED)

    last_pos = last_position(attention_mask)
    # PyTorch computes ln_f + lm_head on every position and then selects the
    # last token; selecting the hidden state first is numerically identical.
    last_hidden = states_out[jnp.arange(B), last_pos]                 # (B, E)
    # TODO(synk): `Sampler(0.1, 0.2, 30).topK` is an external/undefined class;
    # use the deterministic argmax of the last-token distribution instead
    # (computed in-kernel on the logits; identical to argmax of the softmax).
    chosen = run_head(last_hidden, params['ln_f_w'], params['ln_f_b'],
                      params['wte_t'])

    kv_cache = [(k_all[l].reshape(B, S, EMBED), v_all[l].reshape(B, S, EMBED))
                for l in range(LAYERS)]
    return chosen, kv_cache


# ---------------- deterministic synthetic parameters ----------------
def init_params(key):
    keys = jax.random.split(key, 2 + LAYERS)
    wte = 0.02 * jax.random.normal(keys[0], (VOCAB, EMBED), jnp.float32)
    params = {
        'wte': wte,
        'wte_t': wte.T.astype(jnp.bfloat16),   # pre-transposed tied lm_head (E, V)
        'wpe': 0.02 * jax.random.normal(keys[1], (N_CTX, EMBED), jnp.float32),
        'ln_f_w': jnp.ones((1, EMBED), jnp.float32),
        'ln_f_b': jnp.zeros((1, EMBED), jnp.float32),
    }
    per_layer = []
    for i in range(LAYERS):
        lk = jax.random.split(keys[2 + i], 8)
        per_layer.append(dict(
            ln1_w=jnp.ones((1, EMBED), jnp.float32),
            ln1_b=jnp.zeros((1, EMBED), jnp.float32),
            ln2_w=jnp.ones((1, EMBED), jnp.float32),
            ln2_b=jnp.zeros((1, EMBED), jnp.float32),
            # matmul weights stored bf16 (MXU operands); biases stay f32.
            c_attn_w=(0.02 * jax.random.normal(lk[0], (EMBED, 3 * EMBED),
                                               jnp.float32)).astype(jnp.bfloat16),
            c_attn_b=0.01 * jax.random.normal(lk[1], (1, 3 * EMBED), jnp.float32),
            c_proj_w=(0.02 * jax.random.normal(lk[2], (EMBED, EMBED),
                                               jnp.float32)).astype(jnp.bfloat16),
            c_proj_b=0.01 * jax.random.normal(lk[3], (1, EMBED), jnp.float32),
            fc_w=(0.02 * jax.random.normal(lk[4], (EMBED, INNER),
                                           jnp.float32)).astype(jnp.bfloat16),
            fc_b=0.01 * jax.random.normal(lk[5], (1, INNER), jnp.float32),
            mproj_w=(0.02 * jax.random.normal(lk[6], (INNER, EMBED),
                                              jnp.float32)).astype(jnp.bfloat16),
            mproj_b=0.01 * jax.random.normal(lk[7], (1, EMBED), jnp.float32),
        ))
    # GPT-2 h.{i}.attn.bias (tril ones) intentionally not materialized: a
    # uniform +1 on all unmasked logits cancels under softmax.
    params['stacked'] = {k: jnp.stack([lp[k] for lp in per_layer], axis=0)
                         for k in per_layer[0]}
    return params


if __name__ == "__main__":
    key = jax.random.PRNGKey(0)
    pkey, ikey = jax.random.split(key)
    params = init_params(pkey)

    B, S = 2, 8
    input_ids = jax.random.randint(ikey, (B, S), 0, VOCAB, dtype=jnp.int32)
    attention_mask = jnp.array([[1] * S,
                                [1] * 5 + [0] * (S - 5)], dtype=jnp.int32)

    fwd = jax.jit(prefill_forward)
    chosen, kv_cache = fwd(params, input_ids, attention_mask)
    chosen = jax.block_until_ready(chosen)
    for k_c, v_c in kv_cache:
        jax.block_until_ready(k_c)
        jax.block_until_ready(v_c)

    assert chosen.shape == (B,)
    assert len(kv_cache) == LAYERS
    assert kv_cache[0][0].shape == (B, S, EMBED)
    print("KERNEL_OK")
</pallas_src>

<mosaic_0001>
module attributes {stable_mosaic.version = 11 : i64} {
  func.func @head_kernel(%arg0: i32, %arg1: memref<2x128xf32, #tpu.memory_space<vmem>>, %arg2: memref<1x128xf32, #tpu.memory_space<vmem>>, %arg3: memref<1x128xf32, #tpu.memory_space<vmem>>, %arg4: memref<128x256xbf16, #tpu.memory_space<vmem>>, %arg5: memref<2x1xi32, #tpu.memory_space<vmem>>) attributes {dimension_semantics = [#tpu.dimension_semantics<arbitrary>], iteration_bounds = array<i64: 1>, scalar_prefetch = 0 : i64, scratch_operands = 0 : i64, tpu.core_type = #tpu.core_type<tc>, window_params = [{pipeline_mode = #tpu.pipeline_mode<synchronous>, transform_indices = @transform_0, window_bounds = array<i64: 2, 128>}, {pipeline_mode = #tpu.pipeline_mode<synchronous>, transform_indices = @transform_1, window_bounds = array<i64: 1, 128>}, {pipeline_mode = #tpu.pipeline_mode<synchronous>, transform_indices = @transform_2, window_bounds = array<i64: 1, 128>}, {pipeline_mode = #tpu.pipeline_mode<synchronous>, transform_indices = @transform_3, window_bounds = array<i64: 128, 256>}, {pipeline_mode = #tpu.pipeline_mode<synchronous>, transform_indices = @transform_4, window_bounds = array<i64: 2, 1>}]} {
    %c0 = arith.constant 0 : index
    %c0_0 = arith.constant 0 : index
    %0 = vector.load %arg1[%c0, %c0_0] : memref<2x128xf32, #tpu.memory_space<vmem>>, vector<2x128xf32>
    %c0_1 = arith.constant 0 : index
    %c0_2 = arith.constant 0 : index
    %1 = vector.load %arg2[%c0_1, %c0_2] : memref<1x128xf32, #tpu.memory_space<vmem>>, vector<1x128xf32>
    %c0_3 = arith.constant 0 : index
    %c0_4 = arith.constant 0 : index
    %2 = vector.load %arg3[%c0_3, %c0_4] : memref<1x128xf32, #tpu.memory_space<vmem>>, vector<1x128xf32>
    %cst = arith.constant dense<0.000000e+00> : vector<2xf32>
    %3 = vector.multi_reduction <add>, %0, %cst [1] : vector<2x128xf32> to vector<2xf32>
    %4 = vector.shape_cast %3 : vector<2xf32> to vector<2x1xf32>
    %cst_5 = arith.constant 1.280000e+02 : f32
    %5 = vector.broadcast %cst_5 : f32 to vector<2x1xf32>
    %6 = arith.divf %4, %5 : vector<2x1xf32>
    %7 = vector.broadcast %6 : vector<2x1xf32> to vector<2x128xf32>
    %8 = arith.subf %0, %7 : vector<2x128xf32>
    %9 = arith.mulf %8, %8 : vector<2x128xf32>
    %cst_6 = arith.constant dense<0.000000e+00> : vector<2xf32>
    %10 = vector.multi_reduction <add>, %9, %cst_6 [1] : vector<2x128xf32> to vector<2xf32>
    %11 = vector.shape_cast %10 : vector<2xf32> to vector<2x1xf32>
    %cst_7 = arith.constant 1.280000e+02 : f32
    %12 = vector.broadcast %cst_7 : f32 to vector<2x1xf32>
    %13 = arith.divf %11, %12 : vector<2x1xf32>
    %cst_8 = arith.constant 9.99999974E-6 : f32
    %14 = vector.broadcast %cst_8 : f32 to vector<2x1xf32>
    %15 = arith.addf %13, %14 : vector<2x1xf32>
    %16 = math.rsqrt %15 : vector<2x1xf32>
    %17 = vector.broadcast %16 : vector<2x1xf32> to vector<2x128xf32>
    %18 = arith.mulf %8, %17 : vector<2x128xf32>
    %19 = vector.broadcast %1 : vector<1x128xf32> to vector<2x128xf32>
    %20 = arith.mulf %18, %19 : vector<2x128xf32>
    %21 = vector.broadcast %2 : vector<1x128xf32> to vector<2x128xf32>
    %22 = arith.addf %20, %21 : vector<2x128xf32>
    %23 = arith.truncf %22 : vector<2x128xf32> to vector<2x128xbf16>
    %c0_9 = arith.constant 0 : index
    %c0_10 = arith.constant 0 : index
    %24 = vector.load %arg4[%c0_9, %c0_10] : memref<128x256xbf16, #tpu.memory_space<vmem>>, vector<128x256xbf16>
    %cst_11 = arith.constant dense<0.000000e+00> : vector<2x256xf32>
    %25 = tpu.matmul %23, %24, %cst_11 {dimension_numbers = #tpu.dot_dimension_numbers<[1], [0], [0], [1], [0, 0, 1, 1], [], []>} : vector<2x128xbf16>, vector<128x256xbf16>, vector<2x256xf32> -> vector<2x256xf32>
    %cst_12 = arith.constant dense<0xFF800000> : vector<2xf32>
    %26 = vector.multi_reduction <maximumf>, %25, %cst_12 [1] : vector<2x256xf32> to vector<2xf32>
    %27 = vector.shape_cast %26 : vector<2xf32> to vector<2x1xf32>
    %28 = tpu.iota {dimensions = array<i32: 1>} : vector<2x256xi32>
    %29 = arith.sitofp %28 : vector<2x256xi32> to vector<2x256xf32>
    %30 = vector.broadcast %27 : vector<2x1xf32> to vector<2x256xf32>
    %31 = arith.cmpf oge, %25, %30 : vector<2x256xf32>
    %cst_13 = arith.constant 2.560000e+02 : f32
    %32 = vector.broadcast %cst_13 : f32 to vector<2x256xf32>
    %33 = arith.select %31, %29, %32 : vector<2x256xi1>, vector<2x256xf32>
    %cst_14 = arith.constant dense<0x7F800000> : vector<2xf32>
    %34 = vector.multi_reduction <minimumf>, %33, %cst_14 [1] : vector<2x256xf32> to vector<2xf32>
    %35 = vector.shape_cast %34 : vector<2xf32> to vector<2x1xf32>
    %36 = arith.fptosi %35 : vector<2x1xf32> to vector<2x1xi32>
    %c0_15 = arith.constant 0 : index
    %c0_16 = arith.constant 0 : index
    %37 = vector.load %arg5[%c0_15, %c0_16] : memref<2x1xi32, #tpu.memory_space<vmem>>, vector<2x1xi32>
    tpu.vector_store %arg5[%c0_15, %c0_16], %36 {strides = array<i32>} : memref<2x1xi32, #tpu.memory_space<vmem>>, vector<2x1xi32>,
    return
  }
  func.func @transform_0(%arg0: i32) -> (i32, i32) {
    %c0_i32 = arith.constant 0 : i32
    %c0_i32_0 = arith.constant 0 : i32
    %c0_i32_1 = arith.constant 0 : i32
    return %c0_i32, %c0_i32_0 : i32, i32
  }
  func.func @transform_1(%arg0: i32) -> (i32, i32) {
    %c0_i32 = arith.constant 0 : i32
    %c0_i32_0 = arith.constant 0 : i32
    %c0_i32_1 = arith.constant 0 : i32
    return %c0_i32, %c0_i32_0 : i32, i32
  }
  func.func @transform_2(%arg0: i32) -> (i32, i32) {
    %c0_i32 = arith.constant 0 : i32
    %c0_i32_0 = arith.constant 0 : i32
    %c0_i32_1 = arith.constant 0 : i32
    return %c0_i32, %c0_i32_0 : i32, i32
  }
  func.func @transform_3(%arg0: i32) -> (i32, i32) {
    %c0_i32 = arith.constant 0 : i32
    %c0_i32_0 = arith.constant 0 : i32
    %c0_i32_1 = arith.constant 0 : i32
    return %c0_i32, %c0_i32_0 : i32, i32
  }
  func.func @transform_4(%arg0: i32) -> (i32, i32) {
    %c0_i32 = arith.constant 0 : i32
    %c0_i32_0 = arith.constant 0 : i32
    %c0_i32_1 = arith.constant 0 : i32
    return %c0_i32, %c0_i32_0 : i32, i32
  }
}

module attributes {stable_mosaic.version = 11 : i64} {
  func.func @stack_kernel(%arg0: i32, %arg1: memref<16x128xf32, #tpu.memory_space<vmem>>, %arg2: memref<1x1x128xf32, #tpu.memory_space<vmem>>, %arg3: memref<1x1x128xf32, #tpu.memory_space<vmem>>, %arg4: memref<1x128x384xbf16, #tpu.memory_space<vmem>>, %arg5: memref<1x1x384xf32, #tpu.memory_space<vmem>>, %arg6: memref<1x128x128xbf16, #tpu.memory_space<vmem>>, %arg7: memref<1x1x128xf32, #tpu.memory_space<vmem>>, %arg8: memref<1x1x128xf32, #tpu.memory_space<vmem>>, %arg9: memref<1x1x128xf32, #tpu.memory_space<vmem>>, %arg10: memref<1x128x512xbf16, #tpu.memory_space<vmem>>, %arg11: memref<1x1x512xf32, #tpu.memory_space<vmem>>, %arg12: memref<1x512x128xbf16, #tpu.memory_space<vmem>>, %arg13: memref<1x1x128xf32, #tpu.memory_space<vmem>>, %arg14: memref<16x128xf32, #tpu.memory_space<vmem>>, %arg15: memref<1x16x128xf32, #tpu.memory_space<vmem>>, %arg16: memref<1x16x128xf32, #tpu.memory_space<vmem>>, %arg17: memref<16x128xf32, #tpu.memory_space<vmem>>) attributes {dimension_semantics = [#tpu.dimension_semantics<arbitrary>], iteration_bounds = array<i64: 2>, scalar_prefetch = 0 : i64, scratch_operands = 1 : i64, tpu.core_type = #tpu.core_type<tc>, window_params = [{pipeline_mode = #tpu.pipeline_mode<synchronous>, transform_indices = @transform_0, window_bounds = array<i64: 16, 128>}, {transform_indices = @transform_1, window_bounds = array<i64: 1, 1, 128>}, {transform_indices = @transform_2, window_bounds = array<i64: 1, 1, 128>}, {transform_indices = @transform_3, window_bounds = array<i64: 1, 128, 384>}, {transform_indices = @transform_4, window_bounds = array<i64: 1, 1, 384>}, {transform_indices = @transform_5, window_bounds = array<i64: 1, 128, 128>}, {transform_indices = @transform_6, window_bounds = array<i64: 1, 1, 128>}, {transform_indices = @transform_7, window_bounds = array<i64: 1, 1, 128>}, {transform_indices = @transform_8, window_bounds = array<i64: 1, 1, 128>}, {transform_indices = @transform_9, window_bounds = array<i64: 1, 128, 512>}, {transform_indices = @transform_10, window_bounds = array<i64: 1, 1, 512>}, {transform_indices = @transform_11, window_bounds = array<i64: 1, 512, 128>}, {transform_indices = @transform_12, window_bounds = array<i64: 1, 1, 128>}, {pipeline_mode = #tpu.pipeline_mode<synchronous>, transform_indices = @transform_13, window_bounds = array<i64: 16, 128>}, {transform_indices = @transform_14, window_bounds = array<i64: 1, 16, 128>}, {transform_indices = @transform_15, window_bounds = array<i64: 1, 16, 128>}]} {
    %c0_i32 = arith.constant 0 : i32
    %0 = arith.cmpi eq, %arg0, %c0_i32 : i32
    %1 = arith.extui %0 : i1 to i32
    %c0_i32_0 = arith.constant 0 : i32
    %2 = arith.cmpi ne, %1, %c0_i32_0 : i32
    scf.if %2 {
      %c0_121 = arith.constant 0 : index
      %c0_122 = arith.constant 0 : index
      %324 = vector.load %arg1[%c0_121, %c0_122] : memref<16x128xf32, #tpu.memory_space<vmem>>, vector<16x128xf32>
      %c0_123 = arith.constant 0 : index
      %c0_124 = arith.constant 0 : index
      %325 = vector.load %arg17[%c0_123, %c0_124] : memref<16x128xf32, #tpu.memory_space<vmem>>, vector<16x128xf32>
      tpu.vector_store %arg17[%c0_123, %c0_124], %324 {strides = array<i32>} : memref<16x128xf32, #tpu.memory_space<vmem>>, vector<16x128xf32>,
    } else {
    }
    %c0 = arith.constant 0 : index
    %c0_1 = arith.constant 0 : index
    %3 = vector.load %arg17[%c0, %c0_1] : memref<16x128xf32, #tpu.memory_space<vmem>>, vector<16x128xf32>
    %c0_2 = arith.constant 0 : index
    %c0_3 = arith.constant 0 : index
    %c0_4 = arith.constant 0 : index
    %4 = vector.load %arg2[%c0_2, %c0_3, %c0_4] : memref<1x1x128xf32, #tpu.memory_space<vmem>>, vector<1x1x128xf32>
    %5 = vector.shape_cast %4 : vector<1x1x128xf32> to vector<1x128xf32>
    %c0_5 = arith.constant 0 : index
    %c0_6 = arith.constant 0 : index
    %c0_7 = arith.constant 0 : index
    %6 = vector.load %arg3[%c0_5, %c0_6, %c0_7] : memref<1x1x128xf32, #tpu.memory_space<vmem>>, vector<1x1x128xf32>
    %7 = vector.shape_cast %6 : vector<1x1x128xf32> to vector<1x128xf32>
    %cst = arith.constant dense<0.000000e+00> : vector<16xf32>
    %8 = vector.multi_reduction <add>, %3, %cst [1] : vector<16x128xf32> to vector<16xf32>
    %9 = vector.shape_cast %8 : vector<16xf32> to vector<16x1xf32>
    %cst_8 = arith.constant 1.280000e+02 : f32
    %10 = vector.broadcast %cst_8 : f32 to vector<16x1xf32>
    %11 = arith.divf %9, %10 : vector<16x1xf32>
    %12 = vector.broadcast %11 : vector<16x1xf32> to vector<16x128xf32>
    %13 = arith.subf %3, %12 : vector<16x128xf32>
    %14 = arith.mulf %13, %13 : vector<16x128xf32>
    %cst_9 = arith.constant dense<0.000000e+00> : vector<16xf32>
    %15 = vector.multi_reduction <add>, %14, %cst_9 [1] : vector<16x128xf32> to vector<16xf32>
    %16 = vector.shape_cast %15 : vector<16xf32> to vector<16x1xf32>
    %cst_10 = arith.constant 1.280000e+02 : f32
    %17 = vector.broadcast %cst_10 : f32 to vector<16x1xf32>
    %18 = arith.divf %16, %17 : vector<16x1xf32>
    %cst_11 = arith.constant 9.99999974E-6 : f32
    %19 = vector.broadcast %cst_11 : f32 to vector<16x1xf32>
    %20 = arith.addf %18, %19 : vector<16x1xf32>
    %21 = math.rsqrt %20 : vector<16x1xf32>
    %22 = vector.broadcast %21 : vector<16x1xf32> to vector<16x128xf32>
    %23 = arith.mulf %13, %22 : vector<16x128xf32>
    %24 = vector.broadcast %5 : vector<1x128xf32> to vector<16x128xf32>
    %25 = arith.mulf %23, %24 : vector<16x128xf32>
    %26 = vector.broadcast %7 : vector<1x128xf32> to vector<16x128xf32>
    %27 = arith.addf %25, %26 : vector<16x128xf32>
    %28 = arith.truncf %27 : vector<16x128xf32> to vector<16x128xbf16>
    %c0_12 = arith.constant 0 : index
    %c0_13 = arith.constant 0 : index
    %c0_14 = arith.constant 0 : index
    %29 = vector.load %arg4[%c0_12, %c0_13, %c0_14] : memref<1x128x384xbf16, #tpu.memory_space<vmem>>, vector<1x128x384xbf16>
    %30 = vector.shape_cast %29 : vector<1x128x384xbf16> to vector<128x384xbf16>
    %cst_15 = arith.constant dense<0.000000e+00> : vector<16x384xf32>
    %31 = tpu.matmul %28, %30, %cst_15 {dimension_numbers = #tpu.dot_dimension_numbers<[1], [0], [0], [1], [0, 0, 1, 1], [], []>} : vector<16x128xbf16>, vector<128x384xbf16>, vector<16x384xf32> -> vector<16x384xf32>
    %c0_16 = arith.constant 0 : index
    %c0_17 = arith.constant 0 : index
    %c0_18 = arith.constant 0 : index
    %32 = vector.load %arg5[%c0_16, %c0_17, %c0_18] : memref<1x1x384xf32, #tpu.memory_space<vmem>>, vector<1x1x384xf32>
    %33 = vector.shape_cast %32 : vector<1x1x384xf32> to vector<1x384xf32>
    %34 = vector.broadcast %33 : vector<1x384xf32> to vector<16x384xf32>
    %35 = arith.addf %31, %34 : vector<16x384xf32>
    %36 = vector.extract_strided_slice %35 {offsets = [0, 128], sizes = [16, 128], strides = [1, 1]} : vector<16x384xf32> to vector<16x128xf32>
    %37 = vector.extract_strided_slice %35 {offsets = [0, 256], sizes = [16, 128], strides = [1, 1]} : vector<16x384xf32> to vector<16x128xf32>
    %c0_19 = arith.constant 0 : index
    %c0_20 = arith.constant 0 : index
    %c0_21 = arith.constant 0 : index
    %38 = vector.load %arg15[%c0_19, %c0_20, %c0_21] : memref<1x16x128xf32, #tpu.memory_space<vmem>>, vector<1x16x128xf32>
    %39 = vector.shape_cast %38 : vector<1x16x128xf32> to vector<16x128xf32>
    %40 = vector.shape_cast %36 : vector<16x128xf32> to vector<1x16x128xf32>
    tpu.vector_store %arg15[%c0_19, %c0_20, %c0_21], %40 {strides = array<i32>} : memref<1x16x128xf32, #tpu.memory_space<vmem>>, vector<1x16x128xf32>,
    %c0_22 = arith.constant 0 : index
    %c0_23 = arith.constant 0 : index
    %c0_24 = arith.constant 0 : index
    %41 = vector.load %arg16[%c0_22, %c0_23, %c0_24] : memref<1x16x128xf32, #tpu.memory_space<vmem>>, vector<1x16x128xf32>
    %42 = vector.shape_cast %41 : vector<1x16x128xf32> to vector<16x128xf32>
    %43 = vector.shape_cast %37 : vector<16x128xf32> to vector<1x16x128xf32>
    tpu.vector_store %arg16[%c0_22, %c0_23, %c0_24], %43 {strides = array<i32>} : memref<1x16x128xf32, #tpu.memory_space<vmem>>, vector<1x16x128xf32>,
    %44 = tpu.iota {dimensions = array<i32: 0>} : vector<8x8xi32>
    %45 = tpu.iota {dimensions = array<i32: 1>} : vector<8x8xi32>
    %46 = arith.cmpi sle, %45, %44 : vector<8x8xi32>
    %c0_25 = arith.constant 0 : index
    %c0_26 = arith.constant 0 : index
    %c0_27 = arith.constant 0 : index
    %47 = vector.load %arg6[%c0_25, %c0_26, %c0_27] : memref<1x128x128xbf16, #tpu.memory_space<vmem>>, vector<1x128x128xbf16>
    %48 = vector.shape_cast %47 : vector<1x128x128xbf16> to vector<128x128xbf16>
    %cst_28 = arith.constant 0.000000e+00 : f32
    %49 = vector.broadcast %cst_28 : f32 to vector<8x128xf32>
    %50 = vector.extract_strided_slice %35 {offsets = [0, 0], sizes = [8, 32], strides = [1, 1]} : vector<16x384xf32> to vector<8x32xf32>
    %51 = arith.truncf %50 : vector<8x32xf32> to vector<8x32xbf16>
    %52 = vector.extract_strided_slice %36 {offsets = [0, 0], sizes = [8, 32], strides = [1, 1]} : vector<16x128xf32> to vector<8x32xf32>
    %53 = arith.truncf %52 : vector<8x32xf32> to vector<8x32xbf16>
    %54 = vector.extract_strided_slice %37 {offsets = [0, 0], sizes = [8, 32], strides = [1, 1]} : vector<16x128xf32> to vector<8x32xf32>
    %55 = arith.truncf %54 : vector<8x32xf32> to vector<8x32xbf16>
    %cst_29 = arith.constant dense<0.000000e+00> : vector<8x8xf32>
    %56 = tpu.matmul %51, %53, %cst_29 {dimension_numbers = #tpu.dot_dimension_numbers<[1], [1], [0], [0], [0, 0, 1, 0], [], []>} : vector<8x32xbf16>, vector<8x32xbf16>, vector<8x8xf32> -> vector<8x8xf32>
    %cst_30 = arith.constant 0.176776692 : f32
    %57 = vector.broadcast %cst_30 : f32 to vector<8x8xf32>
    %58 = arith.mulf %56, %57 : vector<8x8xf32>
    %cst_31 = arith.constant -1.000000e+09 : f32
    %59 = vector.broadcast %cst_31 : f32 to vector<8x8xf32>
    %60 = arith.select %46, %58, %59 : vector<8x8xi1>, vector<8x8xf32>
    %cst_32 = arith.constant dense<0xFF800000> : vector<8xf32>
    %61 = vector.multi_reduction <maximumf>, %60, %cst_32 [1] : vector<8x8xf32> to vector<8xf32>
    %62 = vector.shape_cast %61 : vector<8xf32> to vector<8x1xf32>
    %63 = vector.broadcast %62 : vector<8x1xf32> to vector<8x8xf32>
    %64 = arith.subf %60, %63 : vector<8x8xf32>
    %65 = math.exp %64 : vector<8x8xf32>
    %cst_33 = arith.constant dense<0.000000e+00> : vector<8xf32>
    %66 = vector.multi_reduction <add>, %65, %cst_33 [1] : vector<8x8xf32> to vector<8xf32>
    %67 = vector.shape_cast %66 : vector<8xf32> to vector<8x1xf32>
    %68 = tpu.reciprocal %67 {approx = true} : vector<8x1xf32> -> vector<8x1xf32>
    %69 = vector.broadcast %68 : vector<8x1xf32> to vector<8x8xf32>
    %70 = arith.mulf %65, %69 : vector<8x8xf32>
    %71 = arith.truncf %70 : vector<8x8xf32> to vector<8x8xbf16>
    %cst_34 = arith.constant dense<0.000000e+00> : vector<8x32xf32>
    %72 = tpu.matmul %71, %55, %cst_34 {dimension_numbers = #tpu.dot_dimension_numbers<[1], [0], [0], [1], [0, 0, 1, 1], [], []>} : vector<8x8xbf16>, vector<8x32xbf16>, vector<8x32xf32> -> vector<8x32xf32>
    %73 = arith.truncf %72 : vector<8x32xf32> to vector<8x32xbf16>
    %74 = vector.extract_strided_slice %48 {offsets = [0, 0], sizes = [32, 128], strides = [1, 1]} : vector<128x128xbf16> to vector<32x128xbf16>
    %cst_35 = arith.constant dense<0.000000e+00> : vector<8x128xf32>
    %75 = tpu.matmul %73, %74, %cst_35 {dimension_numbers = #tpu.dot_dimension_numbers<[1], [0], [0], [1], [0, 0, 1, 1], [], []>} : vector<8x32xbf16>, vector<32x128xbf16>, vector<8x128xf32> -> vector<8x128xf32>
    %76 = arith.addf %49, %75 : vector<8x128xf32>
    %77 = vector.extract_strided_slice %35 {offsets = [0, 32], sizes = [8, 32], strides = [1, 1]} : vector<16x384xf32> to vector<8x32xf32>
    %78 = arith.truncf %77 : vector<8x32xf32> to vector<8x32xbf16>
    %79 = vector.extract_strided_slice %36 {offsets = [0, 32], sizes = [8, 32], strides = [1, 1]} : vector<16x128xf32> to vector<8x32xf32>
    %80 = arith.truncf %79 : vector<8x32xf32> to vector<8x32xbf16>
    %81 = vector.extract_strided_slice %37 {offsets = [0, 32], sizes = [8, 32], strides = [1, 1]} : vector<16x128xf32> to vector<8x32xf32>
    %82 = arith.truncf %81 : vector<8x32xf32> to vector<8x32xbf16>
    %cst_36 = arith.constant dense<0.000000e+00> : vector<8x8xf32>
    %83 = tpu.matmul %78, %80, %cst_36 {dimension_numbers = #tpu.dot_dimension_numbers<[1], [1], [0], [0], [0, 0, 1, 0], [], []>} : vector<8x32xbf16>, vector<8x32xbf16>, vector<8x8xf32> -> vector<8x8xf32>
    %cst_37 = arith.constant 0.176776692 : f32
    %84 = vector.broadcast %cst_37 : f32 to vector<8x8xf32>
    %85 = arith.mulf %83, %84 : vector<8x8xf32>
    %cst_38 = arith.constant -1.000000e+09 : f32
    %86 = vector.broadcast %cst_38 : f32 to vector<8x8xf32>
    %87 = arith.select %46, %85, %86 : vector<8x8xi1>, vector<8x8xf32>
    %cst_39 = arith.constant dense<0xFF800000> : vector<8xf32>
    %88 = vector.multi_reduction <maximumf>, %87, %cst_39 [1] : vector<8x8xf32> to vector<8xf32>
    %89 = vector.shape_cast %88 : vector<8xf32> to vector<8x1xf32>
    %90 = vector.broadcast %89 : vector<8x1xf32> to vector<8x8xf32>
    %91 = arith.subf %87, %90 : vector<8x8xf32>
    %92 = math.exp %91 : vector<8x8xf32>
    %cst_40 = arith.constant dense<0.000000e+00> : vector<8xf32>
    %93 = vector.multi_reduction <add>, %92, %cst_40 [1] : vector<8x8xf32> to vector<8xf32>
    %94 = vector.shape_cast %93 : vector<8xf32> to vector<8x1xf32>
    %95 = tpu.reciprocal %94 {approx = true} : vector<8x1xf32> -> vector<8x1xf32>
    %96 = vector.broadcast %95 : vector<8x1xf32> to vector<8x8xf32>
    %97 = arith.mulf %92, %96 : vector<8x8xf32>
    %98 = arith.truncf %97 : vector<8x8xf32> to vector<8x8xbf16>
    %cst_41 = arith.constant dense<0.000000e+00> : vector<8x32xf32>
    %99 = tpu.matmul %98, %82, %cst_41 {dimension_numbers = #tpu.dot_dimension_numbers<[1], [0], [0], [1], [0, 0, 1, 1], [], []>} : vector<8x8xbf16>, vector<8x32xbf16>, vector<8x32xf32> -> vector<8x32xf32>
    %100 = arith.truncf %99 : vector<8x32xf32> to vector<8x32xbf16>
    %101 = vector.extract_strided_slice %48 {offsets = [32, 0], sizes = [32, 128], strides = [1, 1]} : vector<128x128xbf16> to vector<32x128xbf16>
    %cst_42 = arith.constant dense<0.000000e+00> : vector<8x128xf32>
    %102 = tpu.matmul %100, %101, %cst_42 {dimension_numbers = #tpu.dot_dimension_numbers<[1], [0], [0], [1], [0, 0, 1, 1], [], []>} : vector<8x32xbf16>, vector<32x128xbf16>, vector<8x128xf32> -> vector<8x128xf32>
    %103 = arith.addf %76, %102 : vector<8x128xf32>
    %104 = vector.extract_strided_slice %35 {offsets = [0, 64], sizes = [8, 32], strides = [1, 1]} : vector<16x384xf32> to vector<8x32xf32>
    %105 = arith.truncf %104 : vector<8x32xf32> to vector<8x32xbf16>
    %106 = vector.extract_strided_slice %36 {offsets = [0, 64], sizes = [8, 32], strides = [1, 1]} : vector<16x128xf32> to vector<8x32xf32>
    %107 = arith.truncf %106 : vector<8x32xf32> to vector<8x32xbf16>
    %108 = vector.extract_strided_slice %37 {offsets = [0, 64], sizes = [8, 32], strides = [1, 1]} : vector<16x128xf32> to vector<8x32xf32>
    %109 = arith.truncf %108 : vector<8x32xf32> to vector<8x32xbf16>
    %cst_43 = arith.constant dense<0.000000e+00> : vector<8x8xf32>
    %110 = tpu.matmul %105, %107, %cst_43 {dimension_numbers = #tpu.dot_dimension_numbers<[1], [1], [0], [0], [0, 0, 1, 0], [], []>} : vector<8x32xbf16>, vector<8x32xbf16>, vector<8x8xf32> -> vector<8x8xf32>
    %cst_44 = arith.constant 0.176776692 : f32
    %111 = vector.broadcast %cst_44 : f32 to vector<8x8xf32>
    %112 = arith.mulf %110, %111 : vector<8x8xf32>
    %cst_45 = arith.constant -1.000000e+09 : f32
    %113 = vector.broadcast %cst_45 : f32 to vector<8x8xf32>
    %114 = arith.select %46, %112, %113 : vector<8x8xi1>, vector<8x8xf32>
    %cst_46 = arith.constant dense<0xFF800000> : vector<8xf32>
    %115 = vector.multi_reduction <maximumf>, %114, %cst_46 [1] : vector<8x8xf32> to vector<8xf32>
    %116 = vector.shape_cast %115 : vector<8xf32> to vector<8x1xf32>
    %117 = vector.broadcast %116 : vector<8x1xf32> to vector<8x8xf32>
    %118 = arith.subf %114, %117 : vector<8x8xf32>
    %119 = math.exp %118 : vector<8x8xf32>
    %cst_47 = arith.constant dense<0.000000e+00> : vector<8xf32>
    %120 = vector.multi_reduction <add>, %119, %cst_47 [1] : vector<8x8xf32> to vector<8xf32>
    %121 = vector.shape_cast %120 : vector<8xf32> to vector<8x1xf32>
    %122 = tpu.reciprocal %121 {approx = true} : vector<8x1xf32> -> vector<8x1xf32>
    %123 = vector.broadcast %122 : vector<8x1xf32> to vector<8x8xf32>
    %124 = arith.mulf %119, %123 : vector<8x8xf32>
    %125 = arith.truncf %124 : vector<8x8xf32> to vector<8x8xbf16>
    %cst_48 = arith.constant dense<0.000000e+00> : vector<8x32xf32>
    %126 = tpu.matmul %125, %109, %cst_48 {dimension_numbers = #tpu.dot_dimension_numbers<[1], [0], [0], [1], [0, 0, 1, 1], [], []>} : vector<8x8xbf16>, vector<8x32xbf16>, vector<8x32xf32> -> vector<8x32xf32>
    %127 = arith.truncf %126 : vector<8x32xf32> to vector<8x32xbf16>
    %128 = vector.extract_strided_slice %48 {offsets = [64, 0], sizes = [32, 128], strides = [1, 1]} : vector<128x128xbf16> to vector<32x128xbf16>
    %cst_49 = arith.constant dense<0.000000e+00> : vector<8x128xf32>
    %129 = tpu.matmul %127, %128, %cst_49 {dimension_numbers = #tpu.dot_dimension_numbers<[1], [0], [0], [1], [0, 0, 1, 1], [], []>} : vector<8x32xbf16>, vector<32x128xbf16>, vector<8x128xf32> -> vector<8x128xf32>
    %130 = arith.addf %103, %129 : vector<8x128xf32>
    %131 = vector.extract_strided_slice %35 {offsets = [0, 96], sizes = [8, 32], strides = [1, 1]} : vector<16x384xf32> to vector<8x32xf32>
    %132 = arith.truncf %131 : vector<8x32xf32> to vector<8x32xbf16>
    %133 = vector.extract_strided_slice %36 {offsets = [0, 96], sizes = [8, 32], strides = [1, 1]} : vector<16x128xf32> to vector<8x32xf32>
    %134 = arith.truncf %133 : vector<8x32xf32> to vector<8x32xbf16>
    %135 = vector.extract_strided_slice %37 {offsets = [0, 96], sizes = [8, 32], strides = [1, 1]} : vector<16x128xf32> to vector<8x32xf32>
    %136 = arith.truncf %135 : vector<8x32xf32> to vector<8x32xbf16>
    %cst_50 = arith.constant dense<0.000000e+00> : vector<8x8xf32>
    %137 = tpu.matmul %132, %134, %cst_50 {dimension_numbers = #tpu.dot_dimension_numbers<[1], [1], [0], [0], [0, 0, 1, 0], [], []>} : vector<8x32xbf16>, vector<8x32xbf16>, vector<8x8xf32> -> vector<8x8xf32>
    %cst_51 = arith.constant 0.176776692 : f32
    %138 = vector.broadcast %cst_51 : f32 to vector<8x8xf32>
    %139 = arith.mulf %137, %138 : vector<8x8xf32>
    %cst_52 = arith.constant -1.000000e+09 : f32
    %140 = vector.broadcast %cst_52 : f32 to vector<8x8xf32>
    %141 = arith.select %46, %139, %140 : vector<8x8xi1>, vector<8x8xf32>
    %cst_53 = arith.constant dense<0xFF800000> : vector<8xf32>
    %142 = vector.multi_reduction <maximumf>, %141, %cst_53 [1] : vector<8x8xf32> to vector<8xf32>
    %143 = vector.shape_cast %142 : vector<8xf32> to vector<8x1xf32>
    %144 = vector.broadcast %143 : vector<8x1xf32> to vector<8x8xf32>
    %145 = arith.subf %141, %144 : vector<8x8xf32>
    %146 = math.exp %145 : vector<8x8xf32>
    %cst_54 = arith.constant dense<0.000000e+00> : vector<8xf32>
    %147 = vector.multi_reduction <add>, %146, %cst_54 [1] : vector<8x8xf32> to vector<8xf32>
    %148 = vector.shape_cast %147 : vector<8xf32> to vector<8x1xf32>
    %149 = tpu.reciprocal %148 {approx = true} : vector<8x1xf32> -> vector<8x1xf32>
    %150 = vector.broadcast %149 : vector<8x1xf32> to vector<8x8xf32>
    %151 = arith.mulf %146, %150 : vector<8x8xf32>
    %152 = arith.truncf %151 : vector<8x8xf32> to vector<8x8xbf16>
    %cst_55 = arith.constant dense<0.000000e+00> : vector<8x32xf32>
    %153 = tpu.matmul %152, %136, %cst_55 {dimension_numbers = #tpu.dot_dimension_numbers<[1], [0], [0], [1], [0, 0, 1, 1], [], []>} : vector<8x8xbf16>, vector<8x32xbf16>, vector<8x32xf32> -> vector<8x32xf32>
    %154 = arith.truncf %153 : vector<8x32xf32> to vector<8x32xbf16>
    %155 = vector.extract_strided_slice %48 {offsets = [96, 0], sizes = [32, 128], strides = [1, 1]} : vector<128x128xbf16> to vector<32x128xbf16>
    %cst_56 = arith.constant dense<0.000000e+00> : vector<8x128xf32>
    %156 = tpu.matmul %154, %155, %cst_56 {dimension_numbers = #tpu.dot_dimension_numbers<[1], [0], [0], [1], [0, 0, 1, 1], [], []>} : vector<8x32xbf16>, vector<32x128xbf16>, vector<8x128xf32> -> vector<8x128xf32>
    %157 = arith.addf %130, %156 : vector<8x128xf32>
    %cst_57 = arith.constant 0.000000e+00 : f32
    %158 = vector.broadcast %cst_57 : f32 to vector<8x128xf32>
    %159 = vector.extract_strided_slice %35 {offsets = [8, 0], sizes = [8, 32], strides = [1, 1]} : vector<16x384xf32> to vector<8x32xf32>
    %160 = arith.truncf %159 : vector<8x32xf32> to vector<8x32xbf16>
    %161 = vector.extract_strided_slice %36 {offsets = [8, 0], sizes = [8, 32], strides = [1, 1]} : vector<16x128xf32> to vector<8x32xf32>
    %162 = arith.truncf %161 : vector<8x32xf32> to vector<8x32xbf16>
    %163 = vector.extract_strided_slice %37 {offsets = [8, 0], sizes = [8, 32], strides = [1, 1]} : vector<16x128xf32> to vector<8x32xf32>
    %164 = arith.truncf %163 : vector<8x32xf32> to vector<8x32xbf16>
    %cst_58 = arith.constant dense<0.000000e+00> : vector<8x8xf32>
    %165 = tpu.matmul %160, %162, %cst_58 {dimension_numbers = #tpu.dot_dimension_numbers<[1], [1], [0], [0], [0, 0, 1, 0], [], []>} : vector<8x32xbf16>, vector<8x32xbf16>, vector<8x8xf32> -> vector<8x8xf32>
    %cst_59 = arith.constant 0.176776692 : f32
    %166 = vector.broadcast %cst_59 : f32 to vector<8x8xf32>
    %167 = arith.mulf %165, %166 : vector<8x8xf32>
    %cst_60 = arith.constant -1.000000e+09 : f32
    %168 = vector.broadcast %cst_60 : f32 to vector<8x8xf32>
    %169 = arith.select %46, %167, %168 : vector<8x8xi1>, vector<8x8xf32>
    %cst_61 = arith.constant dense<0xFF800000> : vector<8xf32>
    %170 = vector.multi_reduction <maximumf>, %169, %cst_61 [1] : vector<8x8xf32> to vector<8xf32>
    %171 = vector.shape_cast %170 : vector<8xf32> to vector<8x1xf32>
    %172 = vector.broadcast %171 : vector<8x1xf32> to vector<8x8xf32>
    %173 = arith.subf %169, %172 : vector<8x8xf32>
    %174 = math.exp %173 : vector<8x8xf32>
    %cst_62 = arith.constant dense<0.000000e+00> : vector<8xf32>
    %175 = vector.multi_reduction <add>, %174, %cst_62 [1] : vector<8x8xf32> to vector<8xf32>
    %176 = vector.shape_cast %175 : vector<8xf32> to vector<8x1xf32>
    %177 = tpu.reciprocal %176 {approx = true} : vector<8x1xf32> -> vector<8x1xf32>
    %178 = vector.broadcast %177 : vector<8x1xf32> to vector<8x8xf32>
    %179 = arith.mulf %174, %178 : vector<8x8xf32>
    %180 = arith.truncf %179 : vector<8x8xf32> to vector<8x8xbf16>
    %cst_63 = arith.constant dense<0.000000e+00> : vector<8x32xf32>
    %181 = tpu.matmul %180, %164, %cst_63 {dimension_numbers = #tpu.dot_dimension_numbers<[1], [0], [0], [1], [0, 0, 1, 1], [], []>} : vector<8x8xbf16>, vector<8x32xbf16>, vector<8x32xf32> -> vector<8x32xf32>
    %182 = arith.truncf %181 : vector<8x32xf32> to vector<8x32xbf16>
    %183 = vector.extract_strided_slice %48 {offsets = [0, 0], sizes = [32, 128], strides = [1, 1]} : vector<128x128xbf16> to vector<32x128xbf16>
    %cst_64 = arith.constant dense<0.000000e+00> : vector<8x128xf32>
    %184 = tpu.matmul %182, %183, %cst_64 {dimension_numbers = #tpu.dot_dimension_numbers<[1], [0], [0], [1], [0, 0, 1, 1], [], []>} : vector<8x32xbf16>, vector<32x128xbf16>, vector<8x128xf32> -> vector<8x128xf32>
    %185 = arith.addf %158, %184 : vector<8x128xf32>
    %186 = vector.extract_strided_slice %35 {offsets = [8, 32], sizes = [8, 32], strides = [1, 1]} : vector<16x384xf32> to vector<8x32xf32>
    %187 = arith.truncf %186 : vector<8x32xf32> to vector<8x32xbf16>
    %188 = vector.extract_strided_slice %36 {offsets = [8, 32], sizes = [8, 32], strides = [1, 1]} : vector<16x128xf32> to vector<8x32xf32>
    %189 = arith.truncf %188 : vector<8x32xf32> to vector<8x32xbf16>
    %190 = vector.extract_strided_slice %37 {offsets = [8, 32], sizes = [8, 32], strides = [1, 1]} : vector<16x128xf32> to vector<8x32xf32>
    %191 = arith.truncf %190 : vector<8x32xf32> to vector<8x32xbf16>
    %cst_65 = arith.constant dense<0.000000e+00> : vector<8x8xf32>
    %192 = tpu.matmul %187, %189, %cst_65 {dimension_numbers = #tpu.dot_dimension_numbers<[1], [1], [0], [0], [0, 0, 1, 0], [], []>} : vector<8x32xbf16>, vector<8x32xbf16>, vector<8x8xf32> -> vector<8x8xf32>
    %cst_66 = arith.constant 0.176776692 : f32
    %193 = vector.broadcast %cst_66 : f32 to vector<8x8xf32>
    %194 = arith.mulf %192, %193 : vector<8x8xf32>
    %cst_67 = arith.constant -1.000000e+09 : f32
    %195 = vector.broadcast %cst_67 : f32 to vector<8x8xf32>
    %196 = arith.select %46, %194, %195 : vector<8x8xi1>, vector<8x8xf32>
    %cst_68 = arith.constant dense<0xFF800000> : vector<8xf32>
    %197 = vector.multi_reduction <maximumf>, %196, %cst_68 [1] : vector<8x8xf32> to vector<8xf32>
    %198 = vector.shape_cast %197 : vector<8xf32> to vector<8x1xf32>
    %199 = vector.broadcast %198 : vector<8x1xf32> to vector<8x8xf32>
    %200 = arith.subf %196, %199 : vector<8x8xf32>
    %201 = math.exp %200 : vector<8x8xf32>
    %cst_69 = arith.constant dense<0.000000e+00> : vector<8xf32>
    %202 = vector.multi_reduction <add>, %201, %cst_69 [1] : vector<8x8xf32> to vector<8xf32>
    %203 = vector.shape_cast %202 : vector<8xf32> to vector<8x1xf32>
    %204 = tpu.reciprocal %203 {approx = true} : vector<8x1xf32> -> vector<8x1xf32>
    %205 = vector.broadcast %204 : vector<8x1xf32> to vector<8x8xf32>
    %206 = arith.mulf %201, %205 : vector<8x8xf32>
    %207 = arith.truncf %206 : vector<8x8xf32> to vector<8x8xbf16>
    %cst_70 = arith.constant dense<0.000000e+00> : vector<8x32xf32>
    %208 = tpu.matmul %207, %191, %cst_70 {dimension_numbers = #tpu.dot_dimension_numbers<[1], [0], [0], [1], [0, 0, 1, 1], [], []>} : vector<8x8xbf16>, vector<8x32xbf16>, vector<8x32xf32> -> vector<8x32xf32>
    %209 = arith.truncf %208 : vector<8x32xf32> to vector<8x32xbf16>
    %210 = vector.extract_strided_slice %48 {offsets = [32, 0], sizes = [32, 128], strides = [1, 1]} : vector<128x128xbf16> to vector<32x128xbf16>
    %cst_71 = arith.constant dense<0.000000e+00> : vector<8x128xf32>
    %211 = tpu.matmul %209, %210, %cst_71 {dimension_numbers = #tpu.dot_dimension_numbers<[1], [0], [0], [1], [0, 0, 1, 1], [], []>} : vector<8x32xbf16>, vector<32x128xbf16>, vector<8x128xf32> -> vector<8x128xf32>
    %212 = arith.addf %185, %211 : vector<8x128xf32>
    %213 = vector.extract_strided_slice %35 {offsets = [8, 64], sizes = [8, 32], strides = [1, 1]} : vector<16x384xf32> to vector<8x32xf32>
    %214 = arith.truncf %213 : vector<8x32xf32> to vector<8x32xbf16>
    %215 = vector.extract_strided_slice %36 {offsets = [8, 64], sizes = [8, 32], strides = [1, 1]} : vector<16x128xf32> to vector<8x32xf32>
    %216 = arith.truncf %215 : vector<8x32xf32> to vector<8x32xbf16>
    %217 = vector.extract_strided_slice %37 {offsets = [8, 64], sizes = [8, 32], strides = [1, 1]} : vector<16x128xf32> to vector<8x32xf32>
    %218 = arith.truncf %217 : vector<8x32xf32> to vector<8x32xbf16>
    %cst_72 = arith.constant dense<0.000000e+00> : vector<8x8xf32>
    %219 = tpu.matmul %214, %216, %cst_72 {dimension_numbers = #tpu.dot_dimension_numbers<[1], [1], [0], [0], [0, 0, 1, 0], [], []>} : vector<8x32xbf16>, vector<8x32xbf16>, vector<8x8xf32> -> vector<8x8xf32>
    %cst_73 = arith.constant 0.176776692 : f32
    %220 = vector.broadcast %cst_73 : f32 to vector<8x8xf32>
    %221 = arith.mulf %219, %220 : vector<8x8xf32>
    %cst_74 = arith.constant -1.000000e+09 : f32
    %222 = vector.broadcast %cst_74 : f32 to vector<8x8xf32>
    %223 = arith.select %46, %221, %222 : vector<8x8xi1>, vector<8x8xf32>
    %cst_75 = arith.constant dense<0xFF800000> : vector<8xf32>
    %224 = vector.multi_reduction <maximumf>, %223, %cst_75 [1] : vector<8x8xf32> to vector<8xf32>
    %225 = vector.shape_cast %224 : vector<8xf32> to vector<8x1xf32>
    %226 = vector.broadcast %225 : vector<8x1xf32> to vector<8x8xf32>
    %227 = arith.subf %223, %226 : vector<8x8xf32>
    %228 = math.exp %227 : vector<8x8xf32>
    %cst_76 = arith.constant dense<0.000000e+00> : vector<8xf32>
    %229 = vector.multi_reduction <add>, %228, %cst_76 [1] : vector<8x8xf32> to vector<8xf32>
    %230 = vector.shape_cast %229 : vector<8xf32> to vector<8x1xf32>
    %231 = tpu.reciprocal %230 {approx = true} : vector<8x1xf32> -> vector<8x1xf32>
    %232 = vector.broadcast %231 : vector<8x1xf32> to vector<8x8xf32>
    %233 = arith.mulf %228, %232 : vector<8x8xf32>
    %234 = arith.truncf %233 : vector<8x8xf32> to vector<8x8xbf16>
    %cst_77 = arith.constant dense<0.000000e+00> : vector<8x32xf32>
    %235 = tpu.matmul %234, %218, %cst_77 {dimension_numbers = #tpu.dot_dimension_numbers<[1], [0], [0], [1], [0, 0, 1, 1], [], []>} : vector<8x8xbf16>, vector<8x32xbf16>, vector<8x32xf32> -> vector<8x32xf32>
    %236 = arith.truncf %235 : vector<8x32xf32> to vector<8x32xbf16>
    %237 = vector.extract_strided_slice %48 {offsets = [64, 0], sizes = [32, 128], strides = [1, 1]} : vector<128x128xbf16> to vector<32x128xbf16>
    %cst_78 = arith.constant dense<0.000000e+00> : vector<8x128xf32>
    %238 = tpu.matmul %236, %237, %cst_78 {dimension_numbers = #tpu.dot_dimension_numbers<[1], [0], [0], [1], [0, 0, 1, 1], [], []>} : vector<8x32xbf16>, vector<32x128xbf16>, vector<8x128xf32> -> vector<8x128xf32>
    %239 = arith.addf %212, %238 : vector<8x128xf32>
    %240 = vector.extract_strided_slice %35 {offsets = [8, 96], sizes = [8, 32], strides = [1, 1]} : vector<16x384xf32> to vector<8x32xf32>
    %241 = arith.truncf %240 : vector<8x32xf32> to vector<8x32xbf16>
    %242 = vector.extract_strided_slice %36 {offsets = [8, 96], sizes = [8, 32], strides = [1, 1]} : vector<16x128xf32> to vector<8x32xf32>
    %243 = arith.truncf %242 : vector<8x32xf32> to vector<8x32xbf16>
    %244 = vector.extract_strided_slice %37 {offsets = [8, 96], sizes = [8, 32], strides = [1, 1]} : vector<16x128xf32> to vector<8x32xf32>
    %245 = arith.truncf %244 : vector<8x32xf32> to vector<8x32xbf16>
    %cst_79 = arith.constant dense<0.000000e+00> : vector<8x8xf32>
    %246 = tpu.matmul %241, %243, %cst_79 {dimension_numbers = #tpu.dot_dimension_numbers<[1], [1], [0], [0], [0, 0, 1, 0], [], []>} : vector<8x32xbf16>, vector<8x32xbf16>, vector<8x8xf32> -> vector<8x8xf32>
    %cst_80 = arith.constant 0.176776692 : f32
    %247 = vector.broadcast %cst_80 : f32 to vector<8x8xf32>
    %248 = arith.mulf %246, %247 : vector<8x8xf32>
    %cst_81 = arith.constant -1.000000e+09 : f32
    %249 = vector.broadcast %cst_81 : f32 to vector<8x8xf32>
    %250 = arith.select %46, %248, %249 : vector<8x8xi1>, vector<8x8xf32>
    %cst_82 = arith.constant dense<0xFF800000> : vector<8xf32>
    %251 = vector.multi_reduction <maximumf>, %250, %cst_82 [1] : vector<8x8xf32> to vector<8xf32>
    %252 = vector.shape_cast %251 : vector<8xf32> to vector<8x1xf32>
    %253 = vector.broadcast %252 : vector<8x1xf32> to vector<8x8xf32>
    %254 = arith.subf %250, %253 : vector<8x8xf32>
    %255 = math.exp %254 : vector<8x8xf32>
    %cst_83 = arith.constant dense<0.000000e+00> : vector<8xf32>
    %256 = vector.multi_reduction <add>, %255, %cst_83 [1] : vector<8x8xf32> to vector<8xf32>
    %257 = vector.shape_cast %256 : vector<8xf32> to vector<8x1xf32>
    %258 = tpu.reciprocal %257 {approx = true} : vector<8x1xf32> -> vector<8x1xf32>
    %259 = vector.broadcast %258 : vector<8x1xf32> to vector<8x8xf32>
    %260 = arith.mulf %255, %259 : vector<8x8xf32>
    %261 = arith.truncf %260 : vector<8x8xf32> to vector<8x8xbf16>
    %cst_84 = arith.constant dense<0.000000e+00> : vector<8x32xf32>
    %262 = tpu.matmul %261, %245, %cst_84 {dimension_numbers = #tpu.dot_dimension_numbers<[1], [0], [0], [1], [0, 0, 1, 1], [], []>} : vector<8x8xbf16>, vector<8x32xbf16>, vector<8x32xf32> -> vector<8x32xf32>
    %263 = arith.truncf %262 : vector<8x32xf32> to vector<8x32xbf16>
    %264 = vector.extract_strided_slice %48 {offsets = [96, 0], sizes = [32, 128], strides = [1, 1]} : vector<128x128xbf16> to vector<32x128xbf16>
    %cst_85 = arith.constant dense<0.000000e+00> : vector<8x128xf32>
    %265 = tpu.matmul %263, %264, %cst_85 {dimension_numbers = #tpu.dot_dimension_numbers<[1], [0], [0], [1], [0, 0, 1, 1], [], []>} : vector<8x32xbf16>, vector<32x128xbf16>, vector<8x128xf32> -> vector<8x128xf32>
    %266 = arith.addf %239, %265 : vector<8x128xf32>
    %267 = tpu.concatenate %157, %266 in 0 : vector<8x128xf32>, vector<8x128xf32> -> vector<16x128xf32>
    %c0_86 = arith.constant 0 : index
    %c0_87 = arith.constant 0 : index
    %c0_88 = arith.constant 0 : index
    %268 = vector.load %arg7[%c0_86, %c0_87, %c0_88] : memref<1x1x128xf32, #tpu.memory_space<vmem>>, vector<1x1x128xf32>
    %269 = vector.shape_cast %268 : vector<1x1x128xf32> to vector<1x128xf32>
    %270 = vector.broadcast %269 : vector<1x128xf32> to vector<16x128xf32>
    %271 = arith.addf %267, %270 : vector<16x128xf32>
    %272 = arith.addf %3, %271 : vector<16x128xf32>
    %c0_89 = arith.constant 0 : index
    %c0_90 = arith.constant 0 : index
    %c0_91 = arith.constant 0 : index
    %273 = vector.load %arg8[%c0_89, %c0_90, %c0_91] : memref<1x1x128xf32, #tpu.memory_space<vmem>>, vector<1x1x128xf32>
    %274 = vector.shape_cast %273 : vector<1x1x128xf32> to vector<1x128xf32>
    %c0_92 = arith.constant 0 : index
    %c0_93 = arith.constant 0 : index
    %c0_94 = arith.constant 0 : index
    %275 = vector.load %arg9[%c0_92, %c0_93, %c0_94] : memref<1x1x128xf32, #tpu.memory_space<vmem>>, vector<1x1x128xf32>
    %276 = vector.shape_cast %275 : vector<1x1x128xf32> to vector<1x128xf32>
    %cst_95 = arith.constant dense<0.000000e+00> : vector<16xf32>
    %277 = vector.multi_reduction <add>, %272, %cst_95 [1] : vector<16x128xf32> to vector<16xf32>
    %278 = vector.shape_cast %277 : vector<16xf32> to vector<16x1xf32>
    %cst_96 = arith.constant 1.280000e+02 : f32
    %279 = vector.broadcast %cst_96 : f32 to vector<16x1xf32>
    %280 = arith.divf %278, %279 : vector<16x1xf32>
    %281 = vector.broadcast %280 : vector<16x1xf32> to vector<16x128xf32>
    %282 = arith.subf %272, %281 : vector<16x128xf32>
    %283 = arith.mulf %282, %282 : vector<16x128xf32>
    %cst_97 = arith.constant dense<0.000000e+00> : vector<16xf32>
    %284 = vector.multi_reduction <add>, %283, %cst_97 [1] : vector<16x128xf32> to vector<16xf32>
    %285 = vector.shape_cast %284 : vector<16xf32> to vector<16x1xf32>
    %cst_98 = arith.constant 1.280000e+02 : f32
    %286 = vector.broadcast %cst_98 : f32 to vector<16x1xf32>
    %287 = arith.divf %285, %286 : vector<16x1xf32>
    %cst_99 = arith.constant 9.99999974E-6 : f32
    %288 = vector.broadcast %cst_99 : f32 to vector<16x1xf32>
    %289 = arith.addf %287, %288 : vector<16x1xf32>
    %290 = math.rsqrt %289 : vector<16x1xf32>
    %291 = vector.broadcast %290 : vector<16x1xf32> to vector<16x128xf32>
    %292 = arith.mulf %282, %291 : vector<16x128xf32>
    %293 = vector.broadcast %274 : vector<1x128xf32> to vector<16x128xf32>
    %294 = arith.mulf %292, %293 : vector<16x128xf32>
    %295 = vector.broadcast %276 : vector<1x128xf32> to vector<16x128xf32>
    %296 = arith.addf %294, %295 : vector<16x128xf32>
    %297 = arith.truncf %296 : vector<16x128xf32> to vector<16x128xbf16>
    %c0_100 = arith.constant 0 : index
    %c0_101 = arith.constant 0 : index
    %c0_102 = arith.constant 0 : index
    %298 = vector.load %arg10[%c0_100, %c0_101, %c0_102] : memref<1x128x512xbf16, #tpu.memory_space<vmem>>, vector<1x128x512xbf16>
    %299 = vector.shape_cast %298 : vector<1x128x512xbf16> to vector<128x512xbf16>
    %cst_103 = arith.constant dense<0.000000e+00> : vector<16x512xf32>
    %300 = tpu.matmul %297, %299, %cst_103 {dimension_numbers = #tpu.dot_dimension_numbers<[1], [0], [0], [1], [0, 0, 1, 1], [], []>} : vector<16x128xbf16>, vector<128x512xbf16>, vector<16x512xf32> -> vector<16x512xf32>
    %c0_104 = arith.constant 0 : index
    %c0_105 = arith.constant 0 : index
    %c0_106 = arith.constant 0 : index
    %301 = vector.load %arg11[%c0_104, %c0_105, %c0_106] : memref<1x1x512xf32, #tpu.memory_space<vmem>>, vector<1x1x512xf32>
    %302 = vector.shape_cast %301 : vector<1x1x512xf32> to vector<1x512xf32>
    %303 = vector.broadcast %302 : vector<1x512xf32> to vector<16x512xf32>
    %304 = arith.addf %300, %303 : vector<16x512xf32>
    %cst_107 = arith.constant 5.000000e-01 : f32
    %305 = vector.broadcast %cst_107 : f32 to vector<16x512xf32>
    %306 = arith.mulf %305, %304 : vector<16x512xf32>
    %cst_108 = arith.constant 0.707106769 : f32
    %307 = vector.broadcast %cst_108 : f32 to vector<16x512xf32>
    %308 = arith.mulf %304, %307 : vector<16x512xf32>
    %309 = math.erf %308 : vector<16x512xf32>
    %cst_109 = arith.constant 1.000000e+00 : f32
    %310 = vector.broadcast %cst_109 : f32 to vector<16x512xf32>
    %311 = arith.addf %310, %309 : vector<16x512xf32>
    %312 = arith.mulf %306, %311 : vector<16x512xf32>
    %313 = arith.truncf %312 : vector<16x512xf32> to vector<16x512xbf16>
    %c0_110 = arith.constant 0 : index
    %c0_111 = arith.constant 0 : index
    %c0_112 = arith.constant 0 : index
    %314 = vector.load %arg12[%c0_110, %c0_111, %c0_112] : memref<1x512x128xbf16, #tpu.memory_space<vmem>>, vector<1x512x128xbf16>
    %315 = vector.shape_cast %314 : vector<1x512x128xbf16> to vector<512x128xbf16>
    %cst_113 = arith.constant dense<0.000000e+00> : vector<16x128xf32>
    %316 = tpu.matmul %313, %315, %cst_113 {dimension_numbers = #tpu.dot_dimension_numbers<[1], [0], [0], [1], [0, 0, 1, 1], [], []>} : vector<16x512xbf16>, vector<512x128xbf16>, vector<16x128xf32> -> vector<16x128xf32>
    %c0_114 = arith.constant 0 : index
    %c0_115 = arith.constant 0 : index
    %c0_116 = arith.constant 0 : index
    %317 = vector.load %arg13[%c0_114, %c0_115, %c0_116] : memref<1x1x128xf32, #tpu.memory_space<vmem>>, vector<1x1x128xf32>
    %318 = vector.shape_cast %317 : vector<1x1x128xf32> to vector<1x128xf32>
    %319 = vector.broadcast %318 : vector<1x128xf32> to vector<16x128xf32>
    %320 = arith.addf %316, %319 : vector<16x128xf32>
    %321 = arith.addf %272, %320 : vector<16x128xf32>
    %c0_117 = arith.constant 0 : index
    %c0_118 = arith.constant 0 : index
    %322 = vector.load %arg17[%c0_117, %c0_118] : memref<16x128xf32, #tpu.memory_space<vmem>>, vector<16x128xf32>
    tpu.vector_store %arg17[%c0_117, %c0_118], %321 {strides = array<i32>} : memref<16x128xf32, #tpu.memory_space<vmem>>, vector<16x128xf32>,
    %c0_119 = arith.constant 0 : index
    %c0_120 = arith.constant 0 : index
    %323 = vector.load %arg14[%c0_119, %c0_120] : memref<16x128xf32, #tpu.memory_space<vmem>>, vector<16x128xf32>
    tpu.vector_store %arg14[%c0_119, %c0_120], %321 {strides = array<i32>} : memref<16x128xf32, #tpu.memory_space<vmem>>, vector<16x128xf32>,
    return
  }
  func.func @transform_0(%arg0: i32) -> (i32, i32) {
    %c0_i32 = arith.constant 0 : i32
    %c0_i32_0 = arith.constant 0 : i32
    %c0_i32_1 = arith.constant 0 : i32
    return %c0_i32, %c0_i32_0 : i32, i32
  }
  func.func @transform_1(%arg0: i32) -> (i32, i32, i32) {
    %c0_i32 = arith.constant 0 : i32
    %c0_i32_0 = arith.constant 0 : i32
    %c0_i32_1 = arith.constant 0 : i32
    return %arg0, %c0_i32, %c0_i32_0 : i32, i32, i32
  }
  func.func @transform_2(%arg0: i32) -> (i32, i32, i32) {
    %c0_i32 = arith.constant 0 : i32
    %c0_i32_0 = arith.constant 0 : i32
    %c0_i32_1 = arith.constant 0 : i32
    return %arg0, %c0_i32, %c0_i32_0 : i32, i32, i32
  }
  func.func @transform_3(%arg0: i32) -> (i32, i32, i32) {
    %c0_i32 = arith.constant 0 : i32
    %c0_i32_0 = arith.constant 0 : i32
    %c0_i32_1 = arith.constant 0 : i32
    return %arg0, %c0_i32, %c0_i32_0 : i32, i32, i32
  }
  func.func @transform_4(%arg0: i32) -> (i32, i32, i32) {
    %c0_i32 = arith.constant 0 : i32
    %c0_i32_0 = arith.constant 0 : i32
    %c0_i32_1 = arith.constant 0 : i32
    return %arg0, %c0_i32, %c0_i32_0 : i32, i32, i32
  }
  func.func @transform_5(%arg0: i32) -> (i32, i32, i32) {
    %c0_i32 = arith.constant 0 : i32
    %c0_i32_0 = arith.constant 0 : i32
    %c0_i32_1 = arith.constant 0 : i32
    return %arg0, %c0_i32, %c0_i32_0 : i32, i32, i32
  }
  func.func @transform_6(%arg0: i32) -> (i32, i32, i32) {
    %c0_i32 = arith.constant 0 : i32
    %c0_i32_0 = arith.constant 0 : i32
    %c0_i32_1 = arith.constant 0 : i32
    return %arg0, %c0_i32, %c0_i32_0 : i32, i32, i32
  }
  func.func @transform_7(%arg0: i32) -> (i32, i32, i32) {
    %c0_i32 = arith.constant 0 : i32
    %c0_i32_0 = arith.constant 0 : i32
    %c0_i32_1 = arith.constant 0 : i32
    return %arg0, %c0_i32, %c0_i32_0 : i32, i32, i32
  }
  func.func @transform_8(%arg0: i32) -> (i32, i32, i32) {
    %c0_i32 = arith.constant 0 : i32
    %c0_i32_0 = arith.constant 0 : i32
    %c0_i32_1 = arith.constant 0 : i32
    return %arg0, %c0_i32, %c0_i32_0 : i32, i32, i32
  }
  func.func @transform_9(%arg0: i32) -> (i32, i32, i32) {
    %c0_i32 = arith.constant 0 : i32
    %c0_i32_0 = arith.constant 0 : i32
    %c0_i32_1 = arith.constant 0 : i32
    return %arg0, %c0_i32, %c0_i32_0 : i32, i32, i32
  }
  func.func @transform_10(%arg0: i32) -> (i32, i32, i32) {
    %c0_i32 = arith.constant 0 : i32
    %c0_i32_0 = arith.constant 0 : i32
    %c0_i32_1 = arith.constant 0 : i32
    return %arg0, %c0_i32, %c0_i32_0 : i32, i32, i32
  }
  func.func @transform_11(%arg0: i32) -> (i32, i32, i32) {
    %c0_i32 = arith.constant 0 : i32
    %c0_i32_0 = arith.constant 0 : i32
    %c0_i32_1 = arith.constant 0 : i32
    return %arg0, %c0_i32, %c0_i32_0 : i32, i32, i32
  }
  func.func @transform_12(%arg0: i32) -> (i32, i32, i32) {
    %c0_i32 = arith.constant 0 : i32
    %c0_i32_0 = arith.constant 0 : i32
    %c0_i32_1 = arith.constant 0 : i32
    return %arg0, %c0_i32, %c0_i32_0 : i32, i32, i32
  }
  func.func @transform_13(%arg0: i32) -> (i32, i32) {
    %c0_i32 = arith.constant 0 : i32
    %c0_i32_0 = arith.constant 0 : i32
    %c0_i32_1 = arith.constant 0 : i32
    return %c0_i32, %c0_i32_0 : i32, i32
  }
  func.func @transform_14(%arg0: i32) -> (i32, i32, i32) {
    %c0_i32 = arith.constant 0 : i32
    %c0_i32_0 = arith.constant 0 : i32
    %c0_i32_1 = arith.constant 0 : i32
    return %arg0, %c0_i32, %c0_i32_0 : i32, i32, i32
  }
  func.func @transform_15(%arg0: i32) -> (i32, i32, i32) {
    %c0_i32 = arith.constant 0 : i32
    %c0_i32_0 = arith.constant 0 : i32
    %c0_i32_1 = arith.constant 0 : i32
    return %arg0, %c0_i32, %c0_i32_0 : i32, i32, i32
  }
}

</mosaic_0001>

<llo_original>
// kernel: prefill_forward.3
$region0: #{prefill_forward.3}
  #allocation0 [shape = 'u32[]', space=smem, size = 0x4, offset = 0x4, fixed_abs, tag = 'smem constant byte address 0x4 - core index']
  #allocation1 [shape = 'u32[144,128]{1,0:T(1,128)}', space=vmem, size = 0x12000, scoped, tag = 'internal scratch']
  %s0 = inlined_call_operand.vmem [shape: f32[2,128], index: 0, kind: input, shape index: {}]
  %s1 = inlined_call_operand.vmem [shape: f32[1,128], index: 1, kind: input, shape index: {}]
  %s2 = inlined_call_operand.vmem [shape: f32[1,128], index: 2, kind: input, shape index: {}]
  %s3 = inlined_call_operand.vmem [shape: bf16[128,256], index: 3, kind: input, shape index: {}]
  %s4 = inlined_call_operand.vmem [shape: s32[2,1], index: 4, kind: output, shape index: {}]
  %s5 = sld [smem:[#allocation0]]
  $region26: #{prefill_forward.3} parent=0
    _
  %s7 = ssub.s32 1, %s5
  %s8 = scalar_select 0, %s7, %s5
  // Predicated region
  $region2: #{prefill_forward.3} parent=0 // pred_check
    _
  $region3: #{prefill_forward.3} parent=0 // pred_check_branch
    %10 = sbr.rel (0) target = $region5
  $region4: #{prefill_forward.3} parent=0 // pred_region
    _
  $region5: #{prefill_forward.3} parent=0 // pred_fallthru
    _
  // Predicated region
  $region6: #{prefill_forward.3} parent=0 // pred_check
    _
  $region7: #{prefill_forward.3} parent=0 // pred_check_branch
    %12 = sbr.rel (0) target = $region9
  $region8: #{prefill_forward.3} parent=0 // pred_region
    _
  $region9: #{prefill_forward.3} parent=0 // pred_fallthru
    _
  // Predicated region
  $region10: #{prefill_forward.3} parent=0 // pred_check
    _
  $region11: #{prefill_forward.3} parent=0 // pred_check_branch
    %14 = sbr.rel (0) target = $region13
  $region12: #{prefill_forward.3} parent=0 // pred_region
    _
  $region13: #{prefill_forward.3} parent=0 // pred_fallthru
    _
  // Predicated region
  $region14: #{prefill_forward.3} parent=0 // pred_check
    _
  $region15: #{prefill_forward.3} parent=0 // pred_check_branch
    %16 = sbr.rel (0) target = $region17
  $region16: #{prefill_forward.3} parent=0 // pred_region
    _
  $region17: #{prefill_forward.3} parent=0 // pred_fallthru
    _
  %v18 = vld [vmem:[%s0] sm:$0x3]
  %v19 = vld [vmem:[%s1] sm:$0x1]
  %v20 = vld [vmem:[%s2] sm:$0x1]
  %vm21 = vcmask 1041408
  %v22 = vsel %vm21, %v18, 0.0
  %23 = vadd.xlane.f32.xlu0 %v22
  %v24 = vpop.xlane.xlu0 %23
  %v25 = vrcp.pop 128.0
  %v26 = vmul.f32 %v24, %v25
  %v27 = vsub.f32 %v18, %v26
  %v28 = vmul.f32 %v27, %v27
  %v29 = vsel %vm21, %v28, 0.0
  %30 = vadd.xlane.f32.xlu0 %v29
  %v31 = vpop.xlane.xlu0 %30
  %v32 = vmul.f32 %v31, %v25
  %v33 = vadd.f32 %v32, 1e-05
  %v34 = vrsqrt.pop %v33
  %v35 = vmul.f32 %v27, %v34
  %v37 = vlaneseq
  %v38 = vshrl.u32 %v37, 7
  %v39 = vsub.s32 0, %v38
  %v40 = vrot.slane %v19, %v39
  %v42 = vmul.f32 %v35, %v40
  %v44 = vlaneseq
  %v45 = vshrl.u32 %v44, 7
  %v46 = vsub.s32 0, %v45
  %v47 = vrot.slane %v20, %v46
  %v49 = vadd.f32 %v42, %v47
  %v50 = vpack.c.bf16 %v49, %v49
  %v51 = vld [vmem:[%s3] sm:$0xff]
  %v52 = vld [vmem:[%s3 + $0x8] sm:$0xff]
  %v53 = vld [vmem:[%s3 + $0x10] sm:$0xff]
  %v54 = vld [vmem:[%s3 + $0x18] sm:$0xff]
  %v55 = vld [vmem:[%s3 + $0x20] sm:$0xff]
  %v56 = vld [vmem:[%s3 + $0x28] sm:$0xff]
  %v57 = vld [vmem:[%s3 + $0x30] sm:$0xff]
  %v58 = vld [vmem:[%s3 + $0x38] sm:$0xff]
  %v59 = vld [vmem:[%s3 + $0x40] sm:$0xff]
  %v60 = vld [vmem:[%s3 + $0x48] sm:$0xff]
  %v61 = vld [vmem:[%s3 + $0x50] sm:$0xff]
  %v62 = vld [vmem:[%s3 + $0x58] sm:$0xff]
  %v63 = vld [vmem:[%s3 + $0x60] sm:$0xff]
  %v64 = vld [vmem:[%s3 + $0x68] sm:$0xff]
  %v65 = vld [vmem:[%s3 + $0x70] sm:$0xff]
  %v66 = vld [vmem:[%s3 + $0x78] sm:$0xff]
  %v83 = vunpack.c.l.b16 %v51
  %v84 = vunpack.c.h.b16 %v51
  %v85 = vunpack.c.l.b16 %v52
  %v86 = vunpack.c.h.b16 %v52
  %v87 = vunpack.c.l.b16 %v53
  %v88 = vunpack.c.h.b16 %v53
  %v89 = vunpack.c.l.b16 %v54
  %v90 = vunpack.c.h.b16 %v54
  %v91 = vunpack.c.l.b16 %v55
  %v92 = vunpack.c.h.b16 %v55
  %v93 = vunpack.c.l.b16 %v56
  %v94 = vunpack.c.h.b16 %v56
  %v95 = vunpack.c.l.b16 %v57
  %v96 = vunpack.c.h.b16 %v57
  %v97 = vunpack.c.l.b16 %v58
  %v98 = vunpack.c.h.b16 %v58
  %v99 = vunpack.c.l.b16 %v59
  %v100 = vunpack.c.h.b16 %v59
  %v101 = vunpack.c.l.b16 %v60
  %v102 = vunpack.c.h.b16 %v60
  %v103 = vunpack.c.l.b16 %v61
  %v104 = vunpack.c.h.b16 %v61
  %v105 = vunpack.c.l.b16 %v62
  %v106 = vunpack.c.h.b16 %v62
  %v107 = vunpack.c.l.b16 %v63
  %v108 = vunpack.c.h.b16 %v63
  %v109 = vunpack.c.l.b16 %v64
  %v110 = vunpack.c.h.b16 %v64
  %v111 = vunpack.c.l.b16 %v65
  %v112 = vunpack.c.h.b16 %v65
  %v113 = vunpack.c.l.b16 %v66
  %v114 = vunpack.c.h.b16 %v66
  %v115 = vpack.c.b16 %v85, %v83
  %v116 = vpack.c.b16 %v86, %v84
  %v117 = vpack.c.b16 %v89, %v87
  %v118 = vpack.c.b16 %v90, %v88
  %v119 = vpack.c.b16 %v93, %v91
  %v120 = vpack.c.b16 %v94, %v92
  %v121 = vpack.c.b16 %v97, %v95
  %v122 = vpack.c.b16 %v98, %v96
  %v123 = vpack.c.b16 %v101, %v99
  %v124 = vpack.c.b16 %v102, %v100
  %v125 = vpack.c.b16 %v105, %v103
  %v126 = vpack.c.b16 %v106, %v104
  %v127 = vpack.c.b16 %v109, %v107
  %v128 = vpack.c.b16 %v110, %v108
  %v129 = vpack.c.b16 %v113, %v111
  %v130 = vpack.c.b16 %v114, %v112
  %147 = vmatprep.subr.bf16.mxu0 %v116
  %148 = vmatpush1.bf16.msra.mxu0 %v115
  %149 = vmatprep.subr.bf16.mxu0 %v118
  %150 = vmatpush1.bf16.msra.mxu0 %v117
  %151 = vmatprep.subr.bf16.mxu0 %v120
  %152 = vmatpush1.bf16.msra.mxu0 %v119
  %153 = vmatprep.subr.bf16.mxu0 %v122
  %154 = vmatpush1.bf16.msra.mxu0 %v121
  %155 = vmatprep.subr.bf16.mxu0 %v124
  %156 = vmatpush1.bf16.msra.mxu0 %v123
  %157 = vmatprep.subr.bf16.mxu0 %v126
  %158 = vmatpush1.bf16.msra.mxu0 %v125
  %159 = vmatprep.subr.bf16.mxu0 %v128
  %160 = vmatpush1.bf16.msra.mxu0 %v127
  %161 = vmatprep.subr.bf16.mxu0 %v130
  %162 = vmatpush1.bf16.msra.mxu0 %v129
  %163 = vmatprep.subr.bf16.mxu0 0
  %164 = vmatpush1.bf16.msra.mxu0 0
  %165 = vmatprep.subr.bf16.mxu0 0
  %166 = vmatpush1.bf16.msra.mxu0 0
  %167 = vmatprep.subr.bf16.mxu0 0
  %168 = vmatpush1.bf16.msra.mxu0 0
  %169 = vmatprep.subr.bf16.mxu0 0
  %170 = vmatpush1.bf16.msra.mxu0 0
  %171 = vmatprep.subr.bf16.mxu0 0
  %172 = vmatpush1.bf16.msra.mxu0 0
  %173 = vmatprep.subr.bf16.mxu0 0
  %174 = vmatpush1.bf16.msra.mxu0 0
  %175 = vmatprep.subr.bf16.mxu0 0
  %176 = vmatpush1.bf16.msra.mxu0 0
  %177 = vmatprep.subr.bf16.mxu0 0
  %178 = vmatpush1.bf16.msra.mxu0 0
  %179 = vmatprep.mubr.bf16.mxu0 0
  %180 = vmatmul.mubr.bf16.gmra.mrb[0].mxu0 %v50
  %v181 = vpop.f32.mrb[0].mxu0
  %v182 = vadd.f32 0.0, %v181
  %v183 = vpop.f32.mrb[0].mxu0
  %v184 = vadd.f32 0.0, %v183
  %v185 = vpop.f32.mrb[0].mxu0
  %v186 = vpop.f32.mrb[0].mxu0
  %187 = vdwg.mxu0
  %v188 = vsel %vm21, %v182, -inf
  %v189 = vsel %vm21, %v184, -inf
  %v190 = vmax.f32 %v188, %v189
  %191 = vmax.xlane.f32.xlu0 %v190
  %v192 = vpop.xlane.xlu0 %191
  %v193 = vlaneseq
  %v194 = vand.u32 %v193, 127
  %v195 = vadd.s32 %v194, 128
  %v196 = vcvt.s32.f32 %v194
  %v197 = vcvt.s32.f32 %v195
  %vm198 = vcmp.ge.f32.partialorder %v182, %v192
  %vm199 = vcmp.ge.f32.partialorder %v184, %v192
  %v200 = vsel %vm198, %v196, 256.0
  %v201 = vsel %vm199, %v197, 256.0
  %v202 = vsel %vm21, %v200, inf
  %v203 = vsel %vm21, %v201, inf
  %v204 = vmin.f32 %v202, %v203
  %205 = vmin.xlane.f32.xlu0 %v204
  %v206 = vpop.xlane.xlu0 %205
  %v207 = vcvt.f32.s32.to.zero.pseudo %v206
  %vm208 = vcmask 1024
  %209 = vst.msk [vmem:[%s4] sm:$0x3] %vm208, %v207
  // Predicated region
  $region18: #{prefill_forward.3} parent=0 // pred_check
    _
  $region19: #{prefill_forward.3} parent=0 // pred_check_branch
    %211 = sbr.rel (0) target = $region21
  $region20: #{prefill_forward.3} parent=0 // pred_region
    _
  $region21: #{prefill_forward.3} parent=0 // pred_fallthru
    _
  // Predicated region
  $region22: #{prefill_forward.3} parent=0 // pred_check
    _
  $region23: #{prefill_forward.3} parent=0 // pred_check_branch
    %213 = sbr.rel (0) target = $region25
  $region24: #{prefill_forward.3} parent=0 // pred_region
    _
  $region25: #{prefill_forward.3} parent=0 // pred_fallthru
    _

// kernel: prefill_forward.2
$region0: #{prefill_forward.2}
  #allocation0 [shape = 'u32[]', space=smem, size = 0x4, offset = 0x4, fixed_abs, tag = 'smem constant byte address 0x4 - core index']
  #allocation1 [shape = 'u32[144,128]{1,0:T(1,128)}', space=vmem, size = 0x12000, scoped, tag = 'internal scratch']
  #allocation2 [shape = 'f32[16,128]{1,0:T(8,128)}', space=vmem, size = 0x2000, scoped, tag = 'scratch operand']
  %s0 = inlined_call_operand.vmem [shape: f32[16,128], index: 0, kind: input, shape index: {}]
  %s1 = inlined_call_operand.vmem [shape: f32[2,1,128], index: 1, kind: input, shape index: {}]
  %s2 = inlined_call_operand.vmem [shape: f32[2,1,128], index: 2, kind: input, shape index: {}]
  %s3 = inlined_call_operand.hbm [shape: bf16[2,128,384], index: 3, kind: input, shape index: {}]
  %s4 = inlined_call_operand.vmem [shape: f32[2,1,384], index: 4, kind: input, shape index: {}]
  %s5 = inlined_call_operand.vmem [shape: bf16[2,128,128], index: 5, kind: input, shape index: {}]
  %s6 = inlined_call_operand.vmem [shape: f32[2,1,128], index: 6, kind: input, shape index: {}]
  %s7 = inlined_call_operand.vmem [shape: f32[2,1,128], index: 7, kind: input, shape index: {}]
  %s8 = inlined_call_operand.vmem [shape: f32[2,1,128], index: 8, kind: input, shape index: {}]
  %s9 = inlined_call_operand.hbm [shape: bf16[2,128,512], index: 9, kind: input, shape index: {}]
  %s10 = inlined_call_operand.vmem [shape: f32[2,1,512], index: 10, kind: input, shape index: {}]
  %s11 = inlined_call_operand.hbm [shape: bf16[2,512,128], index: 11, kind: input, shape index: {}]
  %s12 = inlined_call_operand.vmem [shape: f32[2,1,128], index: 12, kind: input, shape index: {}]
  %s13 = inlined_call_operand.vmem [shape: f32[16,128], index: 13, kind: output, shape index: {0}]
  %s14 = inlined_call_operand.vmem [shape: f32[2,16,128], index: 14, kind: output, shape index: {1}]
  %s15 = inlined_call_operand.vmem [shape: f32[2,16,128], index: 15, kind: output, shape index: {2}]
  %16 = xla_tuple %s13, %s14, %s15
  %s17 = sld [smem:[#allocation0]]
  $region117: #{prefill_forward.2} parent=0
    _
  %s19 = ssub.s32 1, %s17
  %s20 = scalar_select 0, %s19, %s17
  $region1: #{prefill_forward.2} parent=0
    #allocation3 [shape = 'u8[196608]{0}', space=vmem, size = 0x30000, scoped, tag = 'input window, operand 3']
    #allocation4 [shape = 's32[2]{0}', space=sflag, size = 0x8, scoped, tag = 'scoped memory for prefill_forward.2']
    #allocation5 [shape = 'u8[262144]{0}', space=vmem, size = 0x40000, scoped, tag = 'input window, operand 9']
    #allocation6 [shape = 's32[2]{0}', space=sflag, size = 0x8, scoped, tag = 'scoped memory for prefill_forward.2']
    #allocation7 [shape = 'u8[262144]{0}', space=vmem, size = 0x40000, scoped, tag = 'input window, operand 11']
    %21 = vsyncpa [#allocation4], 0
    %s22 = scalar_lea.sflag [#allocation4], 1
    %23 = vsyncpa %s22, 0
    %24 = vsyncpa [#allocation6], 0
    %s25 = scalar_lea.sflag [#allocation6], 1
    %26 = vsyncpa %s25, 0
    loop: start=0, step=1, limit=4
    $region2: #{prefill_forward.2} parent=1 // loop_pre_header
      _
    $region3: #{prefill_forward.2} parent=1 // loop_header
      %s28 = sphi 0, %s32
      %p29 = scmp.ge.s32.totalorder %s28, 4
      %s36 = sphi 0, %s36
      %s38 = sphi 0, %s36
      %s39 = sphi 0, %s38
      %s53 = sphi 0, %s39
      %s59 = sphi 0, %s61
      %s62 = sphi 0, %s59
      %s63 = sphi 0, %s62
      %s79 = sphi 0, %s63
      %s85 = sphi 0, %s87
      %s88 = sphi 0, %s85
      %s89 = sphi 0, %s88
      %s105 = sphi 0, %s89
      %s111 = sphi 0, %s113
      %s114 = sphi 0, %s111
      %s115 = sphi 0, %s114
      %s131 = sphi 0, %s115
      %s137 = sphi 0, %s139
      %s140 = sphi 0, %s137
      %s141 = sphi 0, %s140
      %s157 = sphi 0, %s141
      %s163 = sphi 0, %s165
      %s166 = sphi 0, %s163
      %s167 = sphi 0, %s166
      %s183 = sphi 0, %s167
      %s189 = sphi 0, %s191
      %s192 = sphi 0, %s189
      %s193 = sphi 0, %s192
      %s209 = sphi 0, %s193
      %s215 = sphi 0, %s217
      %s218 = sphi 0, %s215
      %s219 = sphi 0, %s218
      %s235 = sphi 0, %s219
      %s241 = sphi 0, %s243
      %s244 = sphi 0, %s241
      %s245 = sphi 0, %s244
      %s261 = sphi 0, %s245
      %s267 = sphi 0, %s269
      %s270 = sphi 0, %s267
      %s271 = sphi 0, %s270
      %s287 = sphi 0, %s271
      %s293 = sphi 0, %s295
      %s296 = sphi 0, %s293
      %s297 = sphi 0, %s296
      %s313 = sphi 0, %s297
      %s319 = sphi 0, %s321
      %s322 = sphi 0, %s319
      %s323 = sphi 0, %s322
      %s339 = sphi 0, %s323
      %s345 = sphi 0, %s347
      %s348 = sphi 0, %s345
      %s349 = sphi 0, %s348
      %s365 = sphi 0, %s349
      %s369 = sphi 0, %s369
      %s371 = sphi 0, %s369
      %s372 = sphi 0, %s371
      %s386 = sphi 0, %s372
      %s392 = sphi 0, %s394
      %s395 = sphi 0, %s392
      %s396 = sphi 0, %s395
      %s412 = sphi 0, %s396
      %s418 = sphi 0, %s420
      %s421 = sphi 0, %s418
      %s422 = sphi 0, %s421
      %s438 = sphi 0, %s422
    $region4: #{prefill_forward.2} parent=1 // loop_header_branch
      %31 = sbr.rel (%p29) target = $region8
    $region5: #{prefill_forward.2} parent=1 // loop_body
      %s33 = ssub.s32 %s28, 1
      %s34 = ssub.s32 %s28, 2
      %s35 = sadd.s32 %s28, 1
      %s37 = sadd.s32 %s36, 1
      %p40 = scmp.eq.s32.totalorder %s28, 1
      %p41 = scmp.ne.s32.totalorder %s36, %s38
      %p42 = scmp.eq.s32.totalorder %s28, 0
      %p43 = por %p41, %p42
      %p44 = scmp.ne.s32.totalorder %s36, %s38
      %p45 = scmp.eq.s32.totalorder %s33, 1
      %p46 = por %p44, %p45
      %p47 = scmp.ne.s32.totalorder %s38, %s39
      %p48 = scmp.eq.s32.totalorder %s33, 0
      %p49 = por %p47, %p48
      %p50 = scmp.ne.s32.totalorder %s38, %s39
      %p51 = scmp.eq.s32.totalorder %s34, 1
      %p52 = por %p50, %p51
      %p54 = scmp.ne.s32.totalorder %s39, %s53
      %p55 = scmp.eq.s32.totalorder %s34, 0
      %p56 = por %p54, %p55
      %s57 = ssub.s32 %s28, %s35
      %p58 = scmp.eq.s32.totalorder %s57, 0
      %s60 = sadd.s32 %s59, 1
      %s61 = scalar_select %p58, %s59, %s60
      %p64 = pneg %p58
      %p65 = scmp.eq.s32.totalorder %s28, 1
      %p66 = por %p64, %p65
      %p67 = scmp.ne.s32.totalorder %s59, %s62
      %p68 = scmp.eq.s32.totalorder %s28, 0
      %p69 = por %p67, %p68
      %p70 = scmp.ne.s32.totalorder %s59, %s62
      %p71 = scmp.eq.s32.totalorder %s33, 1
      %p72 = por %p70, %p71
      %p73 = scmp.ne.s32.totalorder %s62, %s63
      %p74 = scmp.eq.s32.totalorder %s33, 0
      %p75 = por %p73, %p74
      %p76 = scmp.ne.s32.totalorder %s62, %s63
      %p77 = scmp.eq.s32.totalorder %s34, 1
      %p78 = por %p76, %p77
      %p80 = scmp.ne.s32.totalorder %s63, %s79
      %p81 = scmp.eq.s32.totalorder %s34, 0
      %p82 = por %p80, %p81
      %s83 = ssub.s32 %s28, %s35
      %p84 = scmp.eq.s32.totalorder %s83, 0
      %s86 = sadd.s32 %s85, 1
      %s87 = scalar_select %p84, %s85, %s86
      %p90 = pneg %p84
      %p91 = scmp.eq.s32.totalorder %s28, 1
      %p92 = por %p90, %p91
      %p93 = scmp.ne.s32.totalorder %s85, %s88
      %p94 = scmp.eq.s32.totalorder %s28, 0
      %p95 = por %p93, %p94
      %p96 = scmp.ne.s32.totalorder %s85, %s88
      %p97 = scmp.eq.s32.totalorder %s33, 1
      %p98 = por %p96, %p97
      %p99 = scmp.ne.s32.totalorder %s88, %s89
      %p100 = scmp.eq.s32.totalorder %s33, 0
      %p101 = por %p99, %p100
      %p102 = scmp.ne.s32.totalorder %s88, %s89
      %p103 = scmp.eq.s32.totalorder %s34, 1
      %p104 = por %p102, %p103
      %p106 = scmp.ne.s32.totalorder %s89, %s105
      %p107 = scmp.eq.s32.totalorder %s34, 0
      %p108 = por %p106, %p107
      %s109 = ssub.s32 %s28, %s35
      %p110 = scmp.eq.s32.totalorder %s109, 0
      %s112 = sadd.s32 %s111, 1
      %s113 = scalar_select %p110, %s111, %s112
      %p116 = pneg %p110
      %p117 = scmp.eq.s32.totalorder %s28, 1
      %p118 = por %p116, %p117
      %p119 = scmp.ne.s32.totalorder %s111, %s114
      %p120 = scmp.eq.s32.totalorder %s28, 0
      %p121 = por %p119, %p120
      %p122 = scmp.ne.s32.totalorder %s111, %s114
      %p123 = scmp.eq.s32.totalorder %s33, 1
      %p124 = por %p122, %p123
      %p125 = scmp.ne.s32.totalorder %s114, %s115
      %p126 = scmp.eq.s32.totalorder %s33, 0
      %p127 = por %p125, %p126
      %p128 = scmp.ne.s32.totalorder %s114, %s115
      %p129 = scmp.eq.s32.totalorder %s34, 1
      %p130 = por %p128, %p129
      %p132 = scmp.ne.s32.totalorder %s115, %s131
      %p133 = scmp.eq.s32.totalorder %s34, 0
      %p134 = por %p132, %p133
      %s135 = ssub.s32 %s28, %s35
      %p136 = scmp.eq.s32.totalorder %s135, 0
      %s138 = sadd.s32 %s137, 1
      %s139 = scalar_select %p136, %s137, %s138
      %p142 = pneg %p136
      %p143 = scmp.eq.s32.totalorder %s28, 1
      %p144 = por %p142, %p143
      %p145 = scmp.ne.s32.totalorder %s137, %s140
      %p146 = scmp.eq.s32.totalorder %s28, 0
      %p147 = por %p145, %p146
      %p148 = scmp.ne.s32.totalorder %s137, %s140
      %p149 = scmp.eq.s32.totalorder %s33, 1
      %p150 = por %p148, %p149
      %p151 = scmp.ne.s32.totalorder %s140, %s141
      %p152 = scmp.eq.s32.totalorder %s33, 0
      %p153 = por %p151, %p152
      %p154 = scmp.ne.s32.totalorder %s140, %s141
      %p155 = scmp.eq.s32.totalorder %s34, 1
      %p156 = por %p154, %p155
      %p158 = scmp.ne.s32.totalorder %s141, %s157
      %p159 = scmp.eq.s32.totalorder %s34, 0
      %p160 = por %p158, %p159
      %s161 = ssub.s32 %s28, %s35
      %p162 = scmp.eq.s32.totalorder %s161, 0
      %s164 = sadd.s32 %s163, 1
      %s165 = scalar_select %p162, %s163, %s164
      %p168 = pneg %p162
      %p169 = scmp.eq.s32.totalorder %s28, 1
      %p170 = por %p168, %p169
      %p171 = scmp.ne.s32.totalorder %s163, %s166
      %p172 = scmp.eq.s32.totalorder %s28, 0
      %p173 = por %p171, %p172
      %p174 = scmp.ne.s32.totalorder %s163, %s166
      %p175 = scmp.eq.s32.totalorder %s33, 1
      %p176 = por %p174, %p175
      %p177 = scmp.ne.s32.totalorder %s166, %s167
      %p178 = scmp.eq.s32.totalorder %s33, 0
      %p179 = por %p177, %p178
      %p180 = scmp.ne.s32.totalorder %s166, %s167
      %p181 = scmp.eq.s32.totalorder %s34, 1
      %p182 = por %p180, %p181
      %p184 = scmp.ne.s32.totalorder %s167, %s183
      %p185 = scmp.eq.s32.totalorder %s34, 0
      %p186 = por %p184, %p185
      %s187 = ssub.s32 %s28, %s35
      %p188 = scmp.eq.s32.totalorder %s187, 0
      %s190 = sadd.s32 %s189, 1
      %s191 = scalar_select %p188, %s189, %s190
      %p194 = pneg %p188
      %p195 = scmp.eq.s32.totalorder %s28, 1
      %p196 = por %p194, %p195
      %p197 = scmp.ne.s32.totalorder %s189, %s192
      %p198 = scmp.eq.s32.totalorder %s28, 0
      %p199 = por %p197, %p198
      %p200 = scmp.ne.s32.totalorder %s189, %s192
      %p201 = scmp.eq.s32.totalorder %s33, 1
      %p202 = por %p200, %p201
      %p203 = scmp.ne.s32.totalorder %s192, %s193
      %p204 = scmp.eq.s32.totalorder %s33, 0
      %p205 = por %p203, %p204
      %p206 = scmp.ne.s32.totalorder %s192, %s193
      %p207 = scmp.eq.s32.totalorder %s34, 1
      %p208 = por %p206, %p207
      %p210 = scmp.ne.s32.totalorder %s193, %s209
      %p211 = scmp.eq.s32.totalorder %s34, 0
      %p212 = por %p210, %p211
      %s213 = ssub.s32 %s28, %s35
      %p214 = scmp.eq.s32.totalorder %s213, 0
      %s216 = sadd.s32 %s215, 1
      %s217 = scalar_select %p214, %s215, %s216
      %p220 = pneg %p214
      %p221 = scmp.eq.s32.totalorder %s28, 1
      %p222 = por %p220, %p221
      %p223 = scmp.ne.s32.totalorder %s215, %s218
      %p224 = scmp.eq.s32.totalorder %s28, 0
      %p225 = por %p223, %p224
      %p226 = scmp.ne.s32.totalorder %s215, %s218
      %p227 = scmp.eq.s32.totalorder %s33, 1
      %p228 = por %p226, %p227
      %p229 = scmp.ne.s32.totalorder %s218, %s219
      %p230 = scmp.eq.s32.totalorder %s33, 0
      %p231 = por %p229, %p230
      %p232 = scmp.ne.s32.totalorder %s218, %s219
      %p233 = scmp.eq.s32.totalorder %s34, 1
      %p234 = por %p232, %p233
      %p236 = scmp.ne.s32.totalorder %s219, %s235
      %p237 = scmp.eq.s32.totalorder %s34, 0
      %p238 = por %p236, %p237
      %s239 = ssub.s32 %s28, %s35
      %p240 = scmp.eq.s32.totalorder %s239, 0
      %s242 = sadd.s32 %s241, 1
      %s243 = scalar_select %p240, %s241, %s242
      %p246 = pneg %p240
      %p247 = scmp.eq.s32.totalorder %s28, 1
      %p248 = por %p246, %p247
      %p249 = scmp.ne.s32.totalorder %s241, %s244
      %p250 = scmp.eq.s32.totalorder %s28, 0
      %p251 = por %p249, %p250
      %p252 = scmp.ne.s32.totalorder %s241, %s244
      %p253 = scmp.eq.s32.totalorder %s33, 1
      %p254 = por %p252, %p253
      %p255 = scmp.ne.s32.totalorder %s244, %s245
      %p256 = scmp.eq.s32.totalorder %s33, 0
      %p257 = por %p255, %p256
      %p258 = scmp.ne.s32.totalorder %s244, %s245
      %p259 = scmp.eq.s32.totalorder %s34, 1
      %p260 = por %p258, %p259
      %p262 = scmp.ne.s32.totalorder %s245, %s261
      %p263 = scmp.eq.s32.totalorder %s34, 0
      %p264 = por %p262, %p263
      %s265 = ssub.s32 %s28, %s35
      %p266 = scmp.eq.s32.totalorder %s265, 0
      %s268 = sadd.s32 %s267, 1
      %s269 = scalar_select %p266, %s267, %s268
      %p272 = pneg %p266
      %p273 = scmp.eq.s32.totalorder %s28, 1
      %p274 = por %p272, %p273
      %p275 = scmp.ne.s32.totalorder %s267, %s270
      %p276 = scmp.eq.s32.totalorder %s28, 0
      %p277 = por %p275, %p276
      %p278 = scmp.ne.s32.totalorder %s267, %s270
      %p279 = scmp.eq.s32.totalorder %s33, 1
      %p280 = por %p278, %p279
      %p281 = scmp.ne.s32.totalorder %s270, %s271
      %p282 = scmp.eq.s32.totalorder %s33, 0
      %p283 = por %p281, %p282
      %p284 = scmp.ne.s32.totalorder %s270, %s271
      %p285 = scmp.eq.s32.totalorder %s34, 1
      %p286 = por %p284, %p285
      %p288 = scmp.ne.s32.totalorder %s271, %s287
      %p289 = scmp.eq.s32.totalorder %s34, 0
      %p290 = por %p288, %p289
      %s291 = ssub.s32 %s28, %s35
      %p292 = scmp.eq.s32.totalorder %s291, 0
      %s294 = sadd.s32 %s293, 1
      %s295 = scalar_select %p292, %s293, %s294
      %p298 = pneg %p292
      %p299 = scmp.eq.s32.totalorder %s28, 1
      %p300 = por %p298, %p299
      %p301 = scmp.ne.s32.totalorder %s293, %s296
      %p302 = scmp.eq.s32.totalorder %s28, 0
      %p303 = por %p301, %p302
      %p304 = scmp.ne.s32.totalorder %s293, %s296
      %p305 = scmp.eq.s32.totalorder %s33, 1
      %p306 = por %p304, %p305
      %p307 = scmp.ne.s32.totalorder %s296, %s297
      %p308 = scmp.eq.s32.totalorder %s33, 0
      %p309 = por %p307, %p308
      %p310 = scmp.ne.s32.totalorder %s296, %s297
      %p311 = scmp.eq.s32.totalorder %s34, 1
      %p312 = por %p310, %p311
      %p314 = scmp.ne.s32.totalorder %s297, %s313
      %p315 = scmp.eq.s32.totalorder %s34, 0
      %p316 = por %p314, %p315
      %s317 = ssub.s32 %s28, %s35
      %p318 = scmp.eq.s32.totalorder %s317, 0
      %s320 = sadd.s32 %s319, 1
      %s321 = scalar_select %p318, %s319, %s320
      %p324 = pneg %p318
      %p325 = scmp.eq.s32.totalorder %s28, 1
      %p326 = por %p324, %p325
      %p327 = scmp.ne.s32.totalorder %s319, %s322
      %p328 = scmp.eq.s32.totalorder %s28, 0
      %p329 = por %p327, %p328
      %p330 = scmp.ne.s32.totalorder %s319, %s322
      %p331 = scmp.eq.s32.totalorder %s33, 1
      %p332 = por %p330, %p331
      %p333 = scmp.ne.s32.totalorder %s322, %s323
      %p334 = scmp.eq.s32.totalorder %s33, 0
      %p335 = por %p333, %p334
      %p336 = scmp.ne.s32.totalorder %s322, %s323
      %p337 = scmp.eq.s32.totalorder %s34, 1
      %p338 = por %p336, %p337
      %p340 = scmp.ne.s32.totalorder %s323, %s339
      %p341 = scmp.eq.s32.totalorder %s34, 0
      %p342 = por %p340, %p341
      %s343 = ssub.s32 %s28, %s35
      %p344 = scmp.eq.s32.totalorder %s343, 0
      %s346 = sadd.s32 %s345, 1
      %s347 = scalar_select %p344, %s345, %s346
      %p350 = pneg %p344
      %p351 = scmp.eq.s32.totalorder %s28, 1
      %p352 = por %p350, %p351
      %p353 = scmp.ne.s32.totalorder %s345, %s348
      %p354 = scmp.eq.s32.totalorder %s28, 0
      %p355 = por %p353, %p354
      %p356 = scmp.ne.s32.totalorder %s345, %s348
      %p357 = scmp.eq.s32.totalorder %s33, 1
      %p358 = por %p356, %p357
      %p359 = scmp.ne.s32.totalorder %s348, %s349
      %p360 = scmp.eq.s32.totalorder %s33, 0
      %p361 = por %p359, %p360
      %p362 = scmp.ne.s32.totalorder %s348, %s349
      %p363 = scmp.eq.s32.totalorder %s34, 1
      %p364 = por %p362, %p363
      %p366 = scmp.ne.s32.totalorder %s349, %s365
      %p367 = scmp.eq.s32.totalorder %s34, 0
      %p368 = por %p366, %p367
      %s370 = sadd.s32 %s369, 1
      %p373 = scmp.eq.s32.totalorder %s28, 1
      %p374 = scmp.ne.s32.totalorder %s369, %s371
      %p375 = scmp.eq.s32.totalorder %s28, 0
      %p376 = por %p374, %p375
      %p377 = scmp.ne.s32.totalorder %s369, %s371
      %p378 = scmp.eq.s32.totalorder %s33, 1
      %p379 = por %p377, %p378
      %p380 = scmp.ne.s32.totalorder %s371, %s372
      %p381 = scmp.eq.s32.totalorder %s33, 0
      %p382 = por %p380, %p381
      %p383 = scmp.ne.s32.totalorder %s371, %s372
      %p384 = scmp.eq.s32.totalorder %s34, 1
      %p385 = por %p383, %p384
      %p387 = scmp.ne.s32.totalorder %s372, %s386
      %p388 = scmp.eq.s32.totalorder %s34, 0
      %p389 = por %p387, %p388
      %s390 = ssub.s32 %s28, %s35
      %p391 = scmp.eq.s32.totalorder %s390, 0
      %s393 = sadd.s32 %s392, 1
      %s394 = scalar_select %p391, %s392, %s393
      %p397 = pneg %p391
      %p398 = scmp.eq.s32.totalorder %s28, 1
      %p399 = por %p397, %p398
      %p400 = scmp.ne.s32.totalorder %s392, %s395
      %p401 = scmp.eq.s32.totalorder %s28, 0
      %p402 = por %p400, %p401
      %p403 = scmp.ne.s32.totalorder %s392, %s395
      %p404 = scmp.eq.s32.totalorder %s33, 1
      %p405 = por %p403, %p404
      %p406 = scmp.ne.s32.totalorder %s395, %s396
      %p407 = scmp.eq.s32.totalorder %s33, 0
      %p408 = por %p406, %p407
      %p409 = scmp.ne.s32.totalorder %s395, %s396
      %p410 = scmp.eq.s32.totalorder %s34, 1
      %p411 = por %p409, %p410
      %p413 = scmp.ne.s32.totalorder %s396, %s412
      %p414 = scmp.eq.s32.totalorder %s34, 0
      %p415 = por %p413, %p414
      %s416 = ssub.s32 %s28, %s35
      %p417 = scmp.eq.s32.totalorder %s416, 0
      %s419 = sadd.s32 %s418, 1
      %s420 = scalar_select %p417, %s418, %s419
      %p423 = pneg %p417
      %p424 = scmp.eq.s32.totalorder %s28, 1
      %p425 = por %p423, %p424
      %p426 = scmp.ne.s32.totalorder %s418, %s421
      %p427 = scmp.eq.s32.totalorder %s28, 0
      %p428 = por %p426, %p427
      %p429 = scmp.ne.s32.totalorder %s418, %s421
      %p430 = scmp.eq.s32.totalorder %s33, 1
      %p431 = por %p429, %p430
      %p432 = scmp.ne.s32.totalorder %s421, %s422
      %p433 = scmp.eq.s32.totalorder %s33, 0
      %p434 = por %p432, %p433
      %p435 = scmp.ne.s32.totalorder %s421, %s422
      %p436 = scmp.eq.s32.totalorder %s34, 1
      %p437 = por %p435, %p436
      %p439 = scmp.ne.s32.totalorder %s422, %s438
      %p440 = scmp.eq.s32.totalorder %s34, 0
      %p441 = por %p439, %p440
      %p442 = scmp.le.s32.totalorder 1, %s28
      %p443 = scmp.lt.s32.totalorder %s28, 3
      %p444 = pnand %p442, %p443
      %p445 = pneg %p444
      // Predicated region
      $region9: #{prefill_forward.2} parent=5 // pred_check
        _
      $region10: #{prefill_forward.2} parent=5 // pred_check_branch
        %447 = sbr.rel (%p444) target = $region12
      $region11: #{prefill_forward.2} parent=5 // pred_region
        %s448 = ssub.s32 %s28, 1
        // Predicated region
        $region13: #{prefill_forward.2} parent=11 // pred_check
          %p449 = pneg %p49
        $region14: #{prefill_forward.2} parent=11 // pred_check_branch
          %451 = sbr.rel (%p449) target = $region16
        $region15: #{prefill_forward.2} parent=11 // pred_region
          _
        $region16: #{prefill_forward.2} parent=11 // pred_fallthru
          _
      $region12: #{prefill_forward.2} parent=5 // pred_fallthru
        _
      %p452 = scmp.lt.s32.totalorder %s28, 2
      // Predicated region
      $region17: #{prefill_forward.2} parent=5 // pred_check
        %p453 = pneg %p452
      $region18: #{prefill_forward.2} parent=5 // pred_check_branch
        %455 = sbr.rel (%p453) target = $region20
      $region19: #{prefill_forward.2} parent=5 // pred_region
        // Predicated region
        $region21: #{prefill_forward.2} parent=19 // pred_check
          %p456 = pneg %p69
        $region22: #{prefill_forward.2} parent=19 // pred_check_branch
          %458 = sbr.rel (%p456) target = $region24
        $region23: #{prefill_forward.2} parent=19 // pred_region
          %p459 = scmp.lt.s32.totalorder %s28, 1
          %s460 = scalar_select %p459, %s28, 1
          %s461 = scalar_lea.vmem %s1, %s460
        $region24: #{prefill_forward.2} parent=19 // pred_fallthru
          _
        // Predicated region
        $region25: #{prefill_forward.2} parent=19 // pred_check
          %p462 = pneg %p95
        $region26: #{prefill_forward.2} parent=19 // pred_check_branch
          %464 = sbr.rel (%p462) target = $region28
        $region27: #{prefill_forward.2} parent=19 // pred_region
          %p465 = scmp.lt.s32.totalorder %s28, 1
          %s466 = scalar_select %p465, %s28, 1
          %s467 = scalar_lea.vmem %s2, %s466
        $region28: #{prefill_forward.2} parent=19 // pred_fallthru
          _
        // Predicated region
        $region29: #{prefill_forward.2} parent=19 // pred_check
          %p468 = pneg %p121
        $region30: #{prefill_forward.2} parent=19 // pred_check_branch
          %470 = sbr.rel (%p468) target = $region32
        $region31: #{prefill_forward.2} parent=19 // pred_region
          %s471 = sand.u32 %s111, 1
          %s472 = scalar_lea.sflag [#allocation4], %s471
          %s473 = sand.u32 %s111, 1
          %s474 = smul.addr %s473, 192
          %s475 = scalar_lea.vmem [#allocation3], %s474
          %s477 = ssub.s32 3072, 3072
          %478 = vsyncadd %s472, %s477
          %s479 = smul.addr %s28, 48
          %s480 = smul.addr %s479, 64
          %s481 = scalar_lea.hbm %s3, %s480
          %s482 = sshll.u32 %s475, 4
          %s483 = int_to_ptr.vmem [resolvable:$true] %s482
          %488 = dma.hbm_to_vmem [thread:$0]  %s481, 3072, %s483, %s472, 192, 192, 12
        $region32: #{prefill_forward.2} parent=19 // pred_fallthru
          _
        // Predicated region
        $region33: #{prefill_forward.2} parent=19 // pred_check
          %p489 = pneg %p147
        $region34: #{prefill_forward.2} parent=19 // pred_check_branch
          %491 = sbr.rel (%p489) target = $region36
        $region35: #{prefill_forward.2} parent=19 // pred_region
          %p492 = scmp.lt.s32.totalorder %s28, 1
          %s493 = scalar_select %p492, %s28, 1
          %s494 = smul.addr %s493, 3
          %s495 = scalar_lea.vmem %s4, %s494
        $region36: #{prefill_forward.2} parent=19 // pred_fallthru
          _
        // Predicated region
        $region37: #{prefill_forward.2} parent=19 // pred_check
          %p496 = pneg %p173
        $region38: #{prefill_forward.2} parent=19 // pred_check_branch
          %498 = sbr.rel (%p496) target = $region40
        $region39: #{prefill_forward.2} parent=19 // pred_region
          %p499 = scmp.lt.s32.totalorder %s28, 1
          %s500 = scalar_select %p499, %s28, 1
          %s501 = smul.addr %s500, 16
          %s502 = smul.addr %s501, 4
          %s503 = scalar_lea.vmem %s5, %s502
        $region40: #{prefill_forward.2} parent=19 // pred_fallthru
          _
        // Predicated region
        $region41: #{prefill_forward.2} parent=19 // pred_check
          %p504 = pneg %p199
        $region42: #{prefill_forward.2} parent=19 // pred_check_branch
          %506 = sbr.rel (%p504) target = $region44
        $region43: #{prefill_forward.2} parent=19 // pred_region
          %p507 = scmp.lt.s32.totalorder %s28, 1
          %s508 = scalar_select %p507, %s28, 1
          %s509 = scalar_lea.vmem %s6, %s508
        $region44: #{prefill_forward.2} parent=19 // pred_fallthru
          _
        // Predicated region
        $region45: #{prefill_forward.2} parent=19 // pred_check
          %p510 = pneg %p225
        $region46: #{prefill_forward.2} parent=19 // pred_check_branch
          %512 = sbr.rel (%p510) target = $region48
        $region47: #{prefill_forward.2} parent=19 // pred_region
          %p513 = scmp.lt.s32.totalorder %s28, 1
          %s514 = scalar_select %p513, %s28, 1
          %s515 = scalar_lea.vmem %s7, %s514
        $region48: #{prefill_forward.2} parent=19 // pred_fallthru
          _
        // Predicated region
        $region49: #{prefill_forward.2} parent=19 // pred_check
          %p516 = pneg %p251
        $region50: #{prefill_forward.2} parent=19 // pred_check_branch
          %518 = sbr.rel (%p516) target = $region52
        $region51: #{prefill_forward.2} parent=19 // pred_region
          %p519 = scmp.lt.s32.totalorder %s28, 1
          %s520 = scalar_select %p519, %s28, 1
          %s521 = scalar_lea.vmem %s8, %s520
        $region52: #{prefill_forward.2} parent=19 // pred_fallthru
          _
        // Predicated region
        $region53: #{prefill_forward.2} parent=19 // pred_check
          %p522 = pneg %p277
        $region54: #{prefill_forward.2} parent=19 // pred_check_branch
          %524 = sbr.rel (%p522) target = $region56
        $region55: #{prefill_forward.2} parent=19 // pred_region
          %s525 = sand.u32 %s28, 1
          %s526 = scalar_lea.sflag [#allocation6], %s525
          %s527 = sand.u32 %s267, 1
          %s528 = smul.addr %s527, 256
          %s529 = scalar_lea.vmem [#allocation5], %s528
          %s531 = ssub.s32 4096, 4096
          %532 = vsyncadd %s526, %s531
          %s533 = smul.addr %s28, 64
          %s534 = smul.addr %s533, 64
          %s535 = scalar_lea.hbm %s9, %s534
          %s536 = sshll.u32 %s529, 4
          %s537 = int_to_ptr.vmem [resolvable:$true] %s536
          %542 = dma.hbm_to_vmem [thread:$0]  %s535, 4096, %s537, %s526, 256, 256, 16
        $region56: #{prefill_forward.2} parent=19 // pred_fallthru
          _
        // Predicated region
        $region57: #{prefill_forward.2} parent=19 // pred_check
          %p543 = pneg %p303
        $region58: #{prefill_forward.2} parent=19 // pred_check_branch
          %545 = sbr.rel (%p543) target = $region60
        $region59: #{prefill_forward.2} parent=19 // pred_region
          %p546 = scmp.lt.s32.totalorder %s28, 1
          %s547 = scalar_select %p546, %s28, 1
          %s548 = smul.addr %s547, 4
          %s549 = scalar_lea.vmem %s10, %s548
        $region60: #{prefill_forward.2} parent=19 // pred_fallthru
          _
        // Predicated region
        $region61: #{prefill_forward.2} parent=19 // pred_check
          %p550 = pneg %p329
        $region62: #{prefill_forward.2} parent=19 // pred_check_branch
          %552 = sbr.rel (%p550) target = $region64
        $region63: #{prefill_forward.2} parent=19 // pred_region
          %s553 = sand.u32 %s28, 1
          %s554 = scalar_lea.sflag [#allocation6], %s553
          %s555 = sand.u32 %s319, 1
          %s556 = smul.addr %s555, 256
          %s557 = scalar_lea.vmem [#allocation7], %s556
          %s559 = ssub.s32 4096, 4096
          %560 = vsyncadd %s554, %s559
          %s561 = smul.addr %s28, 64
          %s562 = smul.addr %s561, 64
          %s563 = scalar_lea.hbm %s11, %s562
          %s564 = sshll.u32 %s557, 4
          %s565 = int_to_ptr.vmem [resolvable:$true] %s564
          %570 = dma.hbm_to_vmem [thread:$0]  %s563, 4096, %s565, %s554, 64, 64, 4
        $region64: #{prefill_forward.2} parent=19 // pred_fallthru
          _
        // Predicated region
        $region65: #{prefill_forward.2} parent=19 // pred_check
          %p571 = pneg %p355
        $region66: #{prefill_forward.2} parent=19 // pred_check_branch
          %573 = sbr.rel (%p571) target = $region68
        $region67: #{prefill_forward.2} parent=19 // pred_region
          %p574 = scmp.lt.s32.totalorder %s28, 1
          %s575 = scalar_select %p574, %s28, 1
          %s576 = scalar_lea.vmem %s12, %s575
        $region68: #{prefill_forward.2} parent=19 // pred_fallthru
          _
      $region20: #{prefill_forward.2} parent=5 // pred_fallthru
        _
      %p577 = scmp.le.s32.totalorder 1, %s28
      %p578 = scmp.lt.s32.totalorder %s28, 3
      %p579 = pnand %p577, %p578
      %p580 = pneg %p579
      // Predicated region
      $region69: #{prefill_forward.2} parent=5 // pred_check
        _
      $region70: #{prefill_forward.2} parent=5 // pred_check_branch
        %582 = sbr.rel (%p579) target = $region72
      $region71: #{prefill_forward.2} parent=5 // pred_region
        %s583 = ssub.s32 %s28, 1
        %s584 = sand.u32 %s114, 1
        %s585 = scalar_lea.sflag [#allocation4], %s584
        %s586 = sand.u32 %s114, 1
        %s587 = smul.addr %s586, 192
        %s588 = scalar_lea.vmem [#allocation3], %s587
        // Predicated region
        $region73: #{prefill_forward.2} parent=71 // pred_check
          %p589 = pneg %p127
        $region74: #{prefill_forward.2} parent=71 // pred_check_branch
          %591 = sbr.rel (%p589) target = $region76
        $region75: #{prefill_forward.2} parent=71 // pred_region
          %592 = dma.done %s585, 3072
        $region76: #{prefill_forward.2} parent=71 // pred_fallthru
          _
        %s593 = sand.u32 %s33, 1
        %s594 = scalar_lea.sflag [#allocation6], %s593
        %s595 = sand.u32 %s270, 1
        %s596 = smul.addr %s595, 256
        %s597 = scalar_lea.vmem [#allocation5], %s596
        // Predicated region
        $region77: #{prefill_forward.2} parent=71 // pred_check
          %p598 = pneg %p283
        $region78: #{prefill_forward.2} parent=71 // pred_check_branch
          %600 = sbr.rel (%p598) target = $region80
        $region79: #{prefill_forward.2} parent=71 // pred_region
          %601 = dma.done %s594, 4096
        $region80: #{prefill_forward.2} parent=71 // pred_fallthru
          _
        %s602 = sand.u32 %s33, 1
        %s603 = scalar_lea.sflag [#allocation6], %s602
        %s604 = sand.u32 %s322, 1
        %s605 = smul.addr %s604, 256
        %s606 = scalar_lea.vmem [#allocation7], %s605
        // Predicated region
        $region81: #{prefill_forward.2} parent=71 // pred_check
          %p607 = pneg %p335
        $region82: #{prefill_forward.2} parent=71 // pred_check_branch
          %609 = sbr.rel (%p607) target = $region84
        $region83: #{prefill_forward.2} parent=71 // pred_region
          %610 = dma.done %s603, 4096
        $region84: #{prefill_forward.2} parent=71 // pred_fallthru
          _
        %p611 = pneg %p49
        %p612 = pneg %p46
        %p613 = scmp.lt.s32.totalorder %s33, 1
        %s614 = scalar_select %p613, %s33, 1
        %s615 = scalar_lea.vmem %s1, %s614
        %p616 = pneg %p75
        %p617 = pneg %p72
        %p618 = scmp.lt.s32.totalorder %s33, 1
        %s619 = scalar_select %p618, %s33, 1
        %s620 = scalar_lea.vmem %s2, %s619
        %p621 = pneg %p101
        %p622 = pneg %p98
        %s623 = sand.u32 %s114, 1
        %s624 = scalar_lea.sflag [#allocation4], %s623
        %s625 = sand.u32 %s114, 1
        %s626 = smul.addr %s625, 192
        %s627 = scalar_lea.vmem [#allocation3], %s626
        %p628 = pneg %p127
        %p629 = pneg %p124
        %p630 = scmp.lt.s32.totalorder %s33, 1
        %s631 = scalar_select %p630, %s33, 1
        %s632 = smul.addr %s631, 3
        %s633 = scalar_lea.vmem %s4, %s632
        %p634 = pneg %p153
        %p635 = pneg %p150
        %p636 = scmp.lt.s32.totalorder %s33, 1
        %s637 = scalar_select %p636, %s33, 1
        %s638 = smul.addr %s637, 16
        %s639 = smul.addr %s638, 4
        %s640 = scalar_lea.vmem %s5, %s639
        %p641 = pneg %p179
        %p642 = pneg %p176
        %p643 = scmp.lt.s32.totalorder %s33, 1
        %s644 = scalar_select %p643, %s33, 1
        %s645 = scalar_lea.vmem %s6, %s644
        %p646 = pneg %p205
        %p647 = pneg %p202
        %p648 = scmp.lt.s32.totalorder %s33, 1
        %s649 = scalar_select %p648, %s33, 1
        %s650 = scalar_lea.vmem %s7, %s649
        %p651 = pneg %p231
        %p652 = pneg %p228
        %p653 = scmp.lt.s32.totalorder %s33, 1
        %s654 = scalar_select %p653, %s33, 1
        %s655 = scalar_lea.vmem %s8, %s654
        %p656 = pneg %p257
        %p657 = pneg %p254
        %s658 = sand.u32 %s33, 1
        %s659 = scalar_lea.sflag [#allocation6], %s658
        %s660 = sand.u32 %s270, 1
        %s661 = smul.addr %s660, 256
        %s662 = scalar_lea.vmem [#allocation5], %s661
        %p663 = pneg %p283
        %p664 = pneg %p280
        %p665 = scmp.lt.s32.totalorder %s33, 1
        %s666 = scalar_select %p665, %s33, 1
        %s667 = smul.addr %s666, 4
        %s668 = scalar_lea.vmem %s10, %s667
        %p669 = pneg %p309
        %p670 = pneg %p306
        %s671 = sand.u32 %s33, 1
        %s672 = scalar_lea.sflag [#allocation6], %s671
        %s673 = sand.u32 %s322, 1
        %s674 = smul.addr %s673, 256
        %s675 = scalar_lea.vmem [#allocation7], %s674
        %p676 = pneg %p335
        %p677 = pneg %p332
        %p678 = scmp.lt.s32.totalorder %s33, 1
        %s679 = scalar_select %p678, %s33, 1
        %s680 = scalar_lea.vmem %s12, %s679
        %p681 = pneg %p361
        %p682 = pneg %p358
        %p683 = pneg %p382
        %p684 = pneg %p379
        %p685 = pneg %p408
        %p686 = pneg %p405
        %p687 = scmp.lt.s32.totalorder %s33, 1
        %s688 = scalar_select %p687, %s33, 1
        %s689 = smul.addr %s688, 2
        %s690 = smul.addr %s689, 8
        %s691 = scalar_lea.vmem %s14, %s690
        %p692 = pneg %p434
        %p693 = pneg %p431
        %p694 = scmp.lt.s32.totalorder %s33, 1
        %s695 = scalar_select %p694, %s33, 1
        %s696 = smul.addr %s695, 2
        %s697 = smul.addr %s696, 8
        %s698 = scalar_lea.vmem %s15, %s697
        %p699 = scmp.lt.s32.totalorder %s33, 1
        %s700 = scalar_select %p699, %s33, 1
        %s701 = scalar_lea.vmem %s1, %s700
        %p702 = scmp.lt.s32.totalorder %s33, 1
        %s703 = scalar_select %p702, %s33, 1
        %s704 = scalar_lea.vmem %s2, %s703
        %p705 = scmp.lt.s32.totalorder %s33, 1
        %s706 = scalar_select %p705, %s33, 1
        %s707 = smul.addr %s706, 3
        %s708 = scalar_lea.vmem %s4, %s707
        %p709 = scmp.lt.s32.totalorder %s33, 1
        %s710 = scalar_select %p709, %s33, 1
        %s711 = smul.addr %s710, 16
        %s712 = smul.addr %s711, 4
        %s713 = scalar_lea.vmem %s5, %s712
        %p714 = scmp.lt.s32.totalorder %s33, 1
        %s715 = scalar_select %p714, %s33, 1
        %s716 = scalar_lea.vmem %s6, %s715
        %p717 = scmp.lt.s32.totalorder %s33, 1
        %s718 = scalar_select %p717, %s33, 1
        %s719 = scalar_lea.vmem %s7, %s718
        %p720 = scmp.lt.s32.totalorder %s33, 1
        %s721 = scalar_select %p720, %s33, 1
        %s722 = scalar_lea.vmem %s8, %s721
        %p723 = scmp.lt.s32.totalorder %s33, 1
        %s724 = scalar_select %p723, %s33, 1
        %s725 = smul.addr %s724, 4
        %s726 = scalar_lea.vmem %s10, %s725
        %p727 = scmp.lt.s32.totalorder %s33, 1
        %s728 = scalar_select %p727, %s33, 1
        %s729 = scalar_lea.vmem %s12, %s728
        %p730 = scmp.lt.s32.totalorder %s33, 1
        %s731 = scalar_select %p730, %s33, 1
        %s732 = smul.addr %s731, 2
        %s733 = smul.addr %s732, 8
        %s734 = scalar_lea.vmem %s14, %s733
        %p735 = scmp.lt.s32.totalorder %s33, 1
        %s736 = scalar_select %p735, %s33, 1
        %s737 = smul.addr %s736, 2
        %s738 = smul.addr %s737, 8
        %s739 = scalar_lea.vmem %s15, %s738
        %p741 = scmp.eq.s32.totalorder %s33, 0
        // Predicated region
        $region85: #{prefill_forward.2} parent=71 // pred_check
          %p742 = pneg %p741
        $region86: #{prefill_forward.2} parent=71 // pred_check_branch
          %744 = sbr.rel (%p742) target = $region88
        $region87: #{prefill_forward.2} parent=71 // pred_region
          %v745 = vld [vmem:[%s0] sm:$0xff]
          %v746 = vld [vmem:[%s0 + $0x8] sm:$0xff]
          %747 = vst [vmem:[#allocation2] sm:$0xff] %v745
          %748 = vst [vmem:[#allocation2 + $0x8] sm:$0xff] %v746
        $region88: #{prefill_forward.2} parent=71 // pred_fallthru
          _
        %v749 = vld [vmem:[#allocation2] sm:$0xff]
        %v750 = vld [vmem:[#allocation2 + $0x8] sm:$0xff]
        %v751 = vld [vmem:[%s701] sm:$0x1]
        %v752 = vld [vmem:[%s704] sm:$0x1]
        %753 = vadd.xlane.f32.xlu0 %v749
        %v754 = vpop.xlane.xlu0 %753
        %755 = vadd.xlane.f32.xlu0 %v750
        %v756 = vpop.xlane.xlu0 %755
        %v757 = vrcp.pop 128.0
        %v758 = vmul.f32 %v754, %v757
        %v759 = vmul.f32 %v756, %v757
        %v760 = vsub.f32 %v749, %v758
        %v761 = vsub.f32 %v750, %v759
        %v762 = vmul.f32 %v760, %v760
        %v763 = vmul.f32 %v761, %v761
        %764 = vadd.xlane.f32.xlu0 %v762
        %v765 = vpop.xlane.xlu0 %764
        %766 = vadd.xlane.f32.xlu0 %v763
        %v767 = vpop.xlane.xlu0 %766
        %v768 = vmul.f32 %v765, %v757
        %v769 = vmul.f32 %v767, %v757
        %v770 = vadd.f32 %v768, 1e-05
        %v771 = vadd.f32 %v769, 1e-05
        %v772 = vrsqrt.pop %v770
        %v773 = vrsqrt.pop %v771
        %v774 = vmul.f32 %v760, %v772
        %v775 = vmul.f32 %v761, %v773
        %v777 = vlaneseq
        %v778 = vshrl.u32 %v777, 7
        %v779 = vsub.s32 0, %v778
        %v780 = vrot.slane %v751, %v779
        %v782 = vmul.f32 %v774, %v780
        %v783 = vmul.f32 %v775, %v780
        %v785 = vlaneseq
        %v786 = vshrl.u32 %v785, 7
        %v787 = vsub.s32 0, %v786
        %v788 = vrot.slane %v752, %v787
        %v790 = vadd.f32 %v782, %v788
        %v791 = vadd.f32 %v783, %v788
        %v792 = vpack.c.bf16 %v791, %v790
        %v793 = vld [vmem:[%s588] sm:$0xff]
        %v794 = vld [vmem:[%s588 + $0x8] sm:$0xf]
        %v795 = vld [vmem:[%s588 + $0xc] sm:$0xff]
        %v796 = vld [vmem:[%s588 + $0x14] sm:$0xf]
        %v797 = vld [vmem:[%s588 + $0x18] sm:$0xff]
        %v798 = vld [vmem:[%s588 + $0x20] sm:$0xf]
        %v799 = vld [vmem:[%s588 + $0x24] sm:$0xff]
        %v800 = vld [vmem:[%s588 + $0x2c] sm:$0xf]
        %v801 = vld [vmem:[%s588 + $0x30] sm:$0xff]
        %v802 = vld [vmem:[%s588 + $0x38] sm:$0xf]
        %v803 = vld [vmem:[%s588 + $0x3c] sm:$0xff]
        %v804 = vld [vmem:[%s588 + $0x44] sm:$0xf]
        %v805 = vld [vmem:[%s588 + $0x48] sm:$0xff]
        %v806 = vld [vmem:[%s588 + $0x50] sm:$0xf]
        %v807 = vld [vmem:[%s588 + $0x54] sm:$0xff]
        %v808 = vld [vmem:[%s588 + $0x5c] sm:$0xf]
        %v809 = vld [vmem:[%s588 + $0x60] sm:$0xff]
        %v810 = vld [vmem:[%s588 + $0x68] sm:$0xf]
        %v811 = vld [vmem:[%s588 + $0x6c] sm:$0xff]
        %v812 = vld [vmem:[%s588 + $0x74] sm:$0xf]
        %v813 = vld [vmem:[%s588 + $0x78] sm:$0xff]
        %v814 = vld [vmem:[%s588 + $0x80] sm:$0xf]
        %v815 = vld [vmem:[%s588 + $0x84] sm:$0xff]
        %v816 = vld [vmem:[%s588 + $0x8c] sm:$0xf]
        %v817 = vld [vmem:[%s588 + $0x90] sm:$0xff]
        %v818 = vld [vmem:[%s588 + $0x98] sm:$0xf]
        %v819 = vld [vmem:[%s588 + $0x9c] sm:$0xff]
        %v820 = vld [vmem:[%s588 + $0xa4] sm:$0xf]
        %v821 = vld [vmem:[%s588 + $0xa8] sm:$0xff]
        %v822 = vld [vmem:[%s588 + $0xb0] sm:$0xf]
        %v823 = vld [vmem:[%s588 + $0xb4] sm:$0xff]
        %v824 = vld [vmem:[%s588 + $0xbc] sm:$0xf]
        %v825 = vld [vmem:[%s708] sm:$0x7]
        %v827 = vlaneseq
        %v828 = vshrl.u32 %v827, 7
        %v829 = vsub.s32 0, %v828
        %v830 = vrot.slane %v825, %v829
        %v831 = vlaneseq
        %v832 = vshrl.u32 %v831, 7
        %v833 = vsub.s32 1, %v832
        %v834 = vrot.slane %v825, %v833
        %v835 = vlaneseq
        %v836 = vshrl.u32 %v835, 7
        %v837 = vsub.s32 2, %v836
        %v838 = vrot.slane %v825, %v837
        %v874 = vunpack.c.l.b16 %v793
        %v875 = vunpack.c.h.b16 %v793
        %v876 = vunpack.c.l.b16 %v794
        %v877 = vunpack.c.l.b16 %v795
        %v878 = vunpack.c.h.b16 %v795
        %v879 = vunpack.c.l.b16 %v796
        %v880 = vunpack.c.l.b16 %v797
        %v881 = vunpack.c.h.b16 %v797
        %v882 = vunpack.c.l.b16 %v798
        %v883 = vunpack.c.l.b16 %v799
        %v884 = vunpack.c.h.b16 %v799
        %v885 = vunpack.c.l.b16 %v800
        %v886 = vunpack.c.l.b16 %v801
        %v887 = vunpack.c.h.b16 %v801
        %v888 = vunpack.c.l.b16 %v802
        %v889 = vunpack.c.l.b16 %v803
        %v890 = vunpack.c.h.b16 %v803
        %v891 = vunpack.c.l.b16 %v804
        %v892 = vunpack.c.l.b16 %v805
        %v893 = vunpack.c.h.b16 %v805
        %v894 = vunpack.c.l.b16 %v806
        %v895 = vunpack.c.l.b16 %v807
        %v896 = vunpack.c.h.b16 %v807
        %v897 = vunpack.c.l.b16 %v808
        %v898 = vunpack.c.l.b16 %v809
        %v899 = vunpack.c.h.b16 %v809
        %v900 = vunpack.c.l.b16 %v810
        %v901 = vunpack.c.l.b16 %v811
        %v902 = vunpack.c.h.b16 %v811
        %v903 = vunpack.c.l.b16 %v812
        %v904 = vunpack.c.l.b16 %v813
        %v905 = vunpack.c.h.b16 %v813
        %v906 = vunpack.c.l.b16 %v814
        %v907 = vunpack.c.l.b16 %v815
        %v908 = vunpack.c.h.b16 %v815
        %v909 = vunpack.c.l.b16 %v816
        %v910 = vunpack.c.l.b16 %v817
        %v911 = vunpack.c.h.b16 %v817
        %v912 = vunpack.c.l.b16 %v818
        %v913 = vunpack.c.l.b16 %v819
        %v914 = vunpack.c.h.b16 %v819
        %v915 = vunpack.c.l.b16 %v820
        %v916 = vunpack.c.l.b16 %v821
        %v917 = vunpack.c.h.b16 %v821
        %v918 = vunpack.c.l.b16 %v822
        %v919 = vunpack.c.l.b16 %v823
        %v920 = vunpack.c.h.b16 %v823
        %v921 = vunpack.c.l.b16 %v824
        %v922 = vpack.c.b16 %v877, %v874
        %v923 = vpack.c.b16 %v878, %v875
        %v924 = vpack.c.b16 %v879, %v876
        %v925 = vpack.c.b16 %v883, %v880
        %v926 = vpack.c.b16 %v884, %v881
        %v927 = vpack.c.b16 %v885, %v882
        %v928 = vpack.c.b16 %v889, %v886
        %v929 = vpack.c.b16 %v890, %v887
        %v930 = vpack.c.b16 %v891, %v888
        %v931 = vpack.c.b16 %v895, %v892
        %v932 = vpack.c.b16 %v896, %v893
        %v933 = vpack.c.b16 %v897, %v894
        %v934 = vpack.c.b16 %v901, %v898
        %v935 = vpack.c.b16 %v902, %v899
        %v936 = vpack.c.b16 %v903, %v900
        %v937 = vpack.c.b16 %v907, %v904
        %v938 = vpack.c.b16 %v908, %v905
        %v939 = vpack.c.b16 %v909, %v906
        %v940 = vpack.c.b16 %v913, %v910
        %v941 = vpack.c.b16 %v914, %v911
        %v942 = vpack.c.b16 %v915, %v912
        %v943 = vpack.c.b16 %v919, %v916
        %v944 = vpack.c.b16 %v920, %v917
        %v945 = vpack.c.b16 %v921, %v918
        %970 = vmatprep.subr.bf16.mxu0 %v923
        %971 = vmatpush1.bf16.msra.mxu0 %v922
        %972 = vmatprep.subr.bf16.mxu0 %v926
        %973 = vmatpush1.bf16.msra.mxu0 %v925
        %974 = vmatprep.subr.bf16.mxu0 %v929
        %975 = vmatpush1.bf16.msra.mxu0 %v928
        %976 = vmatprep.subr.bf16.mxu0 %v932
        %977 = vmatpush1.bf16.msra.mxu0 %v931
        %978 = vmatprep.subr.bf16.mxu0 %v935
        %979 = vmatpush1.bf16.msra.mxu0 %v934
        %980 = vmatprep.subr.bf16.mxu0 %v938
        %981 = vmatpush1.bf16.msra.mxu0 %v937
        %982 = vmatprep.subr.bf16.mxu0 %v941
        %983 = vmatpush1.bf16.msra.mxu0 %v940
        %984 = vmatprep.subr.bf16.mxu0 %v944
        %985 = vmatpush1.bf16.msra.mxu0 %v943
        %986 = vmatprep.subr.bf16.mxu0 0
        %987 = vmatpush1.bf16.msra.mxu0 0
        %988 = vmatprep.subr.bf16.mxu0 0
        %989 = vmatpush1.bf16.msra.mxu0 0
        %990 = vmatprep.subr.bf16.mxu0 0
        %991 = vmatpush1.bf16.msra.mxu0 0
        %992 = vmatprep.subr.bf16.mxu0 0
        %993 = vmatpush1.bf16.msra.mxu0 0
        %994 = vmatprep.subr.bf16.mxu0 0
        %995 = vmatpush1.bf16.msra.mxu0 0
        %996 = vmatprep.subr.bf16.mxu0 0
        %997 = vmatpush1.bf16.msra.mxu0 0
        %998 = vmatprep.subr.bf16.mxu0 0
        %999 = vmatpush1.bf16.msra.mxu0 0
        %1000 = vmatprep.subr.bf16.mxu0 0
        %1001 = vmatpush1.bf16.msra.mxu0 0
        %1002 = vmatprep.mubr.bf16.mxu0 0
        %1003 = vmatmul.mubr.bf16.gmra.mrb[0].mxu0 %v792
        %v1004 = vpop.f32.mrb[0].mxu0
        %v1005 = vadd.f32 %v830, %v1004
        %v1006 = vpop.f32.mrb[0].mxu0
        %v1007 = vadd.f32 %v834, %v1006
        %v1008 = vpop.f32.mrb[0].mxu0
        %v1009 = vadd.f32 %v830, %v1008
        %v1010 = vpop.f32.mrb[0].mxu0
        %v1011 = vadd.f32 %v834, %v1010
        %1012 = vdwg.mxu0
        %1013 = vmatprep.subr.bf16.mxu0 0
        %1014 = vmatpush1.bf16.msra.mxu0 %v924
        %1015 = vmatprep.subr.bf16.mxu0 0
        %1016 = vmatpush1.bf16.msra.mxu0 %v927
        %1017 = vmatprep.subr.bf16.mxu0 0
        %1018 = vmatpush1.bf16.msra.mxu0 %v930
        %1019 = vmatprep.subr.bf16.mxu0 0
        %1020 = vmatpush1.bf16.msra.mxu0 %v933
        %1021 = vmatprep.subr.bf16.mxu0 0
        %1022 = vmatpush1.bf16.msra.mxu0 %v936
        %1023 = vmatprep.subr.bf16.mxu0 0
        %1024 = vmatpush1.bf16.msra.mxu0 %v939
        %1025 = vmatprep.subr.bf16.mxu0 0
        %1026 = vmatpush1.bf16.msra.mxu0 %v942
        %1027 = vmatprep.subr.bf16.mxu0 0
        %1028 = vmatpush1.bf16.msra.mxu0 %v945
        %1029 = vmatprep.subr.bf16.mxu0 0
        %1030 = vmatpush1.bf16.msra.mxu0 0
        %1031 = vmatprep.subr.bf16.mxu0 0
        %1032 = vmatpush1.bf16.msra.mxu0 0
        %1033 = vmatprep.subr.bf16.mxu0 0
        %1034 = vmatpush1.bf16.msra.mxu0 0
        %1035 = vmatprep.subr.bf16.mxu0 0
        %1036 = vmatpush1.bf16.msra.mxu0 0
        %1037 = vmatprep.subr.bf16.mxu0 0
        %1038 = vmatpush1.bf16.msra.mxu0 0
        %1039 = vmatprep.subr.bf16.mxu0 0
        %1040 = vmatpush1.bf16.msra.mxu0 0
        %1041 = vmatprep.subr.bf16.mxu0 0
        %1042 = vmatpush1.bf16.msra.mxu0 0
        %1043 = vmatprep.subr.bf16.mxu0 0
        %1044 = vmatpush1.bf16.msra.mxu0 0
        %1045 = vmatprep.mubr.bf16.mxu0 0
        %1046 = vmatmul.mubr.bf16.gmra.mrb[0].mxu0 %v792
        %v1047 = vpop.f32.mrb[0].mxu0
        %v1048 = vadd.f32 %v838, %v1047
        %v1049 = vpop.f32.mrb[0].mxu0
        %v1050 = vpop.f32.mrb[0].mxu0
        %v1051 = vadd.f32 %v838, %v1050
        %v1052 = vpop.f32.mrb[0].mxu0
        %1053 = vdwg.mxu0
        %1054 = vst [vmem:[%s734] sm:$0xff] %v1007
        %1055 = vst [vmem:[%s734 + $0x8] sm:$0xff] %v1011
        %1056 = vst [vmem:[%s739] sm:$0xff] %v1048
        %1057 = vst [vmem:[%s739 + $0x8] sm:$0xff] %v1051
        %v1058 = vlaneseq
        %v1059 = vshrl.u32 %v1058, 7
        %v1060 = vlaneseq
        %v1061 = vand.u32 %v1060, 127
        %vm1062 = vcmp.le.s32.totalorder %v1061, %v1059
        %v1063 = vld [vmem:[%s713] sm:$0xf]
        %v1064 = vld [vmem:[%s713 + $0x4] sm:$0xf]
        %v1065 = vld [vmem:[%s713 + $0x8] sm:$0xf]
        %v1066 = vld [vmem:[%s713 + $0xc] sm:$0xf]
        %v1067 = vld [vmem:[%s713 + $0x10] sm:$0xf]
        %v1068 = vld [vmem:[%s713 + $0x14] sm:$0xf]
        %v1069 = vld [vmem:[%s713 + $0x18] sm:$0xf]
        %v1070 = vld [vmem:[%s713 + $0x1c] sm:$0xf]
        %v1071 = vld [vmem:[%s713 + $0x20] sm:$0xf]
        %v1072 = vld [vmem:[%s713 + $0x24] sm:$0xf]
        %v1073 = vld [vmem:[%s713 + $0x28] sm:$0xf]
        %v1074 = vld [vmem:[%s713 + $0x2c] sm:$0xf]
        %v1075 = vld [vmem:[%s713 + $0x30] sm:$0xf]
        %v1076 = vld [vmem:[%s713 + $0x34] sm:$0xf]
        %v1077 = vld [vmem:[%s713 + $0x38] sm:$0xf]
        %v1078 = vld [vmem:[%s713 + $0x3c] sm:$0xf]
        %v1079 = vpack.c.bf16 %v1005, %v1005
        %v1080 = vpack.c.bf16 %v1007, %v1007
        %v1081 = vpack.c.bf16 %v1048, %v1048
        %vm1082 = vcmask 261120
        %v1084 = vsel %vm1082, %v1079, 0
        %v1087 = vsel %vm1082, %v1080, 0
        %1089 = vmatprep.subr.bf16.mxu0 0
        %1090 = vmatpush1.bf16.xpose.msra.mxu0 %v1087
        %1091 = vmatprep.subr.bf16.mxu0 0
        %1092 = vmatpush1.bf16.xpose.msra.mxu0 0
        %1093 = vmatprep.subr.bf16.mxu0 0
        %1094 = vmatpush1.bf16.xpose.msra.mxu0 0
        %1095 = vmatprep.subr.bf16.mxu0 0
        %1096 = vmatpush1.bf16.xpose.msra.mxu0 0
        %1097 = vmatprep.subr.bf16.mxu0 0
        %1098 = vmatpush1.bf16.xpose.msra.mxu0 0
        %1099 = vmatprep.subr.bf16.mxu0 0
        %1100 = vmatpush1.bf16.xpose.msra.mxu0 0
        %1101 = vmatprep.subr.bf16.mxu0 0
        %1102 = vmatpush1.bf16.xpose.msra.mxu0 0
        %1103 = vmatprep.subr.bf16.mxu0 0
        %1104 = vmatpush1.bf16.xpose.msra.mxu0 0
        %1105 = vmatprep.subr.bf16.mxu0 0
        %1106 = vmatpush1.bf16.xpose.msra.mxu0 0
        %1107 = vmatprep.subr.bf16.mxu0 0
        %1108 = vmatpush1.bf16.xpose.msra.mxu0 0
        %1109 = vmatprep.subr.bf16.mxu0 0
        %1110 = vmatpush1.bf16.xpose.msra.mxu0 0
        %1111 = vmatprep.subr.bf16.mxu0 0
        %1112 = vmatpush1.bf16.xpose.msra.mxu0 0
        %1113 = vmatprep.subr.bf16.mxu0 0
        %1114 = vmatpush1.bf16.xpose.msra.mxu0 0
        %1115 = vmatprep.subr.bf16.mxu0 0
        %1116 = vmatpush1.bf16.xpose.msra.mxu0 0
        %1117 = vmatprep.subr.bf16.mxu0 0
        %1118 = vmatpush1.bf16.xpose.msra.mxu0 0
        %1119 = vmatprep.subr.bf16.mxu0 0
        %1120 = vmatpush1.bf16.xpose.msra.mxu0 0
        %1121 = vmatprep.mubr.bf16.mxu0 0
        %1122 = vmatmul.mubr.bf16.gmra.mrb[0].mxu0 %v1084
        %v1123 = vpop.f32.mrb[0].mxu0
        %v1124 = vadd.f32 0.0, %v1123
        %v1125 = vpop.f32.mrb[0].mxu0
        %v1126 = vpop.f32.mrb[0].mxu0
        %v1127 = vpop.f32.mrb[0].mxu0
        %1128 = vdwg.mxu0
        %v1129 = vmul.f32 %v1124, 0.17677669
        %v1130 = vsel %vm1062, %v1129, -1e+09
        %vm1131 = vcmask 64512
        %v1132 = vsel %vm1131, %v1130, -inf
        %1133 = vmax.xlane.f32.xlu0 %v1132
        %v1134 = vpop.xlane.xlu0 %1133
        %v1135 = vsub.f32 %v1130, %v1134
        %v1136 = vmul.f32 %v1135, 1.442695
        %v1137 = vpow.pop %v1136
        %v1138 = vsel %vm1131, %v1137, 0.0
        %1139 = vadd.xlane.f32.xlu0 %v1138
        %v1140 = vpop.xlane.xlu0 %1139
        %v1141 = vrcp.pop %v1140
        %v1142 = vmul.f32 %v1137, %v1141
        %v1143 = vpack.c.bf16 %v1142, %v1142
        %v1145 = vsel %vm1131, %v1143, 0
        %vm1147 = vcmask 1043456
        %v1149 = vsel %vm1147, %v1081, 0
        %1151 = vmatprep.subr.bf16.mxu0 0
        %1152 = vmatpush1.bf16.msra.mxu0 %v1149
        %1153 = vmatprep.subr.bf16.mxu0 0
        %1154 = vmatpush1.bf16.msra.mxu0 0
        %1155 = vmatprep.subr.bf16.mxu0 0
        %1156 = vmatpush1.bf16.msra.mxu0 0
        %1157 = vmatprep.subr.bf16.mxu0 0
        %1158 = vmatpush1.bf16.msra.mxu0 0
        %1159 = vmatprep.subr.bf16.mxu0 0
        %1160 = vmatpush1.bf16.msra.mxu0 0
        %1161 = vmatprep.subr.bf16.mxu0 0
        %1162 = vmatpush1.bf16.msra.mxu0 0
        %1163 = vmatprep.subr.bf16.mxu0 0
        %1164 = vmatpush1.bf16.msra.mxu0 0
        %1165 = vmatprep.subr.bf16.mxu0 0
        %1166 = vmatpush1.bf16.msra.mxu0 0
        %1167 = vmatprep.subr.bf16.mxu0 0
        %1168 = vmatpush1.bf16.msra.mxu0 0
        %1169 = vmatprep.subr.bf16.mxu0 0
        %1170 = vmatpush1.bf16.msra.mxu0 0
        %1171 = vmatprep.subr.bf16.mxu0 0
        %1172 = vmatpush1.bf16.msra.mxu0 0
        %1173 = vmatprep.subr.bf16.mxu0 0
        %1174 = vmatpush1.bf16.msra.mxu0 0
        %1175 = vmatprep.subr.bf16.mxu0 0
        %1176 = vmatpush1.bf16.msra.mxu0 0
        %1177 = vmatprep.subr.bf16.mxu0 0
        %1178 = vmatpush1.bf16.msra.mxu0 0
        %1179 = vmatprep.subr.bf16.mxu0 0
        %1180 = vmatpush1.bf16.msra.mxu0 0
        %1181 = vmatprep.subr.bf16.mxu0 0
        %1182 = vmatpush1.bf16.msra.mxu0 0
        %1183 = vmatprep.mubr.bf16.mxu0 0
        %1184 = vmatmul.mubr.bf16.gmra.mrb[0].mxu0 %v1145
        %v1185 = vpop.f32.mrb[0].mxu0
        %v1186 = vadd.f32 0.0, %v1185
        %v1187 = vpop.f32.mrb[0].mxu0
        %v1188 = vpop.f32.mrb[0].mxu0
        %v1189 = vpop.f32.mrb[0].mxu0
        %1190 = vdwg.mxu0
        %v1191 = vpack.c.bf16 %v1186, %v1186
        %1193 = vrot.lane.b32.xlu0 %v1079, 96
        %v1194 = vpop.permute.xlu0 %1193
        %1196 = vrot.lane.b32.xlu0 %v1080, 96
        %v1197 = vpop.permute.xlu0 %1196
        %v1199 = vsel %vm1082, %v1194, 0
        %v1202 = vsel %vm1082, %v1197, 0
        %1204 = vmatprep.subr.bf16.mxu0 0
        %1205 = vmatpush1.bf16.xpose.msra.mxu0 %v1202
        %1206 = vmatprep.subr.bf16.mxu0 0
        %1207 = vmatpush1.bf16.xpose.msra.mxu0 0
        %1208 = vmatprep.subr.bf16.mxu0 0
        %1209 = vmatpush1.bf16.xpose.msra.mxu0 0
        %1210 = vmatprep.subr.bf16.mxu0 0
        %1211 = vmatpush1.bf16.xpose.msra.mxu0 0
        %1212 = vmatprep.subr.bf16.mxu0 0
        %1213 = vmatpush1.bf16.xpose.msra.mxu0 0
        %1214 = vmatprep.subr.bf16.mxu0 0
        %1215 = vmatpush1.bf16.xpose.msra.mxu0 0
        %1216 = vmatprep.subr.bf16.mxu0 0
        %1217 = vmatpush1.bf16.xpose.msra.mxu0 0
        %1218 = vmatprep.subr.bf16.mxu0 0
        %1219 = vmatpush1.bf16.xpose.msra.mxu0 0
        %1220 = vmatprep.subr.bf16.mxu0 0
        %1221 = vmatpush1.bf16.xpose.msra.mxu0 0
        %1222 = vmatprep.subr.bf16.mxu0 0
        %1223 = vmatpush1.bf16.xpose.msra.mxu0 0
        %1224 = vmatprep.subr.bf16.mxu0 0
        %1225 = vmatpush1.bf16.xpose.msra.mxu0 0
        %1226 = vmatprep.subr.bf16.mxu0 0
        %1227 = vmatpush1.bf16.xpose.msra.mxu0 0
        %1228 = vmatprep.subr.bf16.mxu0 0
        %1229 = vmatpush1.bf16.xpose.msra.mxu0 0
        %1230 = vmatprep.subr.bf16.mxu0 0
        %1231 = vmatpush1.bf16.xpose.msra.mxu0 0
        %1232 = vmatprep.subr.bf16.mxu0 0
        %1233 = vmatpush1.bf16.xpose.msra.mxu0 0
        %1234 = vmatprep.subr.bf16.mxu0 0
        %1235 = vmatpush1.bf16.xpose.msra.mxu0 0
        %1236 = vmatprep.mubr.bf16.mxu0 0
        %1237 = vmatmul.mubr.bf16.gmra.mrb[0].mxu0 %v1199
        %v1238 = vpop.f32.mrb[0].mxu0
        %v1239 = vadd.f32 0.0, %v1238
        %v1240 = vpop.f32.mrb[0].mxu0
        %v1241 = vpop.f32.mrb[0].mxu0
        %v1242 = vpop.f32.mrb[0].mxu0
        %1243 = vdwg.mxu0
        %v1244 = vmul.f32 %v1239, 0.17677669
        %v1245 = vsel %vm1062, %v1244, -1e+09
        %v1246 = vsel %vm1131, %v1245, -inf
        %1247 = vmax.xlane.f32.xlu0 %v1246
        %v1248 = vpop.xlane.xlu0 %1247
        %v1249 = vsub.f32 %v1245, %v1248
        %v1250 = vmul.f32 %v1249, 1.442695
        %v1251 = vpow.pop %v1250
        %v1252 = vsel %vm1131, %v1251, 0.0
        %1253 = vadd.xlane.f32.xlu0 %v1252
        %v1254 = vpop.xlane.xlu0 %1253
        %v1255 = vrcp.pop %v1254
        %v1256 = vmul.f32 %v1251, %v1255
        %v1257 = vpack.c.bf16 %v1256, %v1256
        %1259 = vrot.lane.b32.xlu0 %v1081, 96
        %v1260 = vpop.permute.xlu0 %1259
        %v1262 = vsel %vm1131, %v1257, 0
        %v1265 = vsel %vm1147, %v1260, 0
        %1267 = vmatprep.subr.bf16.mxu0 0
        %1268 = vmatpush1.bf16.msra.mxu0 %v1265
        %1269 = vmatprep.subr.bf16.mxu0 0
        %1270 = vmatpush1.bf16.msra.mxu0 0
        %1271 = vmatprep.subr.bf16.mxu0 0
        %1272 = vmatpush1.bf16.msra.mxu0 0
        %1273 = vmatprep.subr.bf16.mxu0 0
        %1274 = vmatpush1.bf16.msra.mxu0 0
        %1275 = vmatprep.subr.bf16.mxu0 0
        %1276 = vmatpush1.bf16.msra.mxu0 0
        %1277 = vmatprep.subr.bf16.mxu0 0
        %1278 = vmatpush1.bf16.msra.mxu0 0
        %1279 = vmatprep.subr.bf16.mxu0 0
        %1280 = vmatpush1.bf16.msra.mxu0 0
        %1281 = vmatprep.subr.bf16.mxu0 0
        %1282 = vmatpush1.bf16.msra.mxu0 0
        %1283 = vmatprep.subr.bf16.mxu0 0
        %1284 = vmatpush1.bf16.msra.mxu0 0
        %1285 = vmatprep.subr.bf16.mxu0 0
        %1286 = vmatpush1.bf16.msra.mxu0 0
        %1287 = vmatprep.subr.bf16.mxu0 0
        %1288 = vmatpush1.bf16.msra.mxu0 0
        %1289 = vmatprep.subr.bf16.mxu0 0
        %1290 = vmatpush1.bf16.msra.mxu0 0
        %1291 = vmatprep.subr.bf16.mxu0 0
        %1292 = vmatpush1.bf16.msra.mxu0 0
        %1293 = vmatprep.subr.bf16.mxu0 0
        %1294 = vmatpush1.bf16.msra.mxu0 0
        %1295 = vmatprep.subr.bf16.mxu0 0
        %1296 = vmatpush1.bf16.msra.mxu0 0
        %1297 = vmatprep.subr.bf16.mxu0 0
        %1298 = vmatpush1.bf16.msra.mxu0 0
        %1299 = vmatprep.mubr.bf16.mxu0 0
        %1300 = vmatmul.mubr.bf16.gmra.mrb[0].mxu0 %v1262
        %v1301 = vpop.f32.mrb[0].mxu0
        %v1302 = vadd.f32 0.0, %v1301
        %v1303 = vpop.f32.mrb[0].mxu0
        %v1304 = vpop.f32.mrb[0].mxu0
        %v1305 = vpop.f32.mrb[0].mxu0
        %1306 = vdwg.mxu0
        %v1307 = vpack.c.bf16 %v1302, %v1302
        %v1312 = vunpack.c.l.b16 %v1067
        %v1313 = vunpack.c.l.b16 %v1068
        %v1314 = vunpack.c.l.b16 %v1069
        %v1315 = vunpack.c.l.b16 %v1070
        %v1316 = vpack.c.b16 %v1313, %v1312
        %v1317 = vpack.c.b16 %v1315, %v1314
        %v1321 = vsel %vm1082, %v1307, 0
        %1323 = vmatprep.subr.bf16.mxu0 0
        %1324 = vmatpush1.bf16.msra.mxu0 %v1316
        %1325 = vmatprep.subr.bf16.mxu0 0
        %1326 = vmatpush1.bf16.msra.mxu0 %v1317
        %1327 = vmatprep.subr.bf16.mxu0 0
        %1328 = vmatpush1.bf16.msra.mxu0 0
        %1329 = vmatprep.subr.bf16.mxu0 0
        %1330 = vmatpush1.bf16.msra.mxu0 0
        %1331 = vmatprep.subr.bf16.mxu0 0
        %1332 = vmatpush1.bf16.msra.mxu0 0
        %1333 = vmatprep.subr.bf16.mxu0 0
        %1334 = vmatpush1.bf16.msra.mxu0 0
        %1335 = vmatprep.subr.bf16.mxu0 0
        %1336 = vmatpush1.bf16.msra.mxu0 0
        %1337 = vmatprep.subr.bf16.mxu0 0
        %1338 = vmatpush1.bf16.msra.mxu0 0
        %1339 = vmatprep.subr.bf16.mxu0 0
        %1340 = vmatpush1.bf16.msra.mxu0 0
        %1341 = vmatprep.subr.bf16.mxu0 0
        %1342 = vmatpush1.bf16.msra.mxu0 0
        %1343 = vmatprep.subr.bf16.mxu0 0
        %1344 = vmatpush1.bf16.msra.mxu0 0
        %1345 = vmatprep.subr.bf16.mxu0 0
        %1346 = vmatpush1.bf16.msra.mxu0 0
        %1347 = vmatprep.subr.bf16.mxu0 0
        %1348 = vmatpush1.bf16.msra.mxu0 0
        %1349 = vmatprep.subr.bf16.mxu0 0
        %1350 = vmatpush1.bf16.msra.mxu0 0
        %1351 = vmatprep.subr.bf16.mxu0 0
        %1352 = vmatpush1.bf16.msra.mxu0 0
        %1353 = vmatprep.subr.bf16.mxu0 0
        %1354 = vmatpush1.bf16.msra.mxu0 0
        %1355 = vmatprep.mubr.bf16.mxu0 0
        %1356 = vmatmul.mubr.bf16.gmra.mrb[0].mxu0 %v1321
        %v1357 = vpop.f32.mrb[0].mxu0
        %v1358 = vadd.f32 0.0, %v1357
        %v1359 = vpop.f32.mrb[0].mxu0
        %v1360 = vpop.f32.mrb[0].mxu0
        %v1361 = vpop.f32.mrb[0].mxu0
        %1362 = vdwg.mxu0
        %v1367 = vunpack.c.l.b16 %v1063
        %v1368 = vunpack.c.l.b16 %v1064
        %v1369 = vunpack.c.l.b16 %v1065
        %v1370 = vunpack.c.l.b16 %v1066
        %v1371 = vpack.c.b16 %v1368, %v1367
        %v1372 = vpack.c.b16 %v1370, %v1369
        %v1376 = vsel %vm1082, %v1191, 0
        %1378 = vmatprep.subr.bf16.mxu0 0
        %1379 = vmatpush1.bf16.msra.mxu0 %v1371
        %1380 = vmatprep.subr.bf16.mxu0 0
        %1381 = vmatpush1.bf16.msra.mxu0 %v1372
        %1382 = vmatprep.subr.bf16.mxu0 0
        %1383 = vmatpush1.bf16.msra.mxu0 0
        %1384 = vmatprep.subr.bf16.mxu0 0
        %1385 = vmatpush1.bf16.msra.mxu0 0
        %1386 = vmatprep.subr.bf16.mxu0 0
        %1387 = vmatpush1.bf16.msra.mxu0 0
        %1388 = vmatprep.subr.bf16.mxu0 0
        %1389 = vmatpush1.bf16.msra.mxu0 0
        %1390 = vmatprep.subr.bf16.mxu0 0
        %1391 = vmatpush1.bf16.msra.mxu0 0
        %1392 = vmatprep.subr.bf16.mxu0 0
        %1393 = vmatpush1.bf16.msra.mxu0 0
        %1394 = vmatprep.subr.bf16.mxu0 0
        %1395 = vmatpush1.bf16.msra.mxu0 0
        %1396 = vmatprep.subr.bf16.mxu0 0
        %1397 = vmatpush1.bf16.msra.mxu0 0
        %1398 = vmatprep.subr.bf16.mxu0 0
        %1399 = vmatpush1.bf16.msra.mxu0 0
        %1400 = vmatprep.subr.bf16.mxu0 0
        %1401 = vmatpush1.bf16.msra.mxu0 0
        %1402 = vmatprep.subr.bf16.mxu0 0
        %1403 = vmatpush1.bf16.msra.mxu0 0
        %1404 = vmatprep.subr.bf16.mxu0 0
        %1405 = vmatpush1.bf16.msra.mxu0 0
        %1406 = vmatprep.subr.bf16.mxu0 0
        %1407 = vmatpush1.bf16.msra.mxu0 0
        %1408 = vmatprep.subr.bf16.mxu0 0
        %1409 = vmatpush1.bf16.msra.mxu0 0
        %1410 = vmatprep.mubr.bf16.mxu0 0
        %1411 = vmatmul.mubr.bf16.gmra.mrb[0].mxu0 %v1376
        %v1412 = vpop.f32.mrb[0].mxu0
        %v1413 = vadd.f32 %v1358, %v1412
        %v1414 = vpop.f32.mrb[0].mxu0
        %v1415 = vpop.f32.mrb[0].mxu0
        %v1416 = vpop.f32.mrb[0].mxu0
        %1417 = vdwg.mxu0
        %1418 = vrot.lane.b32.xlu0 %v1079, 64
        %v1419 = vpop.permute.xlu0 %1418
        %1420 = vrot.lane.b32.xlu0 %v1080, 64
        %v1421 = vpop.permute.xlu0 %1420
        %v1423 = vsel %vm1082, %v1419, 0
        %v1426 = vsel %vm1082, %v1421, 0
        %1428 = vmatprep.subr.bf16.mxu0 0
        %1429 = vmatpush1.bf16.xpose.msra.mxu0 %v1426
        %1430 = vmatprep.subr.bf16.mxu0 0
        %1431 = vmatpush1.bf16.xpose.msra.mxu0 0
        %1432 = vmatprep.subr.bf16.mxu0 0
        %1433 = vmatpush1.bf16.xpose.msra.mxu0 0
        %1434 = vmatprep.subr.bf16.mxu0 0
        %1435 = vmatpush1.bf16.xpose.msra.mxu0 0
        %1436 = vmatprep.subr.bf16.mxu0 0
        %1437 = vmatpush1.bf16.xpose.msra.mxu0 0
        %1438 = vmatprep.subr.bf16.mxu0 0
        %1439 = vmatpush1.bf16.xpose.msra.mxu0 0
        %1440 = vmatprep.subr.bf16.mxu0 0
        %1441 = vmatpush1.bf16.xpose.msra.mxu0 0
        %1442 = vmatprep.subr.bf16.mxu0 0
        %1443 = vmatpush1.bf16.xpose.msra.mxu0 0
        %1444 = vmatprep.subr.bf16.mxu0 0
        %1445 = vmatpush1.bf16.xpose.msra.mxu0 0
        %1446 = vmatprep.subr.bf16.mxu0 0
        %1447 = vmatpush1.bf16.xpose.msra.mxu0 0
        %1448 = vmatprep.subr.bf16.mxu0 0
        %1449 = vmatpush1.bf16.xpose.msra.mxu0 0
        %1450 = vmatprep.subr.bf16.mxu0 0
        %1451 = vmatpush1.bf16.xpose.msra.mxu0 0
        %1452 = vmatprep.subr.bf16.mxu0 0
        %1453 = vmatpush1.bf16.xpose.msra.mxu0 0
        %1454 = vmatprep.subr.bf16.mxu0 0
        %1455 = vmatpush1.bf16.xpose.msra.mxu0 0
        %1456 = vmatprep.subr.bf16.mxu0 0
        %1457 = vmatpush1.bf16.xpose.msra.mxu0 0
        %1458 = vmatprep.subr.bf16.mxu0 0
        %1459 = vmatpush1.bf16.xpose.msra.mxu0 0
        %1460 = vmatprep.mubr.bf16.mxu0 0
        %1461 = vmatmul.mubr.bf16.gmra.mrb[0].mxu0 %v1423
        %v1462 = vpop.f32.mrb[0].mxu0
        %v1463 = vadd.f32 0.0, %v1462
        %v1464 = vpop.f32.mrb[0].mxu0
        %v1465 = vpop.f32.mrb[0].mxu0
        %v1466 = vpop.f32.mrb[0].mxu0
        %1467 = vdwg.mxu0
        %v1468 = vmul.f32 %v1463, 0.17677669
        %v1469 = vsel %vm1062, %v1468, -1e+09
        %v1470 = vsel %vm1131, %v1469, -inf
        %1471 = vmax.xlane.f32.xlu0 %v1470
        %v1472 = vpop.xlane.xlu0 %1471
        %v1473 = vsub.f32 %v1469, %v1472
        %v1474 = vmul.f32 %v1473, 1.442695
        %v1475 = vpow.pop %v1474
        %v1476 = vsel %vm1131, %v1475, 0.0
        %1477 = vadd.xlane.f32.xlu0 %v1476
        %v1478 = vpop.xlane.xlu0 %1477
        %v1479 = vrcp.pop %v1478
        %v1480 = vmul.f32 %v1475, %v1479
        %v1481 = vpack.c.bf16 %v1480, %v1480
        %1482 = vrot.lane.b32.xlu0 %v1081, 64
        %v1483 = vpop.permute.xlu0 %1482
        %v1485 = vsel %vm1131, %v1481, 0
        %v1488 = vsel %vm1147, %v1483, 0
        %1490 = vmatprep.subr.bf16.mxu0 0
        %1491 = vmatpush1.bf16.msra.mxu0 %v1488
        %1492 = vmatprep.subr.bf16.mxu0 0
        %1493 = vmatpush1.bf16.msra.mxu0 0
        %1494 = vmatprep.subr.bf16.mxu0 0
        %1495 = vmatpush1.bf16.msra.mxu0 0
        %1496 = vmatprep.subr.bf16.mxu0 0
        %1497 = vmatpush1.bf16.msra.mxu0 0
        %1498 = vmatprep.subr.bf16.mxu0 0
        %1499 = vmatpush1.bf16.msra.mxu0 0
        %1500 = vmatprep.subr.bf16.mxu0 0
        %1501 = vmatpush1.bf16.msra.mxu0 0
        %1502 = vmatprep.subr.bf16.mxu0 0
        %1503 = vmatpush1.bf16.msra.mxu0 0
        %1504 = vmatprep.subr.bf16.mxu0 0
        %1505 = vmatpush1.bf16.msra.mxu0 0
        %1506 = vmatprep.subr.bf16.mxu0 0
        %1507 = vmatpush1.bf16.msra.mxu0 0
        %1508 = vmatprep.subr.bf16.mxu0 0
        %1509 = vmatpush1.bf16.msra.mxu0 0
        %1510 = vmatprep.subr.bf16.mxu0 0
        %1511 = vmatpush1.bf16.msra.mxu0 0
        %1512 = vmatprep.subr.bf16.mxu0 0
        %1513 = vmatpush1.bf16.msra.mxu0 0
        %1514 = vmatprep.subr.bf16.mxu0 0
        %1515 = vmatpush1.bf16.msra.mxu0 0
        %1516 = vmatprep.subr.bf16.mxu0 0
        %1517 = vmatpush1.bf16.msra.mxu0 0
        %1518 = vmatprep.subr.bf16.mxu0 0
        %1519 = vmatpush1.bf16.msra.mxu0 0
        %1520 = vmatprep.subr.bf16.mxu0 0
        %1521 = vmatpush1.bf16.msra.mxu0 0
        %1522 = vmatprep.mubr.bf16.mxu0 0
        %1523 = vmatmul.mubr.bf16.gmra.mrb[0].mxu0 %v1485
        %v1524 = vpop.f32.mrb[0].mxu0
        %v1525 = vadd.f32 0.0, %v1524
        %v1526 = vpop.f32.mrb[0].mxu0
        %v1527 = vpop.f32.mrb[0].mxu0
        %v1528 = vpop.f32.mrb[0].mxu0
        %1529 = vdwg.mxu0
        %v1530 = vpack.c.bf16 %v1525, %v1525
        %v1535 = vunpack.c.l.b16 %v1071
        %v1536 = vunpack.c.l.b16 %v1072
        %v1537 = vunpack.c.l.b16 %v1073
        %v1538 = vunpack.c.l.b16 %v1074
        %v1539 = vpack.c.b16 %v1536, %v1535
        %v1540 = vpack.c.b16 %v1538, %v1537
        %v1544 = vsel %vm1082, %v1530, 0
        %1546 = vmatprep.subr.bf16.mxu0 0
        %1547 = vmatpush1.bf16.msra.mxu0 %v1539
        %1548 = vmatprep.subr.bf16.mxu0 0
        %1549 = vmatpush1.bf16.msra.mxu0 %v1540
        %1550 = vmatprep.subr.bf16.mxu0 0
        %1551 = vmatpush1.bf16.msra.mxu0 0
        %1552 = vmatprep.subr.bf16.mxu0 0
        %1553 = vmatpush1.bf16.msra.mxu0 0
        %1554 = vmatprep.subr.bf16.mxu0 0
        %1555 = vmatpush1.bf16.msra.mxu0 0
        %1556 = vmatprep.subr.bf16.mxu0 0
        %1557 = vmatpush1.bf16.msra.mxu0 0
        %1558 = vmatprep.subr.bf16.mxu0 0
        %1559 = vmatpush1.bf16.msra.mxu0 0
        %1560 = vmatprep.subr.bf16.mxu0 0
        %1561 = vmatpush1.bf16.msra.mxu0 0
        %1562 = vmatprep.subr.bf16.mxu0 0
        %1563 = vmatpush1.bf16.msra.mxu0 0
        %1564 = vmatprep.subr.bf16.mxu0 0
        %1565 = vmatpush1.bf16.msra.mxu0 0
        %1566 = vmatprep.subr.bf16.mxu0 0
        %1567 = vmatpush1.bf16.msra.mxu0 0
        %1568 = vmatprep.subr.bf16.mxu0 0
        %1569 = vmatpush1.bf16.msra.mxu0 0
        %1570 = vmatprep.subr.bf16.mxu0 0
        %1571 = vmatpush1.bf16.msra.mxu0 0
        %1572 = vmatprep.subr.bf16.mxu0 0
        %1573 = vmatpush1.bf16.msra.mxu0 0
        %1574 = vmatprep.subr.bf16.mxu0 0
        %1575 = vmatpush1.bf16.msra.mxu0 0
        %1576 = vmatprep.subr.bf16.mxu0 0
        %1577 = vmatpush1.bf16.msra.mxu0 0
        %1578 = vmatprep.mubr.bf16.mxu0 0
        %1579 = vmatmul.mubr.bf16.gmra.mrb[0].mxu0 %v1544
        %v1580 = vpop.f32.mrb[0].mxu0
        %v1581 = vadd.f32 0.0, %v1580
        %v1582 = vpop.f32.mrb[0].mxu0
        %v1583 = vpop.f32.mrb[0].mxu0
        %v1584 = vpop.f32.mrb[0].mxu0
        %1585 = vdwg.mxu0
        %v1586 = vadd.f32 %v1413, %v1581
        %1587 = vrot.lane.b32.xlu0 %v1079, 32
        %v1588 = vpop.permute.xlu0 %1587
        %1589 = vrot.lane.b32.xlu0 %v1080, 32
        %v1590 = vpop.permute.xlu0 %1589
        %v1592 = vsel %vm1082, %v1588, 0
        %v1595 = vsel %vm1082, %v1590, 0
        %1597 = vmatprep.subr.bf16.mxu0 0
        %1598 = vmatpush1.bf16.xpose.msra.mxu0 %v1595
        %1599 = vmatprep.subr.bf16.mxu0 0
        %1600 = vmatpush1.bf16.xpose.msra.mxu0 0
        %1601 = vmatprep.subr.bf16.mxu0 0
        %1602 = vmatpush1.bf16.xpose.msra.mxu0 0
        %1603 = vmatprep.subr.bf16.mxu0 0
        %1604 = vmatpush1.bf16.xpose.msra.mxu0 0
        %1605 = vmatprep.subr.bf16.mxu0 0
        %1606 = vmatpush1.bf16.xpose.msra.mxu0 0
        %1607 = vmatprep.subr.bf16.mxu0 0
        %1608 = vmatpush1.bf16.xpose.msra.mxu0 0
        %1609 = vmatprep.subr.bf16.mxu0 0
        %1610 = vmatpush1.bf16.xpose.msra.mxu0 0
        %1611 = vmatprep.subr.bf16.mxu0 0
        %1612 = vmatpush1.bf16.xpose.msra.mxu0 0
        %1613 = vmatprep.subr.bf16.mxu0 0
        %1614 = vmatpush1.bf16.xpose.msra.mxu0 0
        %1615 = vmatprep.subr.bf16.mxu0 0
        %1616 = vmatpush1.bf16.xpose.msra.mxu0 0
        %1617 = vmatprep.subr.bf16.mxu0 0
        %1618 = vmatpush1.bf16.xpose.msra.mxu0 0
        %1619 = vmatprep.subr.bf16.mxu0 0
        %1620 = vmatpush1.bf16.xpose.msra.mxu0 0
        %1621 = vmatprep.subr.bf16.mxu0 0
        %1622 = vmatpush1.bf16.xpose.msra.mxu0 0
        %1623 = vmatprep.subr.bf16.mxu0 0
        %1624 = vmatpush1.bf16.xpose.msra.mxu0 0
        %1625 = vmatprep.subr.bf16.mxu0 0
        %1626 = vmatpush1.bf16.xpose.msra.mxu0 0
        %1627 = vmatprep.subr.bf16.mxu0 0
        %1628 = vmatpush1.bf16.xpose.msra.mxu0 0
        %1629 = vmatprep.mubr.bf16.mxu0 0
        %1630 = vmatmul.mubr.bf16.gmra.mrb[0].mxu0 %v1592
        %v1631 = vpop.f32.mrb[0].mxu0
        %v1632 = vadd.f32 0.0, %v1631
        %v1633 = vpop.f32.mrb[0].mxu0
        %v1634 = vpop.f32.mrb[0].mxu0
        %v1635 = vpop.f32.mrb[0].mxu0
        %1636 = vdwg.mxu0
        %v1637 = vmul.f32 %v1632, 0.17677669
        %v1638 = vsel %vm1062, %v1637, -1e+09
        %v1639 = vsel %vm1131, %v1638, -inf
        %1640 = vmax.xlane.f32.xlu0 %v1639
        %v1641 = vpop.xlane.xlu0 %1640
        %v1642 = vsub.f32 %v1638, %v1641
        %v1643 = vmul.f32 %v1642, 1.442695
        %v1644 = vpow.pop %v1643
        %v1645 = vsel %vm1131, %v1644, 0.0
        %1646 = vadd.xlane.f32.xlu0 %v1645
        %v1647 = vpop.xlane.xlu0 %1646
        %v1648 = vrcp.pop %v1647
        %v1649 = vmul.f32 %v1644, %v1648
        %v1650 = vpack.c.bf16 %v1649, %v1649
        %1651 = vrot.lane.b32.xlu0 %v1081, 32
        %v1652 = vpop.permute.xlu0 %1651
        %v1654 = vsel %vm1131, %v1650, 0
        %v1657 = vsel %vm1147, %v1652, 0
        %1659 = vmatprep.subr.bf16.mxu0 0
        %1660 = vmatpush1.bf16.msra.mxu0 %v1657
        %1661 = vmatprep.subr.bf16.mxu0 0
        %1662 = vmatpush1.bf16.msra.mxu0 0
        %1663 = vmatprep.subr.bf16.mxu0 0
        %1664 = vmatpush1.bf16.msra.mxu0 0
        %1665 = vmatprep.subr.bf16.mxu0 0
        %1666 = vmatpush1.bf16.msra.mxu0 0
        %1667 = vmatprep.subr.bf16.mxu0 0
        %1668 = vmatpush1.bf16.msra.mxu0 0
        %1669 = vmatprep.subr.bf16.mxu0 0
        %1670 = vmatpush1.bf16.msra.mxu0 0
        %1671 = vmatprep.subr.bf16.mxu0 0
        %1672 = vmatpush1.bf16.msra.mxu0 0
        %1673 = vmatprep.subr.bf16.mxu0 0
        %1674 = vmatpush1.bf16.msra.mxu0 0
        %1675 = vmatprep.subr.bf16.mxu0 0
        %1676 = vmatpush1.bf16.msra.mxu0 0
        %1677 = vmatprep.subr.bf16.mxu0 0
        %1678 = vmatpush1.bf16.msra.mxu0 0
        %1679 = vmatprep.subr.bf16.mxu0 0
        %1680 = vmatpush1.bf16.msra.mxu0 0
        %1681 = vmatprep.subr.bf16.mxu0 0
        %1682 = vmatpush1.bf16.msra.mxu0 0
        %1683 = vmatprep.subr.bf16.mxu0 0
        %1684 = vmatpush1.bf16.msra.mxu0 0
        %1685 = vmatprep.subr.bf16.mxu0 0
        %1686 = vmatpush1.bf16.msra.mxu0 0
        %1687 = vmatprep.subr.bf16.mxu0 0
        %1688 = vmatpush1.bf16.msra.mxu0 0
        %1689 = vmatprep.subr.bf16.mxu0 0
        %1690 = vmatpush1.bf16.msra.mxu0 0
        %1691 = vmatprep.mubr.bf16.mxu0 0
        %1692 = vmatmul.mubr.bf16.gmra.mrb[0].mxu0 %v1654
        %v1693 = vpop.f32.mrb[0].mxu0
        %v1694 = vadd.f32 0.0, %v1693
        %v1695 = vpop.f32.mrb[0].mxu0
        %v1696 = vpop.f32.mrb[0].mxu0
        %v1697 = vpop.f32.mrb[0].mxu0
        %1698 = vdwg.mxu0
        %v1699 = vpack.c.bf16 %v1694, %v1694
        %v1704 = vunpack.c.l.b16 %v1075
        %v1705 = vunpack.c.l.b16 %v1076
        %v1706 = vunpack.c.l.b16 %v1077
        %v1707 = vunpack.c.l.b16 %v1078
        %v1708 = vpack.c.b16 %v1705, %v1704
        %v1709 = vpack.c.b16 %v1707, %v1706
        %v1713 = vsel %vm1082, %v1699, 0
        %1715 = vmatprep.subr.bf16.mxu0 0
        %1716 = vmatpush1.bf16.msra.mxu0 %v1708
        %1717 = vmatprep.subr.bf16.mxu0 0
        %1718 = vmatpush1.bf16.msra.mxu0 %v1709
        %1719 = vmatprep.subr.bf16.mxu0 0
        %1720 = vmatpush1.bf16.msra.mxu0 0
        %1721 = vmatprep.subr.bf16.mxu0 0
        %1722 = vmatpush1.bf16.msra.mxu0 0
        %1723 = vmatprep.subr.bf16.mxu0 0
        %1724 = vmatpush1.bf16.msra.mxu0 0
        %1725 = vmatprep.subr.bf16.mxu0 0
        %1726 = vmatpush1.bf16.msra.mxu0 0
        %1727 = vmatprep.subr.bf16.mxu0 0
        %1728 = vmatpush1.bf16.msra.mxu0 0
        %1729 = vmatprep.subr.bf16.mxu0 0
        %1730 = vmatpush1.bf16.msra.mxu0 0
        %1731 = vmatprep.subr.bf16.mxu0 0
        %1732 = vmatpush1.bf16.msra.mxu0 0
        %1733 = vmatprep.subr.bf16.mxu0 0
        %1734 = vmatpush1.bf16.msra.mxu0 0
        %1735 = vmatprep.subr.bf16.mxu0 0
        %1736 = vmatpush1.bf16.msra.mxu0 0
        %1737 = vmatprep.subr.bf16.mxu0 0
        %1738 = vmatpush1.bf16.msra.mxu0 0
        %1739 = vmatprep.subr.bf16.mxu0 0
        %1740 = vmatpush1.bf16.msra.mxu0 0
        %1741 = vmatprep.subr.bf16.mxu0 0
        %1742 = vmatpush1.bf16.msra.mxu0 0
        %1743 = vmatprep.subr.bf16.mxu0 0
        %1744 = vmatpush1.bf16.msra.mxu0 0
        %1745 = vmatprep.subr.bf16.mxu0 0
        %1746 = vmatpush1.bf16.msra.mxu0 0
        %1747 = vmatprep.mubr.bf16.mxu0 0
        %1748 = vmatmul.mubr.bf16.gmra.mrb[0].mxu0 %v1713
        %v1749 = vpop.f32.mrb[0].mxu0
        %v1750 = vadd.f32 0.0, %v1749
        %v1751 = vpop.f32.mrb[0].mxu0
        %v1752 = vpop.f32.mrb[0].mxu0
        %v1753 = vpop.f32.mrb[0].mxu0
        %1754 = vdwg.mxu0
        %v1755 = vadd.f32 %v1586, %v1750
        %v1756 = vpack.c.bf16 %v1009, %v1009
        %v1757 = vpack.c.bf16 %v1011, %v1011
        %v1758 = vpack.c.bf16 %v1051, %v1051
        %v1760 = vsel %vm1082, %v1756, 0
        %v1763 = vsel %vm1082, %v1757, 0
        %1765 = vmatprep.subr.bf16.mxu0 0
        %1766 = vmatpush1.bf16.xpose.msra.mxu0 %v1763
        %1767 = vmatprep.subr.bf16.mxu0 0
        %1768 = vmatpush1.bf16.xpose.msra.mxu0 0
        %1769 = vmatprep.subr.bf16.mxu0 0
        %1770 = vmatpush1.bf16.xpose.msra.mxu0 0
        %1771 = vmatprep.subr.bf16.mxu0 0
        %1772 = vmatpush1.bf16.xpose.msra.mxu0 0
        %1773 = vmatprep.subr.bf16.mxu0 0
        %1774 = vmatpush1.bf16.xpose.msra.mxu0 0
        %1775 = vmatprep.subr.bf16.mxu0 0
        %1776 = vmatpush1.bf16.xpose.msra.mxu0 0
        %1777 = vmatprep.subr.bf16.mxu0 0
        %1778 = vmatpush1.bf16.xpose.msra.mxu0 0
        %1779 = vmatprep.subr.bf16.mxu0 0
        %1780 = vmatpush1.bf16.xpose.msra.mxu0 0
        %1781 = vmatprep.subr.bf16.mxu0 0
        %1782 = vmatpush1.bf16.xpose.msra.mxu0 0
        %1783 = vmatprep.subr.bf16.mxu0 0
        %1784 = vmatpush1.bf16.xpose.msra.mxu0 0
        %1785 = vmatprep.subr.bf16.mxu0 0
        %1786 = vmatpush1.bf16.xpose.msra.mxu0 0
        %1787 = vmatprep.subr.bf16.mxu0 0
        %1788 = vmatpush1.bf16.xpose.msra.mxu0 0
        %1789 = vmatprep.subr.bf16.mxu0 0
        %1790 = vmatpush1.bf16.xpose.msra.mxu0 0
        %1791 = vmatprep.subr.bf16.mxu0 0
        %1792 = vmatpush1.bf16.xpose.msra.mxu0 0
        %1793 = vmatprep.subr.bf16.mxu0 0
        %1794 = vmatpush1.bf16.xpose.msra.mxu0 0
        %1795 = vmatprep.subr.bf16.mxu0 0
        %1796 = vmatpush1.bf16.xpose.msra.mxu0 0
        %1797 = vmatprep.mubr.bf16.mxu0 0
        %1798 = vmatmul.mubr.bf16.gmra.mrb[0].mxu0 %v1760
        %v1799 = vpop.f32.mrb[0].mxu0
        %v1800 = vadd.f32 0.0, %v1799
        %v1801 = vpop.f32.mrb[0].mxu0
        %v1802 = vpop.f32.mrb[0].mxu0
        %v1803 = vpop.f32.mrb[0].mxu0
        %1804 = vdwg.mxu0
        %v1805 = vmul.f32 %v1800, 0.17677669
        %v1806 = vsel %vm1062, %v1805, -1e+09
        %v1807 = vsel %vm1131, %v1806, -inf
        %1808 = vmax.xlane.f32.xlu0 %v1807
        %v1809 = vpop.xlane.xlu0 %1808
        %v1810 = vsub.f32 %v1806, %v1809
        %v1811 = vmul.f32 %v1810, 1.442695
        %v1812 = vpow.pop %v1811
        %v1813 = vsel %vm1131, %v1812, 0.0
        %1814 = vadd.xlane.f32.xlu0 %v1813
        %v1815 = vpop.xlane.xlu0 %1814
        %v1816 = vrcp.pop %v1815
        %v1817 = vmul.f32 %v1812, %v1816
        %v1818 = vpack.c.bf16 %v1817, %v1817
        %v1820 = vsel %vm1131, %v1818, 0
        %v1823 = vsel %vm1147, %v1758, 0
        %1825 = vmatprep.subr.bf16.mxu0 0
        %1826 = vmatpush1.bf16.msra.mxu0 %v1823
        %1827 = vmatprep.subr.bf16.mxu0 0
        %1828 = vmatpush1.bf16.msra.mxu0 0
        %1829 = vmatprep.subr.bf16.mxu0 0
        %1830 = vmatpush1.bf16.msra.mxu0 0
        %1831 = vmatprep.subr.bf16.mxu0 0
        %1832 = vmatpush1.bf16.msra.mxu0 0
        %1833 = vmatprep.subr.bf16.mxu0 0
        %1834 = vmatpush1.bf16.msra.mxu0 0
        %1835 = vmatprep.subr.bf16.mxu0 0
        %1836 = vmatpush1.bf16.msra.mxu0 0
        %1837 = vmatprep.subr.bf16.mxu0 0
        %1838 = vmatpush1.bf16.msra.mxu0 0
        %1839 = vmatprep.subr.bf16.mxu0 0
        %1840 = vmatpush1.bf16.msra.mxu0 0
        %1841 = vmatprep.subr.bf16.mxu0 0
        %1842 = vmatpush1.bf16.msra.mxu0 0
        %1843 = vmatprep.subr.bf16.mxu0 0
        %1844 = vmatpush1.bf16.msra.mxu0 0
        %1845 = vmatprep.subr.bf16.mxu0 0
        %1846 = vmatpush1.bf16.msra.mxu0 0
        %1847 = vmatprep.subr.bf16.mxu0 0
        %1848 = vmatpush1.bf16.msra.mxu0 0
        %1849 = vmatprep.subr.bf16.mxu0 0
        %1850 = vmatpush1.bf16.msra.mxu0 0
        %1851 = vmatprep.subr.bf16.mxu0 0
        %1852 = vmatpush1.bf16.msra.mxu0 0
        %1853 = vmatprep.subr.bf16.mxu0 0
        %1854 = vmatpush1.bf16.msra.mxu0 0
        %1855 = vmatprep.subr.bf16.mxu0 0
        %1856 = vmatpush1.bf16.msra.mxu0 0
        %1857 = vmatprep.mubr.bf16.mxu0 0
        %1858 = vmatmul.mubr.bf16.gmra.mrb[0].mxu0 %v1820
        %v1859 = vpop.f32.mrb[0].mxu0
        %v1860 = vadd.f32 0.0, %v1859
        %v1861 = vpop.f32.mrb[0].mxu0
        %v1862 = vpop.f32.mrb[0].mxu0
        %v1863 = vpop.f32.mrb[0].mxu0
        %1864 = vdwg.mxu0
        %v1865 = vpack.c.bf16 %v1860, %v1860
        %1867 = vrot.lane.b32.xlu0 %v1756, 96
        %v1868 = vpop.permute.xlu0 %1867
        %1870 = vrot.lane.b32.xlu0 %v1757, 96
        %v1871 = vpop.permute.xlu0 %1870
        %v1873 = vsel %vm1082, %v1868, 0
        %v1876 = vsel %vm1082, %v1871, 0
        %1878 = vmatprep.subr.bf16.mxu0 0
        %1879 = vmatpush1.bf16.xpose.msra.mxu0 %v1876
        %1880 = vmatprep.subr.bf16.mxu0 0
        %1881 = vmatpush1.bf16.xpose.msra.mxu0 0
        %1882 = vmatprep.subr.bf16.mxu0 0
        %1883 = vmatpush1.bf16.xpose.msra.mxu0 0
        %1884 = vmatprep.subr.bf16.mxu0 0
        %1885 = vmatpush1.bf16.xpose.msra.mxu0 0
        %1886 = vmatprep.subr.bf16.mxu0 0
        %1887 = vmatpush1.bf16.xpose.msra.mxu0 0
        %1888 = vmatprep.subr.bf16.mxu0 0
        %1889 = vmatpush1.bf16.xpose.msra.mxu0 0
        %1890 = vmatprep.subr.bf16.mxu0 0
        %1891 = vmatpush1.bf16.xpose.msra.mxu0 0
        %1892 = vmatprep.subr.bf16.mxu0 0
        %1893 = vmatpush1.bf16.xpose.msra.mxu0 0
        %1894 = vmatprep.subr.bf16.mxu0 0
        %1895 = vmatpush1.bf16.xpose.msra.mxu0 0
        %1896 = vmatprep.subr.bf16.mxu0 0
        %1897 = vmatpush1.bf16.xpose.msra.mxu0 0
        %1898 = vmatprep.subr.bf16.mxu0 0
        %1899 = vmatpush1.bf16.xpose.msra.mxu0 0
        %1900 = vmatprep.subr.bf16.mxu0 0
        %1901 = vmatpush1.bf16.xpose.msra.mxu0 0
        %1902 = vmatprep.subr.bf16.mxu0 0
        %1903 = vmatpush1.bf16.xpose.msra.mxu0 0
        %1904 = vmatprep.subr.bf16.mxu0 0
        %1905 = vmatpush1.bf16.xpose.msra.mxu0 0
        %1906 = vmatprep.subr.bf16.mxu0 0
        %1907 = vmatpush1.bf16.xpose.msra.mxu0 0
        %1908 = vmatprep.subr.bf16.mxu0 0
        %1909 = vmatpush1.bf16.xpose.msra.mxu0 0
        %1910 = vmatprep.mubr.bf16.mxu0 0
        %1911 = vmatmul.mubr.bf16.gmra.mrb[0].mxu0 %v1873
        %v1912 = vpop.f32.mrb[0].mxu0
        %v1913 = vadd.f32 0.0, %v1912
        %v1914 = vpop.f32.mrb[0].mxu0
        %v1915 = vpop.f32.mrb[0].mxu0
        %v1916 = vpop.f32.mrb[0].mxu0
        %1917 = vdwg.mxu0
        %v1918 = vmul.f32 %v1913, 0.17677669
        %v1919 = vsel %vm1062, %v1918, -1e+09
        %v1920 = vsel %vm1131, %v1919, -inf
        %1921 = vmax.xlane.f32.xlu0 %v1920
        %v1922 = vpop.xlane.xlu0 %1921
        %v1923 = vsub.f32 %v1919, %v1922
        %v1924 = vmul.f32 %v1923, 1.442695
        %v1925 = vpow.pop %v1924
        %v1926 = vsel %vm1131, %v1925, 0.0
        %1927 = vadd.xlane.f32.xlu0 %v1926
        %v1928 = vpop.xlane.xlu0 %1927
        %v1929 = vrcp.pop %v1928
        %v1930 = vmul.f32 %v1925, %v1929
        %v1931 = vpack.c.bf16 %v1930, %v1930
        %1933 = vrot.lane.b32.xlu0 %v1758, 96
        %v1934 = vpop.permute.xlu0 %1933
        %v1936 = vsel %vm1131, %v1931, 0
        %v1939 = vsel %vm1147, %v1934, 0
        %1941 = vmatprep.subr.bf16.mxu0 0
        %1942 = vmatpush1.bf16.msra.mxu0 %v1939
        %1943 = vmatprep.subr.bf16.mxu0 0
        %1944 = vmatpush1.bf16.msra.mxu0 0
        %1945 = vmatprep.subr.bf16.mxu0 0
        %1946 = vmatpush1.bf16.msra.mxu0 0
        %1947 = vmatprep.subr.bf16.mxu0 0
        %1948 = vmatpush1.bf16.msra.mxu0 0
        %1949 = vmatprep.subr.bf16.mxu0 0
        %1950 = vmatpush1.bf16.msra.mxu0 0
        %1951 = vmatprep.subr.bf16.mxu0 0
        %1952 = vmatpush1.bf16.msra.mxu0 0
        %1953 = vmatprep.subr.bf16.mxu0 0
        %1954 = vmatpush1.bf16.msra.mxu0 0
        %1955 = vmatprep.subr.bf16.mxu0 0
        %1956 = vmatpush1.bf16.msra.mxu0 0
        %1957 = vmatprep.subr.bf16.mxu0 0
        %1958 = vmatpush1.bf16.msra.mxu0 0
        %1959 = vmatprep.subr.bf16.mxu0 0
        %1960 = vmatpush1.bf16.msra.mxu0 0
        %1961 = vmatprep.subr.bf16.mxu0 0
        %1962 = vmatpush1.bf16.msra.mxu0 0
        %1963 = vmatprep.subr.bf16.mxu0 0
        %1964 = vmatpush1.bf16.msra.mxu0 0
        %1965 = vmatprep.subr.bf16.mxu0 0
        %1966 = vmatpush1.bf16.msra.mxu0 0
        %1967 = vmatprep.subr.bf16.mxu0 0
        %1968 = vmatpush1.bf16.msra.mxu0 0
        %1969 = vmatprep.subr.bf16.mxu0 0
        %1970 = vmatpush1.bf16.msra.mxu0 0
        %1971 = vmatprep.subr.bf16.mxu0 0
        %1972 = vmatpush1.bf16.msra.mxu0 0
        %1973 = vmatprep.mubr.bf16.mxu0 0
        %1974 = vmatmul.mubr.bf16.gmra.mrb[0].mxu0 %v1936
        %v1975 = vpop.f32.mrb[0].mxu0
        %v1976 = vadd.f32 0.0, %v1975
        %v1977 = vpop.f32.mrb[0].mxu0
        %v1978 = vpop.f32.mrb[0].mxu0
        %v1979 = vpop.f32.mrb[0].mxu0
        %1980 = vdwg.mxu0
        %v1981 = vpack.c.bf16 %v1976, %v1976
        %v1983 = vsel %vm1082, %v1981, 0
        %1985 = vmatprep.subr.bf16.mxu0 0
        %1986 = vmatpush1.bf16.msra.mxu0 %v1316
        %1987 = vmatprep.subr.bf16.mxu0 0
        %1988 = vmatpush1.bf16.msra.mxu0 %v1317
        %1989 = vmatprep.subr.bf16.mxu0 0
        %1990 = vmatpush1.bf16.msra.mxu0 0
        %1991 = vmatprep.subr.bf16.mxu0 0
        %1992 = vmatpush1.bf16.msra.mxu0 0
        %1993 = vmatprep.subr.bf16.mxu0 0
        %1994 = vmatpush1.bf16.msra.mxu0 0
        %1995 = vmatprep.subr.bf16.mxu0 0
        %1996 = vmatpush1.bf16.msra.mxu0 0
        %1997 = vmatprep.subr.bf16.mxu0 0
        %1998 = vmatpush1.bf16.msra.mxu0 0
        %1999 = vmatprep.subr.bf16.mxu0 0
        %2000 = vmatpush1.bf16.msra.mxu0 0
        %2001 = vmatprep.subr.bf16.mxu0 0
        %2002 = vmatpush1.bf16.msra.mxu0 0
        %2003 = vmatprep.subr.bf16.mxu0 0
        %2004 = vmatpush1.bf16.msra.mxu0 0
        %2005 = vmatprep.subr.bf16.mxu0 0
        %2006 = vmatpush1.bf16.msra.mxu0 0
        %2007 = vmatprep.subr.bf16.mxu0 0
        %2008 = vmatpush1.bf16.msra.mxu0 0
        %2009 = vmatprep.subr.bf16.mxu0 0
        %2010 = vmatpush1.bf16.msra.mxu0 0
        %2011 = vmatprep.subr.bf16.mxu0 0
        %2012 = vmatpush1.bf16.msra.mxu0 0
        %2013 = vmatprep.subr.bf16.mxu0 0
        %2014 = vmatpush1.bf16.msra.mxu0 0
        %2015 = vmatprep.subr.bf16.mxu0 0
        %2016 = vmatpush1.bf16.msra.mxu0 0
        %2017 = vmatprep.mubr.bf16.mxu0 0
        %2018 = vmatmul.mubr.bf16.gmra.mrb[0].mxu0 %v1983
        %v2019 = vpop.f32.mrb[0].mxu0
        %v2020 = vadd.f32 0.0, %v2019
        %v2021 = vpop.f32.mrb[0].mxu0
        %v2022 = vpop.f32.mrb[0].mxu0
        %v2023 = vpop.f32.mrb[0].mxu0
        %2024 = vdwg.mxu0
        %v2026 = vsel %vm1082, %v1865, 0
        %2028 = vmatprep.subr.bf16.mxu0 0
        %2029 = vmatpush1.bf16.msra.mxu0 %v1371
        %2030 = vmatprep.subr.bf16.mxu0 0
        %2031 = vmatpush1.bf16.msra.mxu0 %v1372
        %2032 = vmatprep.subr.bf16.mxu0 0
        %2033 = vmatpush1.bf16.msra.mxu0 0
        %2034 = vmatprep.subr.bf16.mxu0 0
        %2035 = vmatpush1.bf16.msra.mxu0 0
        %2036 = vmatprep.subr.bf16.mxu0 0
        %2037 = vmatpush1.bf16.msra.mxu0 0
        %2038 = vmatprep.subr.bf16.mxu0 0
        %2039 = vmatpush1.bf16.msra.mxu0 0
        %2040 = vmatprep.subr.bf16.mxu0 0
        %2041 = vmatpush1.bf16.msra.mxu0 0
        %2042 = vmatprep.subr.bf16.mxu0 0
        %2043 = vmatpush1.bf16.msra.mxu0 0
        %2044 = vmatprep.subr.bf16.mxu0 0
        %2045 = vmatpush1.bf16.msra.mxu0 0
        %2046 = vmatprep.subr.bf16.mxu0 0
        %2047 = vmatpush1.bf16.msra.mxu0 0
        %2048 = vmatprep.subr.bf16.mxu0 0
        %2049 = vmatpush1.bf16.msra.mxu0 0
        %2050 = vmatprep.subr.bf16.mxu0 0
        %2051 = vmatpush1.bf16.msra.mxu0 0
        %2052 = vmatprep.subr.bf16.mxu0 0
        %2053 = vmatpush1.bf16.msra.mxu0 0
        %2054 = vmatprep.subr.bf16.mxu0 0
        %2055 = vmatpush1.bf16.msra.mxu0 0
        %2056 = vmatprep.subr.bf16.mxu0 0
        %2057 = vmatpush1.bf16.msra.mxu0 0
        %2058 = vmatprep.subr.bf16.mxu0 0
        %2059 = vmatpush1.bf16.msra.mxu0 0
        %2060 = vmatprep.mubr.bf16.mxu0 0
        %2061 = vmatmul.mubr.bf16.gmra.mrb[0].mxu0 %v2026
        %v2062 = vpop.f32.mrb[0].mxu0
        %v2063 = vadd.f32 %v2020, %v2062
        %v2064 = vpop.f32.mrb[0].mxu0
        %v2065 = vpop.f32.mrb[0].mxu0
        %v2066 = vpop.f32.mrb[0].mxu0
        %2067 = vdwg.mxu0
        %2068 = vrot.lane.b32.xlu0 %v1756, 64
        %v2069 = vpop.permute.xlu0 %2068
        %2070 = vrot.lane.b32.xlu0 %v1757, 64
        %v2071 = vpop.permute.xlu0 %2070
        %v2073 = vsel %vm1082, %v2069, 0
        %v2076 = vsel %vm1082, %v2071, 0
        %2078 = vmatprep.subr.bf16.mxu0 0
        %2079 = vmatpush1.bf16.xpose.msra.mxu0 %v2076
        %2080 = vmatprep.subr.bf16.mxu0 0
        %2081 = vmatpush1.bf16.xpose.msra.mxu0 0
        %2082 = vmatprep.subr.bf16.mxu0 0
        %2083 = vmatpush1.bf16.xpose.msra.mxu0 0
        %2084 = vmatprep.subr.bf16.mxu0 0
        %2085 = vmatpush1.bf16.xpose.msra.mxu0 0
        %2086 = vmatprep.subr.bf16.mxu0 0
        %2087 = vmatpush1.bf16.xpose.msra.mxu0 0
        %2088 = vmatprep.subr.bf16.mxu0 0
        %2089 = vmatpush1.bf16.xpose.msra.mxu0 0
        %2090 = vmatprep.subr.bf16.mxu0 0
        %2091 = vmatpush1.bf16.xpose.msra.mxu0 0
        %2092 = vmatprep.subr.bf16.mxu0 0
        %2093 = vmatpush1.bf16.xpose.msra.mxu0 0
        %2094 = vmatprep.subr.bf16.mxu0 0
        %2095 = vmatpush1.bf16.xpose.msra.mxu0 0
        %2096 = vmatprep.subr.bf16.mxu0 0
        %2097 = vmatpush1.bf16.xpose.msra.mxu0 0
        %2098 = vmatprep.subr.bf16.mxu0 0
        %2099 = vmatpush1.bf16.xpose.msra.mxu0 0
        %2100 = vmatprep.subr.bf16.mxu0 0
        %2101 = vmatpush1.bf16.xpose.msra.mxu0 0
        %2102 = vmatprep.subr.bf16.mxu0 0
        %2103 = vmatpush1.bf16.xpose.msra.mxu0 0
        %2104 = vmatprep.subr.bf16.mxu0 0
        %2105 = vmatpush1.bf16.xpose.msra.mxu0 0
        %2106 = vmatprep.subr.bf16.mxu0 0
        %2107 = vmatpush1.bf16.xpose.msra.mxu0 0
        %2108 = vmatprep.subr.bf16.mxu0 0
        %2109 = vmatpush1.bf16.xpose.msra.mxu0 0
        %2110 = vmatprep.mubr.bf16.mxu0 0
        %2111 = vmatmul.mubr.bf16.gmra.mrb[0].mxu0 %v2073
        %v2112 = vpop.f32.mrb[0].mxu0
        %v2113 = vadd.f32 0.0, %v2112
        %v2114 = vpop.f32.mrb[0].mxu0
        %v2115 = vpop.f32.mrb[0].mxu0
        %v2116 = vpop.f32.mrb[0].mxu0
        %2117 = vdwg.mxu0
        %v2118 = vmul.f32 %v2113, 0.17677669
        %v2119 = vsel %vm1062, %v2118, -1e+09
        %v2120 = vsel %vm1131, %v2119, -inf
        %2121 = vmax.xlane.f32.xlu0 %v2120
        %v2122 = vpop.xlane.xlu0 %2121
        %v2123 = vsub.f32 %v2119, %v2122
        %v2124 = vmul.f32 %v2123, 1.442695
        %v2125 = vpow.pop %v2124
        %v2126 = vsel %vm1131, %v2125, 0.0
        %2127 = vadd.xlane.f32.xlu0 %v2126
        %v2128 = vpop.xlane.xlu0 %2127
        %v2129 = vrcp.pop %v2128
        %v2130 = vmul.f32 %v2125, %v2129
        %v2131 = vpack.c.bf16 %v2130, %v2130
        %2132 = vrot.lane.b32.xlu0 %v1758, 64
        %v2133 = vpop.permute.xlu0 %2132
        %v2135 = vsel %vm1131, %v2131, 0
        %v2138 = vsel %vm1147, %v2133, 0
        %2140 = vmatprep.subr.bf16.mxu0 0
        %2141 = vmatpush1.bf16.msra.mxu0 %v2138
        %2142 = vmatprep.subr.bf16.mxu0 0
        %2143 = vmatpush1.bf16.msra.mxu0 0
        %2144 = vmatprep.subr.bf16.mxu0 0
        %2145 = vmatpush1.bf16.msra.mxu0 0
        %2146 = vmatprep.subr.bf16.mxu0 0
        %2147 = vmatpush1.bf16.msra.mxu0 0
        %2148 = vmatprep.subr.bf16.mxu0 0
        %2149 = vmatpush1.bf16.msra.mxu0 0
        %2150 = vmatprep.subr.bf16.mxu0 0
        %2151 = vmatpush1.bf16.msra.mxu0 0
        %2152 = vmatprep.subr.bf16.mxu0 0
        %2153 = vmatpush1.bf16.msra.mxu0 0
        %2154 = vmatprep.subr.bf16.mxu0 0
        %2155 = vmatpush1.bf16.msra.mxu0 0
        %2156 = vmatprep.subr.bf16.mxu0 0
        %2157 = vmatpush1.bf16.msra.mxu0 0
        %2158 = vmatprep.subr.bf16.mxu0 0
        %2159 = vmatpush1.bf16.msra.mxu0 0
        %2160 = vmatprep.subr.bf16.mxu0 0
        %2161 = vmatpush1.bf16.msra.mxu0 0
        %2162 = vmatprep.subr.bf16.mxu0 0
        %2163 = vmatpush1.bf16.msra.mxu0 0
        %2164 = vmatprep.subr.bf16.mxu0 0
        %2165 = vmatpush1.bf16.msra.mxu0 0
        %2166 = vmatprep.subr.bf16.mxu0 0
        %2167 = vmatpush1.bf16.msra.mxu0 0
        %2168 = vmatprep.subr.bf16.mxu0 0
        %2169 = vmatpush1.bf16.msra.mxu0 0
        %2170 = vmatprep.subr.bf16.mxu0 0
        %2171 = vmatpush1.bf16.msra.mxu0 0
        %2172 = vmatprep.mubr.bf16.mxu0 0
        %2173 = vmatmul.mubr.bf16.gmra.mrb[0].mxu0 %v2135
        %v2174 = vpop.f32.mrb[0].mxu0
        %v2175 = vadd.f32 0.0, %v2174
        %v2176 = vpop.f32.mrb[0].mxu0
        %v2177 = vpop.f32.mrb[0].mxu0
        %v2178 = vpop.f32.mrb[0].mxu0
        %2179 = vdwg.mxu0
        %v2180 = vpack.c.bf16 %v2175, %v2175
        %v2182 = vsel %vm1082, %v2180, 0
        %2184 = vmatprep.subr.bf16.mxu0 0
        %2185 = vmatpush1.bf16.msra.mxu0 %v1539
        %2186 = vmatprep.subr.bf16.mxu0 0
        %2187 = vmatpush1.bf16.msra.mxu0 %v1540
        %2188 = vmatprep.subr.bf16.mxu0 0
        %2189 = vmatpush1.bf16.msra.mxu0 0
        %2190 = vmatprep.subr.bf16.mxu0 0
        %2191 = vmatpush1.bf16.msra.mxu0 0
        %2192 = vmatprep.subr.bf16.mxu0 0
        %2193 = vmatpush1.bf16.msra.mxu0 0
        %2194 = vmatprep.subr.bf16.mxu0 0
        %2195 = vmatpush1.bf16.msra.mxu0 0
        %2196 = vmatprep.subr.bf16.mxu0 0
        %2197 = vmatpush1.bf16.msra.mxu0 0
        %2198 = vmatprep.subr.bf16.mxu0 0
        %2199 = vmatpush1.bf16.msra.mxu0 0
        %2200 = vmatprep.subr.bf16.mxu0 0
        %2201 = vmatpush1.bf16.msra.mxu0 0
        %2202 = vmatprep.subr.bf16.mxu0 0
        %2203 = vmatpush1.bf16.msra.mxu0 0
        %2204 = vmatprep.subr.bf16.mxu0 0
        %2205 = vmatpush1.bf16.msra.mxu0 0
        %2206 = vmatprep.subr.bf16.mxu0 0
        %2207 = vmatpush1.bf16.msra.mxu0 0
        %2208 = vmatprep.subr.bf16.mxu0 0
        %2209 = vmatpush1.bf16.msra.mxu0 0
        %2210 = vmatprep.subr.bf16.mxu0 0
        %2211 = vmatpush1.bf16.msra.mxu0 0
        %2212 = vmatprep.subr.bf16.mxu0 0
        %2213 = vmatpush1.bf16.msra.mxu0 0
        %2214 = vmatprep.subr.bf16.mxu0 0
        %2215 = vmatpush1.bf16.msra.mxu0 0
        %2216 = vmatprep.mubr.bf16.mxu0 0
        %2217 = vmatmul.mubr.bf16.gmra.mrb[0].mxu0 %v2182
        %v2218 = vpop.f32.mrb[0].mxu0
        %v2219 = vadd.f32 0.0, %v2218
        %v2220 = vpop.f32.mrb[0].mxu0
        %v2221 = vpop.f32.mrb[0].mxu0
        %v2222 = vpop.f32.mrb[0].mxu0
        %2223 = vdwg.mxu0
        %v2224 = vadd.f32 %v2063, %v2219
        %2225 = vrot.lane.b32.xlu0 %v1756, 32
        %v2226 = vpop.permute.xlu0 %2225
        %2227 = vrot.lane.b32.xlu0 %v1757, 32
        %v2228 = vpop.permute.xlu0 %2227
        %v2230 = vsel %vm1082, %v2226, 0
        %v2233 = vsel %vm1082, %v2228, 0
        %2235 = vmatprep.subr.bf16.mxu0 0
        %2236 = vmatpush1.bf16.xpose.msra.mxu0 %v2233
        %2237 = vmatprep.subr.bf16.mxu0 0
        %2238 = vmatpush1.bf16.xpose.msra.mxu0 0
        %2239 = vmatprep.subr.bf16.mxu0 0
        %2240 = vmatpush1.bf16.xpose.msra.mxu0 0
        %2241 = vmatprep.subr.bf16.mxu0 0
        %2242 = vmatpush1.bf16.xpose.msra.mxu0 0
        %2243 = vmatprep.subr.bf16.mxu0 0
        %2244 = vmatpush1.bf16.xpose.msra.mxu0 0
        %2245 = vmatprep.subr.bf16.mxu0 0
        %2246 = vmatpush1.bf16.xpose.msra.mxu0 0
        %2247 = vmatprep.subr.bf16.mxu0 0
        %2248 = vmatpush1.bf16.xpose.msra.mxu0 0
        %2249 = vmatprep.subr.bf16.mxu0 0
        %2250 = vmatpush1.bf16.xpose.msra.mxu0 0
        %2251 = vmatprep.subr.bf16.mxu0 0
        %2252 = vmatpush1.bf16.xpose.msra.mxu0 0
        %2253 = vmatprep.subr.bf16.mxu0 0
        %2254 = vmatpush1.bf16.xpose.msra.mxu0 0
        %2255 = vmatprep.subr.bf16.mxu0 0
        %2256 = vmatpush1.bf16.xpose.msra.mxu0 0
        %2257 = vmatprep.subr.bf16.mxu0 0
        %2258 = vmatpush1.bf16.xpose.msra.mxu0 0
        %2259 = vmatprep.subr.bf16.mxu0 0
        %2260 = vmatpush1.bf16.xpose.msra.mxu0 0
        %2261 = vmatprep.subr.bf16.mxu0 0
        %2262 = vmatpush1.bf16.xpose.msra.mxu0 0
        %2263 = vmatprep.subr.bf16.mxu0 0
        %2264 = vmatpush1.bf16.xpose.msra.mxu0 0
        %2265 = vmatprep.subr.bf16.mxu0 0
        %2266 = vmatpush1.bf16.xpose.msra.mxu0 0
        %2267 = vmatprep.mubr.bf16.mxu0 0
        %2268 = vmatmul.mubr.bf16.gmra.mrb[0].mxu0 %v2230
        %v2269 = vpop.f32.mrb[0].mxu0
        %v2270 = vadd.f32 0.0, %v2269
        %v2271 = vpop.f32.mrb[0].mxu0
        %v2272 = vpop.f32.mrb[0].mxu0
        %v2273 = vpop.f32.mrb[0].mxu0
        %2274 = vdwg.mxu0
        %v2275 = vmul.f32 %v2270, 0.17677669
        %v2276 = vsel %vm1062, %v2275, -1e+09
        %v2277 = vsel %vm1131, %v2276, -inf
        %2278 = vmax.xlane.f32.xlu0 %v2277
        %v2279 = vpop.xlane.xlu0 %2278
        %v2280 = vsub.f32 %v2276, %v2279
        %v2281 = vmul.f32 %v2280, 1.442695
        %v2282 = vpow.pop %v2281
        %v2283 = vsel %vm1131, %v2282, 0.0
        %2284 = vadd.xlane.f32.xlu0 %v2283
        %v2285 = vpop.xlane.xlu0 %2284
        %v2286 = vrcp.pop %v2285
        %v2287 = vmul.f32 %v2282, %v2286
        %v2288 = vpack.c.bf16 %v2287, %v2287
        %2289 = vrot.lane.b32.xlu0 %v1758, 32
        %v2290 = vpop.permute.xlu0 %2289
        %v2292 = vsel %vm1131, %v2288, 0
        %v2295 = vsel %vm1147, %v2290, 0
        %2297 = vmatprep.subr.bf16.mxu0 0
        %2298 = vmatpush1.bf16.msra.mxu0 %v2295
        %2299 = vmatprep.subr.bf16.mxu0 0
        %2300 = vmatpush1.bf16.msra.mxu0 0
        %2301 = vmatprep.subr.bf16.mxu0 0
        %2302 = vmatpush1.bf16.msra.mxu0 0
        %2303 = vmatprep.subr.bf16.mxu0 0
        %2304 = vmatpush1.bf16.msra.mxu0 0
        %2305 = vmatprep.subr.bf16.mxu0 0
        %2306 = vmatpush1.bf16.msra.mxu0 0
        %2307 = vmatprep.subr.bf16.mxu0 0
        %2308 = vmatpush1.bf16.msra.mxu0 0
        %2309 = vmatprep.subr.bf16.mxu0 0
        %2310 = vmatpush1.bf16.msra.mxu0 0
        %2311 = vmatprep.subr.bf16.mxu0 0
        %2312 = vmatpush1.bf16.msra.mxu0 0
        %2313 = vmatprep.subr.bf16.mxu0 0
        %2314 = vmatpush1.bf16.msra.mxu0 0
        %2315 = vmatprep.subr.bf16.mxu0 0
        %2316 = vmatpush1.bf16.msra.mxu0 0
        %2317 = vmatprep.subr.bf16.mxu0 0
        %2318 = vmatpush1.bf16.msra.mxu0 0
        %2319 = vmatprep.subr.bf16.mxu0 0
        %2320 = vmatpush1.bf16.msra.mxu0 0
        %2321 = vmatprep.subr.bf16.mxu0 0
        %2322 = vmatpush1.bf16.msra.mxu0 0
        %2323 = vmatprep.subr.bf16.mxu0 0
        %2324 = vmatpush1.bf16.msra.mxu0 0
        %2325 = vmatprep.subr.bf16.mxu0 0
        %2326 = vmatpush1.bf16.msra.mxu0 0
        %2327 = vmatprep.subr.bf16.mxu0 0
        %2328 = vmatpush1.bf16.msra.mxu0 0
        %2329 = vmatprep.mubr.bf16.mxu0 0
        %2330 = vmatmul.mubr.bf16.gmra.mrb[0].mxu0 %v2292
        %v2331 = vpop.f32.mrb[0].mxu0
        %v2332 = vadd.f32 0.0, %v2331
        %v2333 = vpop.f32.mrb[0].mxu0
        %v2334 = vpop.f32.mrb[0].mxu0
        %v2335 = vpop.f32.mrb[0].mxu0
        %2336 = vdwg.mxu0
        %v2337 = vpack.c.bf16 %v2332, %v2332
        %v2339 = vsel %vm1082, %v2337, 0
        %2341 = vmatprep.subr.bf16.mxu0 0
        %2342 = vmatpush1.bf16.msra.mxu0 %v1708
        %2343 = vmatprep.subr.bf16.mxu0 0
        %2344 = vmatpush1.bf16.msra.mxu0 %v1709
        %2345 = vmatprep.subr.bf16.mxu0 0
        %2346 = vmatpush1.bf16.msra.mxu0 0
        %2347 = vmatprep.subr.bf16.mxu0 0
        %2348 = vmatpush1.bf16.msra.mxu0 0
        %2349 = vmatprep.subr.bf16.mxu0 0
        %2350 = vmatpush1.bf16.msra.mxu0 0
        %2351 = vmatprep.subr.bf16.mxu0 0
        %2352 = vmatpush1.bf16.msra.mxu0 0
        %2353 = vmatprep.subr.bf16.mxu0 0
        %2354 = vmatpush1.bf16.msra.mxu0 0
        %2355 = vmatprep.subr.bf16.mxu0 0
        %2356 = vmatpush1.bf16.msra.mxu0 0
        %2357 = vmatprep.subr.bf16.mxu0 0
        %2358 = vmatpush1.bf16.msra.mxu0 0
        %2359 = vmatprep.subr.bf16.mxu0 0
        %2360 = vmatpush1.bf16.msra.mxu0 0
        %2361 = vmatprep.subr.bf16.mxu0 0
        %2362 = vmatpush1.bf16.msra.mxu0 0
        %2363 = vmatprep.subr.bf16.mxu0 0
        %2364 = vmatpush1.bf16.msra.mxu0 0
        %2365 = vmatprep.subr.bf16.mxu0 0
        %2366 = vmatpush1.bf16.msra.mxu0 0
        %2367 = vmatprep.subr.bf16.mxu0 0
        %2368 = vmatpush1.bf16.msra.mxu0 0
        %2369 = vmatprep.subr.bf16.mxu0 0
        %2370 = vmatpush1.bf16.msra.mxu0 0
        %2371 = vmatprep.subr.bf16.mxu0 0
        %2372 = vmatpush1.bf16.msra.mxu0 0
        %2373 = vmatprep.mubr.bf16.mxu0 0
        %2374 = vmatmul.mubr.bf16.gmra.mrb[0].mxu0 %v2339
        %v2375 = vpop.f32.mrb[0].mxu0
        %v2376 = vadd.f32 0.0, %v2375
        %v2377 = vpop.f32.mrb[0].mxu0
        %v2378 = vpop.f32.mrb[0].mxu0
        %v2379 = vpop.f32.mrb[0].mxu0
        %2380 = vdwg.mxu0
        %v2381 = vadd.f32 %v2224, %v2376
        %v2382 = vld [vmem:[%s716] sm:$0x1]
        %v2384 = vlaneseq
        %v2385 = vshrl.u32 %v2384, 7
        %v2386 = vsub.s32 0, %v2385
        %v2387 = vrot.slane %v2382, %v2386
        %v2389 = vadd.f32 %v1755, %v2387
        %v2390 = vadd.f32 %v2381, %v2387
        %v2391 = vadd.f32 %v749, %v2389
        %v2392 = vadd.f32 %v750, %v2390
        %v2393 = vld [vmem:[%s719] sm:$0x1]
        %v2394 = vld [vmem:[%s722] sm:$0x1]
        %2395 = vadd.xlane.f32.xlu0 %v2391
        %v2396 = vpop.xlane.xlu0 %2395
        %2397 = vadd.xlane.f32.xlu0 %v2392
        %v2398 = vpop.xlane.xlu0 %2397
        %v2399 = vmul.f32 %v2396, %v757
        %v2400 = vmul.f32 %v2398, %v757
        %v2401 = vsub.f32 %v2391, %v2399
        %v2402 = vsub.f32 %v2392, %v2400
        %v2403 = vmul.f32 %v2401, %v2401
        %v2404 = vmul.f32 %v2402, %v2402
        %2405 = vadd.xlane.f32.xlu0 %v2403
        %v2406 = vpop.xlane.xlu0 %2405
        %2407 = vadd.xlane.f32.xlu0 %v2404
        %v2408 = vpop.xlane.xlu0 %2407
        %v2409 = vmul.f32 %v2406, %v757
        %v2410 = vmul.f32 %v2408, %v757
        %v2411 = vadd.f32 %v2409, 1e-05
        %v2412 = vadd.f32 %v2410, 1e-05
        %v2413 = vrsqrt.pop %v2411
        %v2414 = vrsqrt.pop %v2412
        %v2415 = vmul.f32 %v2401, %v2413
        %v2416 = vmul.f32 %v2402, %v2414
        %v2418 = vlaneseq
        %v2419 = vshrl.u32 %v2418, 7
        %v2420 = vsub.s32 0, %v2419
        %v2421 = vrot.slane %v2393, %v2420
        %v2423 = vmul.f32 %v2415, %v2421
        %v2424 = vmul.f32 %v2416, %v2421
        %v2426 = vlaneseq
        %v2427 = vshrl.u32 %v2426, 7
        %v2428 = vsub.s32 0, %v2427
        %v2429 = vrot.slane %v2394, %v2428
        %v2431 = vadd.f32 %v2423, %v2429
        %v2432 = vadd.f32 %v2424, %v2429
        %v2433 = vpack.c.bf16 %v2432, %v2431
        %v2434 = vld [vmem:[%s597] sm:$0xff]
        %v2435 = vld [vmem:[%s597 + $0x8] sm:$0xff]
        %v2436 = vld [vmem:[%s597 + $0x10] sm:$0xff]
        %v2437 = vld [vmem:[%s597 + $0x18] sm:$0xff]
        %v2438 = vld [vmem:[%s597 + $0x20] sm:$0xff]
        %v2439 = vld [vmem:[%s597 + $0x28] sm:$0xff]
        %v2440 = vld [vmem:[%s597 + $0x30] sm:$0xff]
        %v2441 = vld [vmem:[%s597 + $0x38] sm:$0xff]
        %v2442 = vld [vmem:[%s597 + $0x40] sm:$0xff]
        %v2443 = vld [vmem:[%s597 + $0x48] sm:$0xff]
        %v2444 = vld [vmem:[%s597 + $0x50] sm:$0xff]
        %v2445 = vld [vmem:[%s597 + $0x58] sm:$0xff]
        %v2446 = vld [vmem:[%s597 + $0x60] sm:$0xff]
        %v2447 = vld [vmem:[%s597 + $0x68] sm:$0xff]
        %v2448 = vld [vmem:[%s597 + $0x70] sm:$0xff]
        %v2449 = vld [vmem:[%s597 + $0x78] sm:$0xff]
        %v2450 = vld [vmem:[%s597 + $0x80] sm:$0xff]
        %v2451 = vld [vmem:[%s597 + $0x88] sm:$0xff]
        %v2452 = vld [vmem:[%s597 + $0x90] sm:$0xff]
        %v2453 = vld [vmem:[%s597 + $0x98] sm:$0xff]
        %v2454 = vld [vmem:[%s597 + $0xa0] sm:$0xff]
        %v2455 = vld [vmem:[%s597 + $0xa8] sm:$0xff]
        %v2456 = vld [vmem:[%s597 + $0xb0] sm:$0xff]
        %v2457 = vld [vmem:[%s597 + $0xb8] sm:$0xff]
        %v2458 = vld [vmem:[%s597 + $0xc0] sm:$0xff]
        %v2459 = vld [vmem:[%s597 + $0xc8] sm:$0xff]
        %v2460 = vld [vmem:[%s597 + $0xd0] sm:$0xff]
        %v2461 = vld [vmem:[%s597 + $0xd8] sm:$0xff]
        %v2462 = vld [vmem:[%s597 + $0xe0] sm:$0xff]
        %v2463 = vld [vmem:[%s597 + $0xe8] sm:$0xff]
        %v2464 = vld [vmem:[%s597 + $0xf0] sm:$0xff]
        %v2465 = vld [vmem:[%s597 + $0xf8] sm:$0xff]
        %v2466 = vld [vmem:[%s726] sm:$0xf]
        %v2468 = vlaneseq
        %v2469 = vshrl.u32 %v2468, 7
        %v2470 = vsub.s32 0, %v2469
        %v2471 = vrot.slane %v2466, %v2470
        %v2472 = vlaneseq
        %v2473 = vshrl.u32 %v2472, 7
        %v2474 = vsub.s32 1, %v2473
        %v2475 = vrot.slane %v2466, %v2474
        %v2476 = vlaneseq
        %v2477 = vshrl.u32 %v2476, 7
        %v2478 = vsub.s32 2, %v2477
        %v2479 = vrot.slane %v2466, %v2478
        %v2480 = vlaneseq
        %v2481 = vshrl.u32 %v2480, 7
        %v2482 = vsub.s32 3, %v2481
        %v2483 = vrot.slane %v2466, %v2482
        %v2520 = vunpack.c.l.b16 %v2434
        %v2521 = vunpack.c.h.b16 %v2434
        %v2522 = vunpack.c.l.b16 %v2435
        %v2523 = vunpack.c.h.b16 %v2435
        %v2524 = vunpack.c.l.b16 %v2436
        %v2525 = vunpack.c.h.b16 %v2436
        %v2526 = vunpack.c.l.b16 %v2437
        %v2527 = vunpack.c.h.b16 %v2437
        %v2528 = vunpack.c.l.b16 %v2438
        %v2529 = vunpack.c.h.b16 %v2438
        %v2530 = vunpack.c.l.b16 %v2439
        %v2531 = vunpack.c.h.b16 %v2439
        %v2532 = vunpack.c.l.b16 %v2440
        %v2533 = vunpack.c.h.b16 %v2440
        %v2534 = vunpack.c.l.b16 %v2441
        %v2535 = vunpack.c.h.b16 %v2441
        %v2536 = vunpack.c.l.b16 %v2442
        %v2537 = vunpack.c.h.b16 %v2442
        %v2538 = vunpack.c.l.b16 %v2443
        %v2539 = vunpack.c.h.b16 %v2443
        %v2540 = vunpack.c.l.b16 %v2444
        %v2541 = vunpack.c.h.b16 %v2444
        %v2542 = vunpack.c.l.b16 %v2445
        %v2543 = vunpack.c.h.b16 %v2445
        %v2544 = vunpack.c.l.b16 %v2446
        %v2545 = vunpack.c.h.b16 %v2446
        %v2546 = vunpack.c.l.b16 %v2447
        %v2547 = vunpack.c.h.b16 %v2447
        %v2548 = vunpack.c.l.b16 %v2448
        %v2549 = vunpack.c.h.b16 %v2448
        %v2550 = vunpack.c.l.b16 %v2449
        %v2551 = vunpack.c.h.b16 %v2449
        %v2552 = vunpack.c.l.b16 %v2450
        %v2553 = vunpack.c.h.b16 %v2450
        %v2554 = vunpack.c.l.b16 %v2451
        %v2555 = vunpack.c.h.b16 %v2451
        %v2556 = vunpack.c.l.b16 %v2452
        %v2557 = vunpack.c.h.b16 %v2452
        %v2558 = vunpack.c.l.b16 %v2453
        %v2559 = vunpack.c.h.b16 %v2453
        %v2560 = vunpack.c.l.b16 %v2454
        %v2561 = vunpack.c.h.b16 %v2454
        %v2562 = vunpack.c.l.b16 %v2455
        %v2563 = vunpack.c.h.b16 %v2455
        %v2564 = vunpack.c.l.b16 %v2456
        %v2565 = vunpack.c.h.b16 %v2456
        %v2566 = vunpack.c.l.b16 %v2457
        %v2567 = vunpack.c.h.b16 %v2457
        %v2568 = vunpack.c.l.b16 %v2458
        %v2569 = vunpack.c.h.b16 %v2458
        %v2570 = vunpack.c.l.b16 %v2459
        %v2571 = vunpack.c.h.b16 %v2459
        %v2572 = vunpack.c.l.b16 %v2460
        %v2573 = vunpack.c.h.b16 %v2460
        %v2574 = vunpack.c.l.b16 %v2461
        %v2575 = vunpack.c.h.b16 %v2461
        %v2576 = vunpack.c.l.b16 %v2462
        %v2577 = vunpack.c.h.b16 %v2462
        %v2578 = vunpack.c.l.b16 %v2463
        %v2579 = vunpack.c.h.b16 %v2463
        %v2580 = vunpack.c.l.b16 %v2464
        %v2581 = vunpack.c.h.b16 %v2464
        %v2582 = vunpack.c.l.b16 %v2465
        %v2583 = vunpack.c.h.b16 %v2465
        %v2584 = vpack.c.b16 %v2524, %v2520
        %v2585 = vpack.c.b16 %v2525, %v2521
        %v2586 = vpack.c.b16 %v2526, %v2522
        %v2587 = vpack.c.b16 %v2527, %v2523
        %v2588 = vpack.c.b16 %v2532, %v2528
        %v2589 = vpack.c.b16 %v2533, %v2529
        %v2590 = vpack.c.b16 %v2534, %v2530
        %v2591 = vpack.c.b16 %v2535, %v2531
        %v2592 = vpack.c.b16 %v2540, %v2536
        %v2593 = vpack.c.b16 %v2541, %v2537
        %v2594 = vpack.c.b16 %v2542, %v2538
        %v2595 = vpack.c.b16 %v2543, %v2539
        %v2596 = vpack.c.b16 %v2548, %v2544
        %v2597 = vpack.c.b16 %v2549, %v2545
        %v2598 = vpack.c.b16 %v2550, %v2546
        %v2599 = vpack.c.b16 %v2551, %v2547
        %v2600 = vpack.c.b16 %v2556, %v2552
        %v2601 = vpack.c.b16 %v2557, %v2553
        %v2602 = vpack.c.b16 %v2558, %v2554
        %v2603 = vpack.c.b16 %v2559, %v2555
        %v2604 = vpack.c.b16 %v2564, %v2560
        %v2605 = vpack.c.b16 %v2565, %v2561
        %v2606 = vpack.c.b16 %v2566, %v2562
        %v2607 = vpack.c.b16 %v2567, %v2563
        %v2608 = vpack.c.b16 %v2572, %v2568
        %v2609 = vpack.c.b16 %v2573, %v2569
        %v2610 = vpack.c.b16 %v2574, %v2570
        %v2611 = vpack.c.b16 %v2575, %v2571
        %v2612 = vpack.c.b16 %v2580, %v2576
        %v2613 = vpack.c.b16 %v2581, %v2577
        %v2614 = vpack.c.b16 %v2582, %v2578
        %v2615 = vpack.c.b16 %v2583, %v2579
        %2648 = vmatprep.subr.bf16.mxu0 %v2585
        %2649 = vmatpush1.bf16.msra.mxu0 %v2584
        %2650 = vmatprep.subr.bf16.mxu0 %v2589
        %2651 = vmatpush1.bf16.msra.mxu0 %v2588
        %2652 = vmatprep.subr.bf16.mxu0 %v2593
        %2653 = vmatpush1.bf16.msra.mxu0 %v2592
        %2654 = vmatprep.subr.bf16.mxu0 %v2597
        %2655 = vmatpush1.bf16.msra.mxu0 %v2596
        %2656 = vmatprep.subr.bf16.mxu0 %v2601
        %2657 = vmatpush1.bf16.msra.mxu0 %v2600
        %2658 = vmatprep.subr.bf16.mxu0 %v2605
        %2659 = vmatpush1.bf16.msra.mxu0 %v2604
        %2660 = vmatprep.subr.bf16.mxu0 %v2609
        %2661 = vmatpush1.bf16.msra.mxu0 %v2608
        %2662 = vmatprep.subr.bf16.mxu0 %v2613
        %2663 = vmatpush1.bf16.msra.mxu0 %v2612
        %2664 = vmatprep.subr.bf16.mxu0 0
        %2665 = vmatpush1.bf16.msra.mxu0 0
        %2666 = vmatprep.subr.bf16.mxu0 0
        %2667 = vmatpush1.bf16.msra.mxu0 0
        %2668 = vmatprep.subr.bf16.mxu0 0
        %2669 = vmatpush1.bf16.msra.mxu0 0
        %2670 = vmatprep.subr.bf16.mxu0 0
        %2671 = vmatpush1.bf16.msra.mxu0 0
        %2672 = vmatprep.subr.bf16.mxu0 0
        %2673 = vmatpush1.bf16.msra.mxu0 0
        %2674 = vmatprep.subr.bf16.mxu0 0
        %2675 = vmatpush1.bf16.msra.mxu0 0
        %2676 = vmatprep.subr.bf16.mxu0 0
        %2677 = vmatpush1.bf16.msra.mxu0 0
        %2678 = vmatprep.subr.bf16.mxu0 0
        %2679 = vmatpush1.bf16.msra.mxu0 0
        %2680 = vmatprep.mubr.bf16.mxu0 0
        %2681 = vmatmul.mubr.bf16.gmra.mrb[0].mxu0 %v2433
        %v2682 = vpop.f32.mrb[0].mxu0
        %v2683 = vadd.f32 %v2471, %v2682
        %v2684 = vpop.f32.mrb[0].mxu0
        %v2685 = vadd.f32 %v2475, %v2684
        %v2686 = vpop.f32.mrb[0].mxu0
        %v2687 = vadd.f32 %v2471, %v2686
        %v2688 = vpop.f32.mrb[0].mxu0
        %v2689 = vadd.f32 %v2475, %v2688
        %2690 = vdwg.mxu0
        %2691 = vmatprep.subr.bf16.mxu0 %v2587
        %2692 = vmatpush1.bf16.msra.mxu0 %v2586
        %2693 = vmatprep.subr.bf16.mxu0 %v2591
        %2694 = vmatpush1.bf16.msra.mxu0 %v2590
        %2695 = vmatprep.subr.bf16.mxu0 %v2595
        %2696 = vmatpush1.bf16.msra.mxu0 %v2594
        %2697 = vmatprep.subr.bf16.mxu0 %v2599
        %2698 = vmatpush1.bf16.msra.mxu0 %v2598
        %2699 = vmatprep.subr.bf16.mxu0 %v2603
        %2700 = vmatpush1.bf16.msra.mxu0 %v2602
        %2701 = vmatprep.subr.bf16.mxu0 %v2607
        %2702 = vmatpush1.bf16.msra.mxu0 %v2606
        %2703 = vmatprep.subr.bf16.mxu0 %v2611
        %2704 = vmatpush1.bf16.msra.mxu0 %v2610
        %2705 = vmatprep.subr.bf16.mxu0 %v2615
        %2706 = vmatpush1.bf16.msra.mxu0 %v2614
        %2707 = vmatprep.subr.bf16.mxu0 0
        %2708 = vmatpush1.bf16.msra.mxu0 0
        %2709 = vmatprep.subr.bf16.mxu0 0
        %2710 = vmatpush1.bf16.msra.mxu0 0
        %2711 = vmatprep.subr.bf16.mxu0 0
        %2712 = vmatpush1.bf16.msra.mxu0 0
        %2713 = vmatprep.subr.bf16.mxu0 0
        %2714 = vmatpush1.bf16.msra.mxu0 0
        %2715 = vmatprep.subr.bf16.mxu0 0
        %2716 = vmatpush1.bf16.msra.mxu0 0
        %2717 = vmatprep.subr.bf16.mxu0 0
        %2718 = vmatpush1.bf16.msra.mxu0 0
        %2719 = vmatprep.subr.bf16.mxu0 0
        %2720 = vmatpush1.bf16.msra.mxu0 0
        %2721 = vmatprep.subr.bf16.mxu0 0
        %2722 = vmatpush1.bf16.msra.mxu0 0
        %2723 = vmatprep.mubr.bf16.mxu0 0
        %2724 = vmatmul.mubr.bf16.gmra.mrb[0].mxu0 %v2433
        %v2725 = vpop.f32.mrb[0].mxu0
        %v2726 = vadd.f32 %v2479, %v2725
        %v2727 = vpop.f32.mrb[0].mxu0
        %v2728 = vadd.f32 %v2483, %v2727
        %v2729 = vpop.f32.mrb[0].mxu0
        %v2730 = vadd.f32 %v2479, %v2729
        %v2731 = vpop.f32.mrb[0].mxu0
        %v2732 = vadd.f32 %v2483, %v2731
        %2733 = vdwg.mxu0
        %v2734 = vmul.f32 %v2683, 0.5
        %v2735 = vmul.f32 %v2685, 0.5
        %v2736 = vmul.f32 %v2726, 0.5
        %v2737 = vmul.f32 %v2728, 0.5
        %v2738 = vmul.f32 %v2687, 0.5
        %v2739 = vmul.f32 %v2689, 0.5
        %v2740 = vmul.f32 %v2730, 0.5
        %v2741 = vmul.f32 %v2732, 0.5
        %v2742 = vmul.f32 %v2683, 0.70710677
        %v2743 = vmul.f32 %v2685, 0.70710677
        %v2744 = vmul.f32 %v2726, 0.70710677
        %v2745 = vmul.f32 %v2728, 0.70710677
        %v2746 = vmul.f32 %v2687, 0.70710677
        %v2747 = vmul.f32 %v2689, 0.70710677
        %v2748 = vmul.f32 %v2730, 0.70710677
        %v2749 = vmul.f32 %v2732, 0.70710677
        %v2750 = verf.f32.pop %v2742
        %v2751 = verf.f32.pop %v2743
        %v2752 = verf.f32.pop %v2744
        %v2753 = verf.f32.pop %v2745
        %v2754 = verf.f32.pop %v2746
        %v2755 = verf.f32.pop %v2747
        %v2756 = verf.f32.pop %v2748
        %v2757 = verf.f32.pop %v2749
        %v2758 = vadd.f32 %v2750, 1.0
        %v2759 = vadd.f32 %v2751, 1.0
        %v2760 = vadd.f32 %v2752, 1.0
        %v2761 = vadd.f32 %v2753, 1.0
        %v2762 = vadd.f32 %v2754, 1.0
        %v2763 = vadd.f32 %v2755, 1.0
        %v2764 = vadd.f32 %v2756, 1.0
        %v2765 = vadd.f32 %v2757, 1.0
        %v2766 = vmul.f32 %v2734, %v2758
        %v2767 = vmul.f32 %v2735, %v2759
        %v2768 = vmul.f32 %v2736, %v2760
        %v2769 = vmul.f32 %v2737, %v2761
        %v2770 = vmul.f32 %v2738, %v2762
        %v2771 = vmul.f32 %v2739, %v2763
        %v2772 = vmul.f32 %v2740, %v2764
        %v2773 = vmul.f32 %v2741, %v2765
        %v2774 = vpack.c.bf16 %v2770, %v2766
        %v2775 = vpack.c.bf16 %v2771, %v2767
        %v2776 = vpack.c.bf16 %v2772, %v2768
        %v2777 = vpack.c.bf16 %v2773, %v2769
        %v2778 = vld [vmem:[%s606] sm:$0xf]
        %v2779 = vld [vmem:[%s606 + $0x4] sm:$0xf]
        %v2780 = vld [vmem:[%s606 + $0x8] sm:$0xf]
        %v2781 = vld [vmem:[%s606 + $0xc] sm:$0xf]
        %v2782 = vld [vmem:[%s606 + $0x10] sm:$0xf]
        %v2783 = vld [vmem:[%s606 + $0x14] sm:$0xf]
        %v2784 = vld [vmem:[%s606 + $0x18] sm:$0xf]
        %v2785 = vld [vmem:[%s606 + $0x1c] sm:$0xf]
        %v2786 = vld [vmem:[%s606 + $0x20] sm:$0xf]
        %v2787 = vld [vmem:[%s606 + $0x24] sm:$0xf]
        %v2788 = vld [vmem:[%s606 + $0x28] sm:$0xf]
        %v2789 = vld [vmem:[%s606 + $0x2c] sm:$0xf]
        %v2790 = vld [vmem:[%s606 + $0x30] sm:$0xf]
        %v2791 = vld [vmem:[%s606 + $0x34] sm:$0xf]
        %v2792 = vld [vmem:[%s606 + $0x38] sm:$0xf]
        %v2793 = vld [vmem:[%s606 + $0x3c] sm:$0xf]
        %v2794 = vld [vmem:[%s606 + $0x40] sm:$0xf]
        %v2795 = vld [vmem:[%s606 + $0x44] sm:$0xf]
        %v2796 = vld [vmem:[%s606 + $0x48] sm:$0xf]
        %v2797 = vld [vmem:[%s606 + $0x4c] sm:$0xf]
        %v2798 = vld [vmem:[%s606 + $0x50] sm:$0xf]
        %v2799 = vld [vmem:[%s606 + $0x54] sm:$0xf]
        %v2800 = vld [vmem:[%s606 + $0x58] sm:$0xf]
        %v2801 = vld [vmem:[%s606 + $0x5c] sm:$0xf]
        %v2802 = vld [vmem:[%s606 + $0x60] sm:$0xf]
        %v2803 = vld [vmem:[%s606 + $0x64] sm:$0xf]
        %v2804 = vld [vmem:[%s606 + $0x68] sm:$0xf]
        %v2805 = vld [vmem:[%s606 + $0x6c] sm:$0xf]
        %v2806 = vld [vmem:[%s606 + $0x70] sm:$0xf]
        %v2807 = vld [vmem:[%s606 + $0x74] sm:$0xf]
        %v2808 = vld [vmem:[%s606 + $0x78] sm:$0xf]
        %v2809 = vld [vmem:[%s606 + $0x7c] sm:$0xf]
        %v2810 = vld [vmem:[%s606 + $0x80] sm:$0xf]
        %v2811 = vld [vmem:[%s606 + $0x84] sm:$0xf]
        %v2812 = vld [vmem:[%s606 + $0x88] sm:$0xf]
        %v2813 = vld [vmem:[%s606 + $0x8c] sm:$0xf]
        %v2814 = vld [vmem:[%s606 + $0x90] sm:$0xf]
        %v2815 = vld [vmem:[%s606 + $0x94] sm:$0xf]
        %v2816 = vld [vmem:[%s606 + $0x98] sm:$0xf]
        %v2817 = vld [vmem:[%s606 + $0x9c] sm:$0xf]
        %v2818 = vld [vmem:[%s606 + $0xa0] sm:$0xf]
        %v2819 = vld [vmem:[%s606 + $0xa4] sm:$0xf]
        %v2820 = vld [vmem:[%s606 + $0xa8] sm:$0xf]
        %v2821 = vld [vmem:[%s606 + $0xac] sm:$0xf]
        %v2822 = vld [vmem:[%s606 + $0xb0] sm:$0xf]
        %v2823 = vld [vmem:[%s606 + $0xb4] sm:$0xf]
        %v2824 = vld [vmem:[%s606 + $0xb8] sm:$0xf]
        %v2825 = vld [vmem:[%s606 + $0xbc] sm:$0xf]
        %v2826 = vld [vmem:[%s606 + $0xc0] sm:$0xf]
        %v2827 = vld [vmem:[%s606 + $0xc4] sm:$0xf]
        %v2828 = vld [vmem:[%s606 + $0xc8] sm:$0xf]
        %v2829 = vld [vmem:[%s606 + $0xcc] sm:$0xf]
        %v2830 = vld [vmem:[%s606 + $0xd0] sm:$0xf]
        %v2831 = vld [vmem:[%s606 + $0xd4] sm:$0xf]
        %v2832 = vld [vmem:[%s606 + $0xd8] sm:$0xf]
        %v2833 = vld [vmem:[%s606 + $0xdc] sm:$0xf]
        %v2834 = vld [vmem:[%s606 + $0xe0] sm:$0xf]
        %v2835 = vld [vmem:[%s606 + $0xe4] sm:$0xf]
        %v2836 = vld [vmem:[%s606 + $0xe8] sm:$0xf]
        %v2837 = vld [vmem:[%s606 + $0xec] sm:$0xf]
        %v2838 = vld [vmem:[%s606 + $0xf0] sm:$0xf]
        %v2839 = vld [vmem:[%s606 + $0xf4] sm:$0xf]
        %v2840 = vld [vmem:[%s606 + $0xf8] sm:$0xf]
        %v2841 = vld [vmem:[%s606 + $0xfc] sm:$0xf]
        %v2842 = vld [vmem:[%s729] sm:$0x1]
        %v2844 = vlaneseq
        %v2845 = vshrl.u32 %v2844, 7
        %v2846 = vsub.s32 0, %v2845
        %v2847 = vrot.slane %v2842, %v2846
        %v2913 = vunpack.c.l.b16 %v2778
        %v2914 = vunpack.c.l.b16 %v2779
        %v2915 = vunpack.c.l.b16 %v2780
        %v2916 = vunpack.c.l.b16 %v2781
        %v2917 = vunpack.c.l.b16 %v2782
        %v2918 = vunpack.c.l.b16 %v2783
        %v2919 = vunpack.c.l.b16 %v2784
        %v2920 = vunpack.c.l.b16 %v2785
        %v2921 = vunpack.c.l.b16 %v2786
        %v2922 = vunpack.c.l.b16 %v2787
        %v2923 = vunpack.c.l.b16 %v2788
        %v2924 = vunpack.c.l.b16 %v2789
        %v2925 = vunpack.c.l.b16 %v2790
        %v2926 = vunpack.c.l.b16 %v2791
        %v2927 = vunpack.c.l.b16 %v2792
        %v2928 = vunpack.c.l.b16 %v2793
        %v2929 = vunpack.c.l.b16 %v2794
        %v2930 = vunpack.c.l.b16 %v2795
        %v2931 = vunpack.c.l.b16 %v2796
        %v2932 = vunpack.c.l.b16 %v2797
        %v2933 = vunpack.c.l.b16 %v2798
        %v2934 = vunpack.c.l.b16 %v2799
        %v2935 = vunpack.c.l.b16 %v2800
        %v2936 = vunpack.c.l.b16 %v2801
        %v2937 = vunpack.c.l.b16 %v2802
        %v2938 = vunpack.c.l.b16 %v2803
        %v2939 = vunpack.c.l.b16 %v2804
        %v2940 = vunpack.c.l.b16 %v2805
        %v2941 = vunpack.c.l.b16 %v2806
        %v2942 = vunpack.c.l.b16 %v2807
        %v2943 = vunpack.c.l.b16 %v2808
        %v2944 = vunpack.c.l.b16 %v2809
        %v2945 = vunpack.c.l.b16 %v2810
        %v2946 = vunpack.c.l.b16 %v2811
        %v2947 = vunpack.c.l.b16 %v2812
        %v2948 = vunpack.c.l.b16 %v2813
        %v2949 = vunpack.c.l.b16 %v2814
        %v2950 = vunpack.c.l.b16 %v2815
        %v2951 = vunpack.c.l.b16 %v2816
        %v2952 = vunpack.c.l.b16 %v2817
        %v2953 = vunpack.c.l.b16 %v2818
        %v2954 = vunpack.c.l.b16 %v2819
        %v2955 = vunpack.c.l.b16 %v2820
        %v2956 = vunpack.c.l.b16 %v2821
        %v2957 = vunpack.c.l.b16 %v2822
        %v2958 = vunpack.c.l.b16 %v2823
        %v2959 = vunpack.c.l.b16 %v2824
        %v2960 = vunpack.c.l.b16 %v2825
        %v2961 = vunpack.c.l.b16 %v2826
        %v2962 = vunpack.c.l.b16 %v2827
        %v2963 = vunpack.c.l.b16 %v2828
        %v2964 = vunpack.c.l.b16 %v2829
        %v2965 = vunpack.c.l.b16 %v2830
        %v2966 = vunpack.c.l.b16 %v2831
        %v2967 = vunpack.c.l.b16 %v2832
        %v2968 = vunpack.c.l.b16 %v2833
        %v2969 = vunpack.c.l.b16 %v2834
        %v2970 = vunpack.c.l.b16 %v2835
        %v2971 = vunpack.c.l.b16 %v2836
        %v2972 = vunpack.c.l.b16 %v2837
        %v2973 = vunpack.c.l.b16 %v2838
        %v2974 = vunpack.c.l.b16 %v2839
        %v2975 = vunpack.c.l.b16 %v2840
        %v2976 = vunpack.c.l.b16 %v2841
        %v2977 = vpack.c.b16 %v2914, %v2913
        %v2978 = vpack.c.b16 %v2916, %v2915
        %v2979 = vpack.c.b16 %v2918, %v2917
        %v2980 = vpack.c.b16 %v2920, %v2919
        %v2981 = vpack.c.b16 %v2922, %v2921
        %v2982 = vpack.c.b16 %v2924, %v2923
        %v2983 = vpack.c.b16 %v2926, %v2925
        %v2984 = vpack.c.b16 %v2928, %v2927
        %v2985 = vpack.c.b16 %v2930, %v2929
        %v2986 = vpack.c.b16 %v2932, %v2931
        %v2987 = vpack.c.b16 %v2934, %v2933
        %v2988 = vpack.c.b16 %v2936, %v2935
        %v2989 = vpack.c.b16 %v2938, %v2937
        %v2990 = vpack.c.b16 %v2940, %v2939
        %v2991 = vpack.c.b16 %v2942, %v2941
        %v2992 = vpack.c.b16 %v2944, %v2943
        %v2993 = vpack.c.b16 %v2946, %v2945
        %v2994 = vpack.c.b16 %v2948, %v2947
        %v2995 = vpack.c.b16 %v2950, %v2949
        %v2996 = vpack.c.b16 %v2952, %v2951
        %v2997 = vpack.c.b16 %v2954, %v2953
        %v2998 = vpack.c.b16 %v2956, %v2955
        %v2999 = vpack.c.b16 %v2958, %v2957
        %v3000 = vpack.c.b16 %v2960, %v2959
        %v3001 = vpack.c.b16 %v2962, %v2961
        %v3002 = vpack.c.b16 %v2964, %v2963
        %v3003 = vpack.c.b16 %v2966, %v2965
        %v3004 = vpack.c.b16 %v2968, %v2967
        %v3005 = vpack.c.b16 %v2970, %v2969
        %v3006 = vpack.c.b16 %v2972, %v2971
        %v3007 = vpack.c.b16 %v2974, %v2973
        %v3008 = vpack.c.b16 %v2976, %v2975
        %3041 = vmatprep.subr.bf16.mxu0 0
        %3042 = vmatpush1.bf16.msra.mxu0 %v2977
        %3043 = vmatprep.subr.bf16.mxu0 0
        %3044 = vmatpush1.bf16.msra.mxu0 %v2978
        %3045 = vmatprep.subr.bf16.mxu0 0
        %3046 = vmatpush1.bf16.msra.mxu0 %v2979
        %3047 = vmatprep.subr.bf16.mxu0 0
        %3048 = vmatpush1.bf16.msra.mxu0 %v2980
        %3049 = vmatprep.subr.bf16.mxu0 0
        %3050 = vmatpush1.bf16.msra.mxu0 %v2981
        %3051 = vmatprep.subr.bf16.mxu0 0
        %3052 = vmatpush1.bf16.msra.mxu0 %v2982
        %3053 = vmatprep.subr.bf16.mxu0 0
        %3054 = vmatpush1.bf16.msra.mxu0 %v2983
        %3055 = vmatprep.subr.bf16.mxu0 0
        %3056 = vmatpush1.bf16.msra.mxu0 %v2984
        %3057 = vmatprep.subr.bf16.mxu0 0
        %3058 = vmatpush1.bf16.msra.mxu0 %v2985
        %3059 = vmatprep.subr.bf16.mxu0 0
        %3060 = vmatpush1.bf16.msra.mxu0 %v2986
        %3061 = vmatprep.subr.bf16.mxu0 0
        %3062 = vmatpush1.bf16.msra.mxu0 %v2987
        %3063 = vmatprep.subr.bf16.mxu0 0
        %3064 = vmatpush1.bf16.msra.mxu0 %v2988
        %3065 = vmatprep.subr.bf16.mxu0 0
        %3066 = vmatpush1.bf16.msra.mxu0 %v2989
        %3067 = vmatprep.subr.bf16.mxu0 0
        %3068 = vmatpush1.bf16.msra.mxu0 %v2990
        %3069 = vmatprep.subr.bf16.mxu0 0
        %3070 = vmatpush1.bf16.msra.mxu0 %v2991
        %3071 = vmatprep.subr.bf16.mxu0 0
        %3072 = vmatpush1.bf16.msra.mxu0 %v2992
        %3073 = vmatprep.mubr.bf16.mxu0 %v2775
        %3074 = vmatmul.mubr.bf16.gmra.mrb[0].mxu0 %v2774
        %v3075 = vpop.f32.mrb[0].mxu0
        %v3076 = vadd.f32 %v2847, %v3075
        %v3077 = vpop.f32.mrb[0].mxu0
        %v3078 = vpop.f32.mrb[0].mxu0
        %v3079 = vadd.f32 %v2847, %v3078
        %v3080 = vpop.f32.mrb[0].mxu0
        %3081 = vdwg.mxu0
        %3082 = vmatprep.subr.bf16.mxu0 0
        %3083 = vmatpush1.bf16.msra.mxu0 %v2993
        %3084 = vmatprep.subr.bf16.mxu0 0
        %3085 = vmatpush1.bf16.msra.mxu0 %v2994
        %3086 = vmatprep.subr.bf16.mxu0 0
        %3087 = vmatpush1.bf16.msra.mxu0 %v2995
        %3088 = vmatprep.subr.bf16.mxu0 0
        %3089 = vmatpush1.bf16.msra.mxu0 %v2996
        %3090 = vmatprep.subr.bf16.mxu0 0
        %3091 = vmatpush1.bf16.msra.mxu0 %v2997
        %3092 = vmatprep.subr.bf16.mxu0 0
        %3093 = vmatpush1.bf16.msra.mxu0 %v2998
        %3094 = vmatprep.subr.bf16.mxu0 0
        %3095 = vmatpush1.bf16.msra.mxu0 %v2999
        %3096 = vmatprep.subr.bf16.mxu0 0
        %3097 = vmatpush1.bf16.msra.mxu0 %v3000
        %3098 = vmatprep.subr.bf16.mxu0 0
        %3099 = vmatpush1.bf16.msra.mxu0 %v3001
        %3100 = vmatprep.subr.bf16.mxu0 0
        %3101 = vmatpush1.bf16.msra.mxu0 %v3002
        %3102 = vmatprep.subr.bf16.mxu0 0
        %3103 = vmatpush1.bf16.msra.mxu0 %v3003
        %3104 = vmatprep.subr.bf16.mxu0 0
        %3105 = vmatpush1.bf16.msra.mxu0 %v3004
        %3106 = vmatprep.subr.bf16.mxu0 0
        %3107 = vmatpush1.bf16.msra.mxu0 %v3005
        %3108 = vmatprep.subr.bf16.mxu0 0
        %3109 = vmatpush1.bf16.msra.mxu0 %v3006
        %3110 = vmatprep.subr.bf16.mxu0 0
        %3111 = vmatpush1.bf16.msra.mxu0 %v3007
        %3112 = vmatprep.subr.bf16.mxu0 0
        %3113 = vmatpush1.bf16.msra.mxu0 %v3008
        %3114 = vmatprep.mubr.bf16.mxu0 %v2777
        %3115 = vmatmul.mubr.bf16.gmra.mrb[0].mxu0 %v2776
        %v3116 = vpop.f32.mrb[0].mxu0
        %v3117 = vadd.f32 %v3076, %v3116
        %v3118 = vpop.f32.mrb[0].mxu0
        %v3119 = vpop.f32.mrb[0].mxu0
        %v3120 = vadd.f32 %v3079, %v3119
        %v3121 = vpop.f32.mrb[0].mxu0
        %3122 = vdwg.mxu0
        %v3123 = vadd.f32 %v2391, %v3117
        %v3124 = vadd.f32 %v2392, %v3120
        %3125 = vst [vmem:[#allocation2] sm:$0xff] %v3123
        %3126 = vst [vmem:[#allocation2 + $0x8] sm:$0xff] %v3124
        %3127 = vst [vmem:[%s13] sm:$0xff] %v3123
        %3128 = vst [vmem:[%s13 + $0x8] sm:$0xff] %v3124
        %p3129 = scmp.lt.s32.totalorder %s33, 1
        %s3130 = scalar_select %p3129, %s33, 1
        %s3131 = smul.addr %s3130, 2
        %s3132 = smul.addr %s3131, 8
        %s3133 = scalar_lea.vmem %s14, %s3132
        %p3134 = scmp.lt.s32.totalorder %s33, 1
        %s3135 = scalar_select %p3134, %s33, 1
        %s3136 = smul.addr %s3135, 2
        %s3137 = smul.addr %s3136, 8
        %s3138 = scalar_lea.vmem %s15, %s3137
        // Predicated region
        $region89: #{prefill_forward.2} parent=71 // pred_check
          %p3139 = pneg %p379
        $region90: #{prefill_forward.2} parent=71 // pred_check_branch
          %3141 = sbr.rel (%p3139) target = $region92
        $region91: #{prefill_forward.2} parent=71 // pred_region
          _
        $region92: #{prefill_forward.2} parent=71 // pred_fallthru
          _
        // Predicated region
        $region93: #{prefill_forward.2} parent=71 // pred_check
          %p3142 = pneg %p405
        $region94: #{prefill_forward.2} parent=71 // pred_check_branch
          %3144 = sbr.rel (%p3142) target = $region96
        $region95: #{prefill_forward.2} parent=71 // pred_region
          _
        $region96: #{prefill_forward.2} parent=71 // pred_fallthru
          _
        // Predicated region
        $region97: #{prefill_forward.2} parent=71 // pred_check
          %p3145 = pneg %p431
        $region98: #{prefill_forward.2} parent=71 // pred_check_branch
          %3147 = sbr.rel (%p3145) target = $region100
        $region99: #{prefill_forward.2} parent=71 // pred_region
          _
        $region100: #{prefill_forward.2} parent=71 // pred_fallthru
          _
        // Predicated region
        $region101: #{prefill_forward.2} parent=71 // pred_check
          %p3148 = pneg %p379
        $region102: #{prefill_forward.2} parent=71 // pred_check_branch
          %3150 = sbr.rel (%p3148) target = $region104
        $region103: #{prefill_forward.2} parent=71 // pred_region
          _
        $region104: #{prefill_forward.2} parent=71 // pred_fallthru
          _
      $region72: #{prefill_forward.2} parent=5 // pred_fallthru
        _
      %p3151 = scmp.le.s32.totalorder 2, %s28
      // Predicated region
      $region105: #{prefill_forward.2} parent=5 // pred_check
        %p3152 = pneg %p3151
      $region106: #{prefill_forward.2} parent=5 // pred_check_branch
        %3154 = sbr.rel (%p3152) target = $region108
      $region107: #{prefill_forward.2} parent=5 // pred_region
        %s3155 = ssub.s32 %s28, 2
        // Predicated region
        $region109: #{prefill_forward.2} parent=107 // pred_check
          %p3156 = pneg %p411
        $region110: #{prefill_forward.2} parent=107 // pred_check_branch
          %3158 = sbr.rel (%p3156) target = $region112
        $region111: #{prefill_forward.2} parent=107 // pred_region
          %p3159 = scmp.lt.s32.totalorder %s34, 1
          %s3160 = scalar_select %p3159, %s34, 1
          %s3161 = smul.addr %s3160, 2
          %s3162 = smul.addr %s3161, 8
          %s3163 = scalar_lea.vmem %s14, %s3162
        $region112: #{prefill_forward.2} parent=107 // pred_fallthru
          _
        // Predicated region
        $region113: #{prefill_forward.2} parent=107 // pred_check
          %p3164 = pneg %p437
        $region114: #{prefill_forward.2} parent=107 // pred_check_branch
          %3166 = sbr.rel (%p3164) target = $region116
        $region115: #{prefill_forward.2} parent=107 // pred_region
          %p3167 = scmp.lt.s32.totalorder %s34, 1
          %s3168 = scalar_select %p3167, %s34, 1
          %s3169 = smul.addr %s3168, 2
          %s3170 = smul.addr %s3169, 8
          %s3171 = scalar_lea.vmem %s15, %s3170
        $region116: #{prefill_forward.2} parent=107 // pred_fallthru
          _
      $region108: #{prefill_forward.2} parent=5 // pred_fallthru
        _
    $region6: #{prefill_forward.2} parent=1 // loop_footer
      %s32 = sadd.s32 1, %s28
    $region7: #{prefill_forward.2} parent=1 // loop_footer_branch
      %27 = sbr.rel target = $region3
    $region8: #{prefill_forward.2} parent=1 // loop_exit
      _
    %3172 = vsyncpa [#allocation4], 1
    %s3173 = scalar_lea.sflag [#allocation4], 1
    %3174 = vsyncpa %s3173, 1
    %3175 = vsyncpa [#allocation6], 1
    %s3176 = scalar_lea.sflag [#allocation6], 1
    %3177 = vsyncpa %s3176, 1

</llo_original>
